<compile_context>
chip_gen: v6e
topology: v6e:2x2x1
jax: 0.10.0
libtpu: 0.0.40
codegen_flags: <defaults>
</compile_context>

<pallas_src>
import functools

import numpy as np
import jax
import jax.numpy as jnp
from jax import lax
from jax.experimental import pallas as pl
from jax.experimental.pallas import tpu as pltpu


def _fused_kernel(x_ref, s1_ref, b1_ref, w1_ref, b2_ref, msk_ref, wt_ref,
                  o_ref, hp_ref, sh_ref, *, C, IC, G, A, W, BHW, P):
    f32 = jnp.float32
    GA = G * A

    x = x_ref[...]                                                    # (C, BHW)

    # ---- stage 1: BN1+ReLU -> 1x1 conv (BN2 scale pre-folded) -> +shift -> ReLU
    a = jnp.maximum(x * s1_ref[...] + b1_ref[...], 0.0)
    h = jnp.dot(w1_ref[...], a.astype(w1_ref.dtype),
                preferred_element_type=f32)                           # (IC, BHW)
    h = jnp.maximum(h + b2_ref[...], 0.0)

    # ---- stage 2: grouped 3x3 conv taps = 9 lane-shifted reads of a halo'd copy.
    # Only the two P-wide halo slabs are zeroed (cheap); interior fully rewritten.
    hp_ref[:, :P] = jnp.zeros((IC, P), f32)
    hp_ref[:, P + BHW:] = jnp.zeros((IC, P), f32)
    hp_ref[:, P:P + BHW] = h

    for dh in range(3):
        for dw in range(3):
            t = dh * 3 + dw
            off = P + (dh - 1) * W + (dw - 1)
            v = hp_ref[:, off:off + BHW]                              # (IC, BHW) f32 tap
            if t != 4:                                                # center mask is all-ones
                v = v * msk_ref[t:t + 1, :]                           # image row/col borders
            sh_ref[t * IC:(t + 1) * IC, :] = v.astype(sh_ref.dtype)   # tap-major stack

    # ---- permuted grouped conv for both pair members: ONE stacked sparse-tap matmul
    m = jnp.dot(wt_ref[...], sh_ref[...], preferred_element_type=f32)  # (2*GA, BHW)
    pmax = jnp.maximum(m[:GA], m[GA:])                                 # MaxPool3d((2,1,1))
    # AvgPool3d((A,1,1)) on the VPU: rows are (g, a)-ordered -> sublane-group sum.
    res = jnp.sum(pmax.reshape(G, A, BHW), axis=1) * (1.0 / A)         # (G, BHW)

    # ---- fused torch.cat((x, out), 1): one lane-dense output block
    o_ref[:C, :] = x.astype(o_ref.dtype)
    o_ref[C:, :] = res.astype(o_ref.dtype)


def prcn_v12_bottleneck(x, params, *, growth_rate, index,
                        mxu_dtype=jnp.bfloat16, images_per_step=None,
                        vmem_limit_mb=48):
    """Forward of PRCN_v12_Bottleneck as one fused Pallas TPU kernel.

    mxu_dtype: dtype of the MXU matmul operands (bf16 default, recommended on
    v6e/v7x; accumulation is always float32; pass jnp.float32 for a bit-tight
    inference path).
    """
    N, C, H, W = x.shape
    G = growth_rate
    IC = 4 * G                        # interChannels
    A = IC // 2                       # avgpool_size
    GA = G * A                        # = expansion // 2
    expansion = G * IC
    HW = H * W
    eps = 1e-5
    P = ((W + 1 + 127) // 128) * 128  # lane-aligned halo width

    # ---- per-step image batch B (packs B*HW pixels into the matmul lane dim) ----
    if images_per_step is None:
        B = max(1, min(N, 4096 // max(HW, 1)))   # target a few thousand lanes/step
        B = min(B, max(1, N // 2))               # keep >= 2 grid steps (v7x: 2 TCs)
        while N % B:
            B -= 1
    else:
        B = images_per_step
        assert N % B == 0, "images_per_step must divide the batch"
    BHW = B * HW
    NB = N // B

    # ---- fold BatchNorm (inference); fold BN2 scale into the 1x1 conv weight ----
    inv1 = params["gamma1"] / jnp.sqrt(params["var1"] + eps)
    s1 = inv1.reshape(C, 1).astype(jnp.float32)
    b1 = (params["beta1"] - params["mean1"] * inv1).reshape(C, 1).astype(jnp.float32)
    inv2 = params["gamma2"] / jnp.sqrt(params["var2"] + eps)
    b2 = (params["beta2"] - params["mean2"] * inv2).reshape(IC, 1).astype(jnp.float32)
    w1 = (inv2.reshape(IC, 1) * params["w1"]).astype(mxu_dtype)        # (IC, C), fold in f32

    # ---- static PRCN bookkeeping (could be precomputed once per model) ----
    # Post-permute channel at position 2*(g*A + a) + p feeds output group g.
    pos = np.arange(expansion).reshape(G, A, 2)
    conv_chan = np.asarray(index).reshape(-1)[pos]                     # grouped-conv out channel
    src_chan = conv_chan // G                                          # its (replicated) input channel
    w2_taps = params["w2"].reshape(expansion, 9)                       # tap index = dh*3+dw

    def tap_matrix(p):
        # Wp[k, t*IC + c] = w2[conv_chan, t] * (c == src_chan), for parity-p pair members.
        cc = conv_chan[..., p].reshape(GA)
        sc = src_chan[..., p].reshape(GA)
        onehot = jnp.asarray(np.eye(IC, dtype=np.float32)[sc])         # (GA, IC), static
        wsel = w2_taps[jnp.asarray(cc)]                                # (GA, 9)
        return (wsel[:, :, None] * onehot[:, None, :]).reshape(GA, 9 * IC)

    wt = jnp.concatenate([tap_matrix(0), tap_matrix(1)], axis=0).astype(mxu_dtype)  # (2GA, 9IC)

    # ---- per-tap validity masks for the packed (B images in lanes) layout ----
    jj = np.arange(BHW)
    rr = (jj // W) % H
    cc_ = jj % W
    masks = np.ones((9, BHW), np.float32)
    for dh in range(3):
        for dw in range(3):
            ok = ((rr + dh - 1 >= 0) & (rr + dh - 1 < H)
                  & (cc_ + dw - 1 >= 0) & (cc_ + dw - 1 < W))
            masks[dh * 3 + dw] = ok.astype(np.float32)
    masks = jnp.asarray(masks)

    # ---- pack the batch into the lane dim: (C, N*HW), image-major lanes ----
    xp = x.reshape(N, C, HW).transpose(1, 0, 2).reshape(C, N * HW)

    kern = functools.partial(_fused_kernel, C=C, IC=IC, G=G, A=A, W=W, BHW=BHW, P=P)
    out = pl.pallas_call(
        kern,
        out_shape=jax.ShapeDtypeStruct((C + G, N * HW), jnp.float32),
        grid=(NB,),
        in_specs=[
            pl.BlockSpec((C, BHW), lambda n: (0, n)),          # packed activations (B images)
            pl.BlockSpec((C, 1), lambda n: (0, 0)),            # BN1 scale
            pl.BlockSpec((C, 1), lambda n: (0, 0)),            # BN1 shift
            pl.BlockSpec((IC, C), lambda n: (0, 0)),           # 1x1 conv weight (BN2 scale folded)
            pl.BlockSpec((IC, 1), lambda n: (0, 0)),           # BN2 shift
            pl.BlockSpec((9, BHW), lambda n: (0, 0)),          # per-tap border masks
            pl.BlockSpec((2 * GA, 9 * IC), lambda n: (0, 0)),  # stacked sparse-tap matrix
        ],
        out_specs=pl.BlockSpec((C + G, BHW), lambda n: (0, n)),
        scratch_shapes=[
            pltpu.VMEM((IC, BHW + 2 * P), jnp.float32),        # halo'd activation (f32 taps)
            pltpu.VMEM((9 * IC, BHW), mxu_dtype),              # stacked shifted taps
        ],
        compiler_params=pltpu.CompilerParams(
            dimension_semantics=("parallel",),
            vmem_limit_bytes=vmem_limit_mb * 1024 * 1024,
        ),
    )(xp, s1, b1, w1, b2, masks, wt)
    return out.reshape(C + G, N, HW).transpose(1, 0, 2).reshape(N, C + G, H, W)


def reference_forward(x, params, *, growth_rate, index):
    """Pure-JAX reference (lax.conv based) mirroring the PyTorch forward."""
    N, C, H, W = x.shape
    IC = 4 * growth_rate
    G = growth_rate
    A = IC // 2
    expansion = G * IC
    eps = 1e-5

    def bn(z, gamma, beta, mean, var):
        return ((z - mean[None, :, None, None]) / jnp.sqrt(var[None, :, None, None] + eps)
                * gamma[None, :, None, None] + beta[None, :, None, None])

    a = jax.nn.relu(bn(x, params["gamma1"], params["beta1"], params["mean1"], params["var1"]))
    h = lax.conv_general_dilated(a, params["w1"].reshape(IC, C, 1, 1), (1, 1), "VALID",
                                 dimension_numbers=("NCHW", "OIHW", "NCHW"))
    h = jax.nn.relu(bn(h, params["gamma2"], params["beta2"], params["mean2"], params["var2"]))
    w2 = params["w2"].reshape(expansion, 1, 3, 3)
    c = lax.conv_general_dilated(h, w2, (1, 1), ((1, 1), (1, 1)),
                                 dimension_numbers=("NCHW", "OIHW", "NCHW"),
                                 feature_group_count=IC)
    c = c[:, jnp.asarray(index)]                              # out[:, index, :, :]
    c = c.reshape(N, expansion // 2, 2, H, W).max(axis=2)     # MaxPool3d((2,1,1))
    c = c.reshape(N, G, A, H, W).mean(axis=2)                 # AvgPool3d((A,1,1))
    return jnp.concatenate([x, c], axis=1)


if __name__ == "__main__":
    N, C, H, W = 8, 8, 16, 16
    growth_rate = 4
    IC = 4 * growth_rate
    expansion = growth_rate * IC

    key = jax.random.PRNGKey(0)
    ks = jax.random.split(key, 12)
    x = jax.random.normal(ks[0], (N, C, H, W), jnp.float32)
    params = dict(
        gamma1=1.0 + 0.1 * jax.random.normal(ks[1], (C,), jnp.float32),
        beta1=0.1 * jax.random.normal(ks[2], (C,), jnp.float32),
        mean1=0.1 * jax.random.normal(ks[3], (C,), jnp.float32),
        var1=jax.random.uniform(ks[4], (C,), jnp.float32, minval=0.5, maxval=1.5),
        w1=0.3 * jax.random.normal(ks[5], (IC, C), jnp.float32),
        gamma2=1.0 + 0.1 * jax.random.normal(ks[6], (IC,), jnp.float32),
        beta2=0.1 * jax.random.normal(ks[7], (IC,), jnp.float32),
        mean2=0.1 * jax.random.normal(ks[8], (IC,), jnp.float32),
        var2=jax.random.uniform(ks[9], (IC,), jnp.float32, minval=0.5, maxval=1.5),
        w2=0.2 * jax.random.normal(ks[10], (expansion, 3, 3), jnp.float32),
    )
    # Deterministic stand-in for the module's random.shuffle channel permutation.
    index = np.random.RandomState(0).permutation(expansion)

    ref = reference_forward(x, params, growth_rate=growth_rate, index=index)

    # f32 MXU operands: tight check against the lax.conv reference.
    out_f32 = prcn_v12_bottleneck(x, params, growth_rate=growth_rate, index=index,
                                  mxu_dtype=jnp.float32)
    out_f32 = jax.block_until_ready(out_f32)
    assert out_f32.shape == (N, C + growth_rate, H, W), out_f32.shape
    err = float(jnp.max(jnp.abs(out_f32 - ref)))
    if err > 5e-4:
        raise AssertionError(f"f32 path mismatch vs reference: max abs err = {err}")

    # Default path (bf16 MXU operands, f32 accumulate); looser tolerance for the dtype change.
    out_bf16 = prcn_v12_bottleneck(x, params, growth_rate=growth_rate, index=index)
    out_bf16 = jax.block_until_ready(out_bf16)
    err_bf16 = float(jnp.max(jnp.abs(out_bf16 - ref)))
    if err_bf16 > 1e-1:
        raise AssertionError(f"bf16 path mismatch vs reference: max abs err = {err_bf16}")

    print("KERNEL_OK")
</pallas_src>

<mosaic_0001>
module attributes {stable_mosaic.version = 11 : i64} {
  func.func @_fused_kernel(%arg0: i32, %arg1: memref<8x1024xf32, #tpu.memory_space<vmem>>, %arg2: memref<8x1xf32, #tpu.memory_space<vmem>>, %arg3: memref<8x1xf32, #tpu.memory_space<vmem>>, %arg4: memref<16x8xf32, #tpu.memory_space<vmem>>, %arg5: memref<16x1xf32, #tpu.memory_space<vmem>>, %arg6: memref<9x1024xf32, #tpu.memory_space<vmem>>, %arg7: memref<64x144xf32, #tpu.memory_space<vmem>>, %arg8: memref<12x1024xf32, #tpu.memory_space<vmem>>, %arg9: memref<16x1280xf32, #tpu.memory_space<vmem>>, %arg10: memref<144x1024xf32, #tpu.memory_space<vmem>>) attributes {dimension_semantics = [#tpu.dimension_semantics<parallel>], iteration_bounds = array<i64: 2>, scalar_prefetch = 0 : i64, scratch_operands = 2 : i64, tpu.core_type = #tpu.core_type<tc>, window_params = [{transform_indices = @transform_0, window_bounds = array<i64: 8, 1024>}, {pipeline_mode = #tpu.pipeline_mode<synchronous>, transform_indices = @transform_1, window_bounds = array<i64: 8, 1>}, {pipeline_mode = #tpu.pipeline_mode<synchronous>, transform_indices = @transform_2, window_bounds = array<i64: 8, 1>}, {pipeline_mode = #tpu.pipeline_mode<synchronous>, transform_indices = @transform_3, window_bounds = array<i64: 16, 8>}, {pipeline_mode = #tpu.pipeline_mode<synchronous>, transform_indices = @transform_4, window_bounds = array<i64: 16, 1>}, {pipeline_mode = #tpu.pipeline_mode<synchronous>, transform_indices = @transform_5, window_bounds = array<i64: 9, 1024>}, {pipeline_mode = #tpu.pipeline_mode<synchronous>, transform_indices = @transform_6, window_bounds = array<i64: 64, 144>}, {transform_indices = @transform_7, window_bounds = array<i64: 12, 1024>}]} {
    %c0 = arith.constant 0 : index
    %c0_0 = arith.constant 0 : index
    %0 = vector.load %arg1[%c0, %c0_0] : memref<8x1024xf32, #tpu.memory_space<vmem>>, vector<8x1024xf32>
    %c0_1 = arith.constant 0 : index
    %c0_2 = arith.constant 0 : index
    %1 = vector.load %arg2[%c0_1, %c0_2] : memref<8x1xf32, #tpu.memory_space<vmem>>, vector<8x1xf32>
    %2 = vector.broadcast %1 : vector<8x1xf32> to vector<8x1024xf32>
    %3 = arith.mulf %0, %2 : vector<8x1024xf32>
    %c0_3 = arith.constant 0 : index
    %c0_4 = arith.constant 0 : index
    %4 = vector.load %arg3[%c0_3, %c0_4] : memref<8x1xf32, #tpu.memory_space<vmem>>, vector<8x1xf32>
    %5 = vector.broadcast %4 : vector<8x1xf32> to vector<8x1024xf32>
    %6 = arith.addf %3, %5 : vector<8x1024xf32>
    %cst = arith.constant 0.000000e+00 : f32
    %7 = vector.broadcast %cst : f32 to vector<8x1024xf32>
    %8 = arith.maximumf %6, %7 : vector<8x1024xf32>
    %c0_5 = arith.constant 0 : index
    %c0_6 = arith.constant 0 : index
    %9 = vector.load %arg4[%c0_5, %c0_6] : memref<16x8xf32, #tpu.memory_space<vmem>>, vector<16x8xf32>
    %cst_7 = arith.constant dense<0.000000e+00> : vector<16x1024xf32>
    %10 = tpu.matmul %9, %8, %cst_7 {dimension_numbers = #tpu.dot_dimension_numbers<[1], [0], [0], [1], [0, 0, 1, 1], [], []>} : vector<16x8xf32>, vector<8x1024xf32>, vector<16x1024xf32> -> vector<16x1024xf32>
    %c0_8 = arith.constant 0 : index
    %c0_9 = arith.constant 0 : index
    %11 = vector.load %arg5[%c0_8, %c0_9] : memref<16x1xf32, #tpu.memory_space<vmem>>, vector<16x1xf32>
    %12 = vector.broadcast %11 : vector<16x1xf32> to vector<16x1024xf32>
    %13 = arith.addf %10, %12 : vector<16x1024xf32>
    %cst_10 = arith.constant 0.000000e+00 : f32
    %14 = vector.broadcast %cst_10 : f32 to vector<16x1024xf32>
    %15 = arith.maximumf %13, %14 : vector<16x1024xf32>
    %cst_11 = arith.constant 0.000000e+00 : f32
    %16 = vector.broadcast %cst_11 : f32 to vector<16x128xf32>
    %c0_12 = arith.constant 0 : index
    %c0_13 = arith.constant 0 : index
    %17 = vector.load %arg9[%c0_12, %c0_13] : memref<16x1280xf32, #tpu.memory_space<vmem>>, vector<16x128xf32>
    tpu.vector_store %arg9[%c0_12, %c0_13], %16 {strides = array<i32>} : memref<16x1280xf32, #tpu.memory_space<vmem>>, vector<16x128xf32>,
    %cst_14 = arith.constant 0.000000e+00 : f32
    %18 = vector.broadcast %cst_14 : f32 to vector<16x128xf32>
    %c0_15 = arith.constant 0 : index
    %c1152 = arith.constant 1152 : index
    %19 = vector.load %arg9[%c0_15, %c1152] : memref<16x1280xf32, #tpu.memory_space<vmem>>, vector<16x128xf32>
    tpu.vector_store %arg9[%c0_15, %c1152], %18 {strides = array<i32>} : memref<16x1280xf32, #tpu.memory_space<vmem>>, vector<16x128xf32>,
    %c0_16 = arith.constant 0 : index
    %c128 = arith.constant 128 : index
    %20 = vector.load %arg9[%c0_16, %c128] : memref<16x1280xf32, #tpu.memory_space<vmem>>, vector<16x1024xf32>
    tpu.vector_store %arg9[%c0_16, %c128], %15 {strides = array<i32>} : memref<16x1280xf32, #tpu.memory_space<vmem>>, vector<16x1024xf32>,
    %c0_17 = arith.constant 0 : index
    %c111 = arith.constant 111 : index
    %21 = vector.load %arg9[%c0_17, %c111] : memref<16x1280xf32, #tpu.memory_space<vmem>>, vector<16x1024xf32>
    %c0_18 = arith.constant 0 : index
    %c0_19 = arith.constant 0 : index
    %22 = vector.load %arg6[%c0_18, %c0_19] : memref<9x1024xf32, #tpu.memory_space<vmem>>, vector<1x1024xf32>
    %23 = vector.broadcast %22 : vector<1x1024xf32> to vector<16x1024xf32>
    %24 = arith.mulf %21, %23 : vector<16x1024xf32>
    %c0_20 = arith.constant 0 : index
    %c0_21 = arith.constant 0 : index
    %25 = vector.load %arg10[%c0_20, %c0_21] : memref<144x1024xf32, #tpu.memory_space<vmem>>, vector<16x1024xf32>
    tpu.vector_store %arg10[%c0_20, %c0_21], %24 {strides = array<i32>} : memref<144x1024xf32, #tpu.memory_space<vmem>>, vector<16x1024xf32>,
    %c0_22 = arith.constant 0 : index
    %c112 = arith.constant 112 : index
    %26 = vector.load %arg9[%c0_22, %c112] : memref<16x1280xf32, #tpu.memory_space<vmem>>, vector<16x1024xf32>
    %c1 = arith.constant 1 : index
    %c0_23 = arith.constant 0 : index
    %27 = vector.load %arg6[%c1, %c0_23] : memref<9x1024xf32, #tpu.memory_space<vmem>>, vector<1x1024xf32>
    %28 = vector.broadcast %27 : vector<1x1024xf32> to vector<16x1024xf32>
    %29 = arith.mulf %26, %28 : vector<16x1024xf32>
    %c16 = arith.constant 16 : index
    %c0_24 = arith.constant 0 : index
    %30 = vector.load %arg10[%c16, %c0_24] : memref<144x1024xf32, #tpu.memory_space<vmem>>, vector<16x1024xf32>
    tpu.vector_store %arg10[%c16, %c0_24], %29 {strides = array<i32>} : memref<144x1024xf32, #tpu.memory_space<vmem>>, vector<16x1024xf32>,
    %c0_25 = arith.constant 0 : index
    %c113 = arith.constant 113 : index
    %31 = vector.load %arg9[%c0_25, %c113] : memref<16x1280xf32, #tpu.memory_space<vmem>>, vector<16x1024xf32>
    %c2 = arith.constant 2 : index
    %c0_26 = arith.constant 0 : index
    %32 = vector.load %arg6[%c2, %c0_26] : memref<9x1024xf32, #tpu.memory_space<vmem>>, vector<1x1024xf32>
    %33 = vector.broadcast %32 : vector<1x1024xf32> to vector<16x1024xf32>
    %34 = arith.mulf %31, %33 : vector<16x1024xf32>
    %c32 = arith.constant 32 : index
    %c0_27 = arith.constant 0 : index
    %35 = vector.load %arg10[%c32, %c0_27] : memref<144x1024xf32, #tpu.memory_space<vmem>>, vector<16x1024xf32>
    tpu.vector_store %arg10[%c32, %c0_27], %34 {strides = array<i32>} : memref<144x1024xf32, #tpu.memory_space<vmem>>, vector<16x1024xf32>,
    %c0_28 = arith.constant 0 : index
    %c127 = arith.constant 127 : index
    %36 = vector.load %arg9[%c0_28, %c127] : memref<16x1280xf32, #tpu.memory_space<vmem>>, vector<16x1024xf32>
    %c3 = arith.constant 3 : index
    %c0_29 = arith.constant 0 : index
    %37 = vector.load %arg6[%c3, %c0_29] : memref<9x1024xf32, #tpu.memory_space<vmem>>, vector<1x1024xf32>
    %38 = vector.broadcast %37 : vector<1x1024xf32> to vector<16x1024xf32>
    %39 = arith.mulf %36, %38 : vector<16x1024xf32>
    %c48 = arith.constant 48 : index
    %c0_30 = arith.constant 0 : index
    %40 = vector.load %arg10[%c48, %c0_30] : memref<144x1024xf32, #tpu.memory_space<vmem>>, vector<16x1024xf32>
    tpu.vector_store %arg10[%c48, %c0_30], %39 {strides = array<i32>} : memref<144x1024xf32, #tpu.memory_space<vmem>>, vector<16x1024xf32>,
    %c0_31 = arith.constant 0 : index
    %c128_32 = arith.constant 128 : index
    %41 = vector.load %arg9[%c0_31, %c128_32] : memref<16x1280xf32, #tpu.memory_space<vmem>>, vector<16x1024xf32>
    %c64 = arith.constant 64 : index
    %c0_33 = arith.constant 0 : index
    %42 = vector.load %arg10[%c64, %c0_33] : memref<144x1024xf32, #tpu.memory_space<vmem>>, vector<16x1024xf32>
    tpu.vector_store %arg10[%c64, %c0_33], %41 {strides = array<i32>} : memref<144x1024xf32, #tpu.memory_space<vmem>>, vector<16x1024xf32>,
    %c0_34 = arith.constant 0 : index
    %c129 = arith.constant 129 : index
    %43 = vector.load %arg9[%c0_34, %c129] : memref<16x1280xf32, #tpu.memory_space<vmem>>, vector<16x1024xf32>
    %c5 = arith.constant 5 : index
    %c0_35 = arith.constant 0 : index
    %44 = vector.load %arg6[%c5, %c0_35] : memref<9x1024xf32, #tpu.memory_space<vmem>>, vector<1x1024xf32>
    %45 = vector.broadcast %44 : vector<1x1024xf32> to vector<16x1024xf32>
    %46 = arith.mulf %43, %45 : vector<16x1024xf32>
    %c80 = arith.constant 80 : index
    %c0_36 = arith.constant 0 : index
    %47 = vector.load %arg10[%c80, %c0_36] : memref<144x1024xf32, #tpu.memory_space<vmem>>, vector<16x1024xf32>
    tpu.vector_store %arg10[%c80, %c0_36], %46 {strides = array<i32>} : memref<144x1024xf32, #tpu.memory_space<vmem>>, vector<16x1024xf32>,
    %c0_37 = arith.constant 0 : index
    %c143 = arith.constant 143 : index
    %48 = vector.load %arg9[%c0_37, %c143] : memref<16x1280xf32, #tpu.memory_space<vmem>>, vector<16x1024xf32>
    %c6 = arith.constant 6 : index
    %c0_38 = arith.constant 0 : index
    %49 = vector.load %arg6[%c6, %c0_38] : memref<9x1024xf32, #tpu.memory_space<vmem>>, vector<1x1024xf32>
    %50 = vector.broadcast %49 : vector<1x1024xf32> to vector<16x1024xf32>
    %51 = arith.mulf %48, %50 : vector<16x1024xf32>
    %c96 = arith.constant 96 : index
    %c0_39 = arith.constant 0 : index
    %52 = vector.load %arg10[%c96, %c0_39] : memref<144x1024xf32, #tpu.memory_space<vmem>>, vector<16x1024xf32>
    tpu.vector_store %arg10[%c96, %c0_39], %51 {strides = array<i32>} : memref<144x1024xf32, #tpu.memory_space<vmem>>, vector<16x1024xf32>,
    %c0_40 = arith.constant 0 : index
    %c144 = arith.constant 144 : index
    %53 = vector.load %arg9[%c0_40, %c144] : memref<16x1280xf32, #tpu.memory_space<vmem>>, vector<16x1024xf32>
    %c7 = arith.constant 7 : index
    %c0_41 = arith.constant 0 : index
    %54 = vector.load %arg6[%c7, %c0_41] : memref<9x1024xf32, #tpu.memory_space<vmem>>, vector<1x1024xf32>
    %55 = vector.broadcast %54 : vector<1x1024xf32> to vector<16x1024xf32>
    %56 = arith.mulf %53, %55 : vector<16x1024xf32>
    %c112_42 = arith.constant 112 : index
    %c0_43 = arith.constant 0 : index
    %57 = vector.load %arg10[%c112_42, %c0_43] : memref<144x1024xf32, #tpu.memory_space<vmem>>, vector<16x1024xf32>
    tpu.vector_store %arg10[%c112_42, %c0_43], %56 {strides = array<i32>} : memref<144x1024xf32, #tpu.memory_space<vmem>>, vector<16x1024xf32>,
    %c0_44 = arith.constant 0 : index
    %c145 = arith.constant 145 : index
    %58 = vector.load %arg9[%c0_44, %c145] : memref<16x1280xf32, #tpu.memory_space<vmem>>, vector<16x1024xf32>
    %c8 = arith.constant 8 : index
    %c0_45 = arith.constant 0 : index
    %59 = vector.load %arg6[%c8, %c0_45] : memref<9x1024xf32, #tpu.memory_space<vmem>>, vector<1x1024xf32>
    %60 = vector.broadcast %59 : vector<1x1024xf32> to vector<16x1024xf32>
    %61 = arith.mulf %58, %60 : vector<16x1024xf32>
    %c128_46 = arith.constant 128 : index
    %c0_47 = arith.constant 0 : index
    %62 = vector.load %arg10[%c128_46, %c0_47] : memref<144x1024xf32, #tpu.memory_space<vmem>>, vector<16x1024xf32>
    tpu.vector_store %arg10[%c128_46, %c0_47], %61 {strides = array<i32>} : memref<144x1024xf32, #tpu.memory_space<vmem>>, vector<16x1024xf32>,
    %c0_48 = arith.constant 0 : index
    %c0_49 = arith.constant 0 : index
    %63 = vector.load %arg7[%c0_48, %c0_49] : memref<64x144xf32, #tpu.memory_space<vmem>>, vector<64x144xf32>
    %c0_50 = arith.constant 0 : index
    %c0_51 = arith.constant 0 : index
    %64 = vector.load %arg10[%c0_50, %c0_51] : memref<144x1024xf32, #tpu.memory_space<vmem>>, vector<144x1024xf32>
    %cst_52 = arith.constant dense<0.000000e+00> : vector<64x1024xf32>
    %65 = tpu.matmul %63, %64, %cst_52 {dimension_numbers = #tpu.dot_dimension_numbers<[1], [0], [0], [1], [0, 0, 1, 1], [], []>} : vector<64x144xf32>, vector<144x1024xf32>, vector<64x1024xf32> -> vector<64x1024xf32>
    %66 = vector.extract_strided_slice %65 {offsets = [0, 0], sizes = [32, 1024], strides = [1, 1]} : vector<64x1024xf32> to vector<32x1024xf32>
    %67 = vector.extract_strided_slice %65 {offsets = [32, 0], sizes = [32, 1024], strides = [1, 1]} : vector<64x1024xf32> to vector<32x1024xf32>
    %68 = arith.maximumf %66, %67 : vector<32x1024xf32>
    %69 = vector.shape_cast %68 : vector<32x1024xf32> to vector<4x8x1024xf32>
    %cst_53 = arith.constant dense<0.000000e+00> : vector<4x1024xf32>
    %70 = vector.multi_reduction <add>, %69, %cst_53 [1] : vector<4x8x1024xf32> to vector<4x1024xf32>
    %cst_54 = arith.constant 1.250000e-01 : f32
    %71 = vector.broadcast %cst_54 : f32 to vector<4x1024xf32>
    %72 = arith.mulf %70, %71 : vector<4x1024xf32>
    %c0_55 = arith.constant 0 : index
    %c0_56 = arith.constant 0 : index
    %73 = vector.load %arg8[%c0_55, %c0_56] : memref<12x1024xf32, #tpu.memory_space<vmem>>, vector<8x1024xf32>
    tpu.vector_store %arg8[%c0_55, %c0_56], %0 {strides = array<i32>} : memref<12x1024xf32, #tpu.memory_space<vmem>>, vector<8x1024xf32>,
    %c8_57 = arith.constant 8 : index
    %c0_58 = arith.constant 0 : index
    %74 = vector.load %arg8[%c8_57, %c0_58] : memref<12x1024xf32, #tpu.memory_space<vmem>>, vector<4x1024xf32>
    tpu.vector_store %arg8[%c8_57, %c0_58], %72 {strides = array<i32>} : memref<12x1024xf32, #tpu.memory_space<vmem>>, vector<4x1024xf32>,
    return
  }
  func.func @transform_0(%arg0: i32) -> (i32, i32) {
    %c0_i32 = arith.constant 0 : i32
    %c0_i32_0 = arith.constant 0 : i32
    return %c0_i32, %arg0 : i32, i32
  }
  func.func @transform_1(%arg0: i32) -> (i32, i32) {
    %c0_i32 = arith.constant 0 : i32
    %c0_i32_0 = arith.constant 0 : i32
    %c0_i32_1 = arith.constant 0 : i32
    return %c0_i32, %c0_i32_0 : i32, i32
  }
  func.func @transform_2(%arg0: i32) -> (i32, i32) {
    %c0_i32 = arith.constant 0 : i32
    %c0_i32_0 = arith.constant 0 : i32
    %c0_i32_1 = arith.constant 0 : i32
    return %c0_i32, %c0_i32_0 : i32, i32
  }
  func.func @transform_3(%arg0: i32) -> (i32, i32) {
    %c0_i32 = arith.constant 0 : i32
    %c0_i32_0 = arith.constant 0 : i32
    %c0_i32_1 = arith.constant 0 : i32
    return %c0_i32, %c0_i32_0 : i32, i32
  }
  func.func @transform_4(%arg0: i32) -> (i32, i32) {
    %c0_i32 = arith.constant 0 : i32
    %c0_i32_0 = arith.constant 0 : i32
    %c0_i32_1 = arith.constant 0 : i32
    return %c0_i32, %c0_i32_0 : i32, i32
  }
  func.func @transform_5(%arg0: i32) -> (i32, i32) {
    %c0_i32 = arith.constant 0 : i32
    %c0_i32_0 = arith.constant 0 : i32
    %c0_i32_1 = arith.constant 0 : i32
    return %c0_i32, %c0_i32_0 : i32, i32
  }
  func.func @transform_6(%arg0: i32) -> (i32, i32) {
    %c0_i32 = arith.constant 0 : i32
    %c0_i32_0 = arith.constant 0 : i32
    %c0_i32_1 = arith.constant 0 : i32
    return %c0_i32, %c0_i32_0 : i32, i32
  }
  func.func @transform_7(%arg0: i32) -> (i32, i32) {
    %c0_i32 = arith.constant 0 : i32
    %c0_i32_0 = arith.constant 0 : i32
    return %c0_i32, %arg0 : i32, i32
  }
}

</mosaic_0001>

<llo_original>
// kernel: tpu_custom_call.1
$region0: #{tpu_custom_call.1}
  #allocation0 [shape = 'u32[]', space=smem, size = 0x4, offset = 0x4, fixed_abs, tag = 'smem constant byte address 0x4 - core index']
  #allocation1 [shape = 'u32[144,128]{1,0:T(1,128)}', space=vmem, size = 0x12000, scoped, tag = 'internal scratch']
  #allocation2 [shape = 'f32[16,1280]{1,0:T(8,128)}', space=vmem, size = 0x14000, scoped, tag = 'scratch operand']
  #allocation3 [shape = 'f32[144,1024]{1,0:T(8,128)}', space=vmem, size = 0x90000, scoped, tag = 'scratch operand']
  %s0 = inlined_call_operand.hbm [shape: f32[8,2048], index: 0, kind: input, shape index: {}]
  %s1 = inlined_call_operand.vmem [shape: f32[8,1], index: 1, kind: input, shape index: {}]
  %s2 = inlined_call_operand.vmem [shape: f32[8,1], index: 2, kind: input, shape index: {}]
  %s3 = inlined_call_operand.vmem [shape: f32[16,8], index: 3, kind: input, shape index: {}]
  %s4 = inlined_call_operand.vmem [shape: f32[16,1], index: 4, kind: input, shape index: {}]
  %s5 = inlined_call_operand.hbm [shape: f32[9,1024], index: 5, kind: input, shape index: {}]
  %s6 = inlined_call_operand.hbm [shape: f32[64,144], index: 6, kind: input, shape index: {}]
  %s7 = inlined_call_operand.hbm [shape: f32[12,2048], index: 7, kind: output, shape index: {}]
  %s8 = sld [smem:[#allocation0]]
  $region73: #{tpu_custom_call.1} parent=0
    _
  %s10 = ssub.s32 1, %s8
  %s11 = scalar_select 0, %s10, %s8
  $region1: #{tpu_custom_call.1} parent=0
    #allocation4 [shape = 'u8[65536]{0}', space=vmem, size = 0x10000, scoped, tag = 'input window, operand 0']
    #allocation5 [shape = 's32[2]{0}', space=sflag, size = 0x8, scoped, tag = 'scoped memory for tpu_custom_call.1']
    #allocation6 [shape = 's32[2]{0}', space=sflag, size = 0x8, scoped, tag = 'scoped memory for tpu_custom_call.1']
    #allocation7 [shape = 'u8[65536]{0}', space=vmem, size = 0x10000, scoped, tag = 'input window, operand 5, single buffered']
    #allocation8 [shape = 's32[1]{0}', space=sflag, size = 0x4, scoped, tag = 'scoped memory for tpu_custom_call.1']
    #allocation9 [shape = 'u8[65536]{0}', space=vmem, size = 0x10000, scoped, tag = 'input window, operand 6, single buffered']
    #allocation10 [shape = 'u8[131072]{0}', space=vmem, size = 0x20000, scoped, tag = 'output window, operand 0']
    %12 = vsyncpa [#allocation5], 0
    %s13 = scalar_lea.sflag [#allocation5], 1
    %14 = vsyncpa %s13, 0
    %15 = vsyncpa [#allocation8], 0
    %16 = vsyncpa [#allocation6], 0
    %s17 = scalar_lea.sflag [#allocation6], 1
    %18 = vsyncpa %s17, 0
    loop: start=0, step=1, limit=4
    $region2: #{tpu_custom_call.1} parent=1 // loop_pre_header
      _
    $region3: #{tpu_custom_call.1} parent=1 // loop_header
      %s20 = sphi 0, %s24
      %p21 = scmp.ge.s32.totalorder %s20, 4
      %s30 = sphi 0, %s32
      %s33 = sphi 0, %s30
      %s34 = sphi 0, %s33
      %s50 = sphi 0, %s34
      %s54 = sphi 0, %s54
      %s56 = sphi 0, %s54
      %s57 = sphi 0, %s56
      %s71 = sphi 0, %s57
      %s75 = sphi 0, %s75
      %s77 = sphi 0, %s75
      %s78 = sphi 0, %s77
      %s92 = sphi 0, %s78
      %s96 = sphi 0, %s96
      %s98 = sphi 0, %s96
      %s99 = sphi 0, %s98
      %s113 = sphi 0, %s99
      %s117 = sphi 0, %s117
      %s119 = sphi 0, %s117
      %s120 = sphi 0, %s119
      %s134 = sphi 0, %s120
      %s138 = sphi 0, %s138
      %s140 = sphi 0, %s138
      %s141 = sphi 0, %s140
      %s155 = sphi 0, %s141
      %s159 = sphi 0, %s159
      %s161 = sphi 0, %s159
      %s162 = sphi 0, %s161
      %s176 = sphi 0, %s162
      %s182 = sphi 0, %s184
      %s185 = sphi 0, %s182
      %s186 = sphi 0, %s185
      %s202 = sphi 0, %s186
    $region4: #{tpu_custom_call.1} parent=1 // loop_header_branch
      %23 = sbr.rel (%p21) target = $region8
    $region5: #{tpu_custom_call.1} parent=1 // loop_body
      %s25 = ssub.s32 %s20, 1
      %s26 = ssub.s32 %s20, 2
      %s27 = sadd.s32 %s20, 1
      %s28 = ssub.s32 %s20, %s27
      %p29 = scmp.eq.s32.totalorder %s28, 0
      %s31 = sadd.s32 %s30, 1
      %s32 = scalar_select %p29, %s30, %s31
      %p35 = pneg %p29
      %p36 = scmp.eq.s32.totalorder %s20, 1
      %p37 = por %p35, %p36
      %p38 = scmp.ne.s32.totalorder %s30, %s33
      %p39 = scmp.eq.s32.totalorder %s20, 0
      %p40 = por %p38, %p39
      %p41 = scmp.ne.s32.totalorder %s30, %s33
      %p42 = scmp.eq.s32.totalorder %s25, 1
      %p43 = por %p41, %p42
      %p44 = scmp.ne.s32.totalorder %s33, %s34
      %p45 = scmp.eq.s32.totalorder %s25, 0
      %p46 = por %p44, %p45
      %p47 = scmp.ne.s32.totalorder %s33, %s34
      %p48 = scmp.eq.s32.totalorder %s26, 1
      %p49 = por %p47, %p48
      %p51 = scmp.ne.s32.totalorder %s34, %s50
      %p52 = scmp.eq.s32.totalorder %s26, 0
      %p53 = por %p51, %p52
      %s55 = sadd.s32 %s54, 1
      %p58 = scmp.eq.s32.totalorder %s20, 1
      %p59 = scmp.ne.s32.totalorder %s54, %s56
      %p60 = scmp.eq.s32.totalorder %s20, 0
      %p61 = por %p59, %p60
      %p62 = scmp.ne.s32.totalorder %s54, %s56
      %p63 = scmp.eq.s32.totalorder %s25, 1
      %p64 = por %p62, %p63
      %p65 = scmp.ne.s32.totalorder %s56, %s57
      %p66 = scmp.eq.s32.totalorder %s25, 0
      %p67 = por %p65, %p66
      %p68 = scmp.ne.s32.totalorder %s56, %s57
      %p69 = scmp.eq.s32.totalorder %s26, 1
      %p70 = por %p68, %p69
      %p72 = scmp.ne.s32.totalorder %s57, %s71
      %p73 = scmp.eq.s32.totalorder %s26, 0
      %p74 = por %p72, %p73
      %s76 = sadd.s32 %s75, 1
      %p79 = scmp.eq.s32.totalorder %s20, 1
      %p80 = scmp.ne.s32.totalorder %s75, %s77
      %p81 = scmp.eq.s32.totalorder %s20, 0
      %p82 = por %p80, %p81
      %p83 = scmp.ne.s32.totalorder %s75, %s77
      %p84 = scmp.eq.s32.totalorder %s25, 1
      %p85 = por %p83, %p84
      %p86 = scmp.ne.s32.totalorder %s77, %s78
      %p87 = scmp.eq.s32.totalorder %s25, 0
      %p88 = por %p86, %p87
      %p89 = scmp.ne.s32.totalorder %s77, %s78
      %p90 = scmp.eq.s32.totalorder %s26, 1
      %p91 = por %p89, %p90
      %p93 = scmp.ne.s32.totalorder %s78, %s92
      %p94 = scmp.eq.s32.totalorder %s26, 0
      %p95 = por %p93, %p94
      %s97 = sadd.s32 %s96, 1
      %p100 = scmp.eq.s32.totalorder %s20, 1
      %p101 = scmp.ne.s32.totalorder %s96, %s98
      %p102 = scmp.eq.s32.totalorder %s20, 0
      %p103 = por %p101, %p102
      %p104 = scmp.ne.s32.totalorder %s96, %s98
      %p105 = scmp.eq.s32.totalorder %s25, 1
      %p106 = por %p104, %p105
      %p107 = scmp.ne.s32.totalorder %s98, %s99
      %p108 = scmp.eq.s32.totalorder %s25, 0
      %p109 = por %p107, %p108
      %p110 = scmp.ne.s32.totalorder %s98, %s99
      %p111 = scmp.eq.s32.totalorder %s26, 1
      %p112 = por %p110, %p111
      %p114 = scmp.ne.s32.totalorder %s99, %s113
      %p115 = scmp.eq.s32.totalorder %s26, 0
      %p116 = por %p114, %p115
      %s118 = sadd.s32 %s117, 1
      %p121 = scmp.eq.s32.totalorder %s20, 1
      %p122 = scmp.ne.s32.totalorder %s117, %s119
      %p123 = scmp.eq.s32.totalorder %s20, 0
      %p124 = por %p122, %p123
      %p125 = scmp.ne.s32.totalorder %s117, %s119
      %p126 = scmp.eq.s32.totalorder %s25, 1
      %p127 = por %p125, %p126
      %p128 = scmp.ne.s32.totalorder %s119, %s120
      %p129 = scmp.eq.s32.totalorder %s25, 0
      %p130 = por %p128, %p129
      %p131 = scmp.ne.s32.totalorder %s119, %s120
      %p132 = scmp.eq.s32.totalorder %s26, 1
      %p133 = por %p131, %p132
      %p135 = scmp.ne.s32.totalorder %s120, %s134
      %p136 = scmp.eq.s32.totalorder %s26, 0
      %p137 = por %p135, %p136
      %s139 = sadd.s32 %s138, 1
      %p142 = scmp.eq.s32.totalorder %s20, 1
      %p143 = scmp.ne.s32.totalorder %s138, %s140
      %p144 = scmp.eq.s32.totalorder %s20, 0
      %p145 = por %p143, %p144
      %p146 = scmp.ne.s32.totalorder %s138, %s140
      %p147 = scmp.eq.s32.totalorder %s25, 1
      %p148 = por %p146, %p147
      %p149 = scmp.ne.s32.totalorder %s140, %s141
      %p150 = scmp.eq.s32.totalorder %s25, 0
      %p151 = por %p149, %p150
      %p152 = scmp.ne.s32.totalorder %s140, %s141
      %p153 = scmp.eq.s32.totalorder %s26, 1
      %p154 = por %p152, %p153
      %p156 = scmp.ne.s32.totalorder %s141, %s155
      %p157 = scmp.eq.s32.totalorder %s26, 0
      %p158 = por %p156, %p157
      %s160 = sadd.s32 %s159, 1
      %p163 = scmp.eq.s32.totalorder %s20, 1
      %p164 = scmp.ne.s32.totalorder %s159, %s161
      %p165 = scmp.eq.s32.totalorder %s20, 0
      %p166 = por %p164, %p165
      %p167 = scmp.ne.s32.totalorder %s159, %s161
      %p168 = scmp.eq.s32.totalorder %s25, 1
      %p169 = por %p167, %p168
      %p170 = scmp.ne.s32.totalorder %s161, %s162
      %p171 = scmp.eq.s32.totalorder %s25, 0
      %p172 = por %p170, %p171
      %p173 = scmp.ne.s32.totalorder %s161, %s162
      %p174 = scmp.eq.s32.totalorder %s26, 1
      %p175 = por %p173, %p174
      %p177 = scmp.ne.s32.totalorder %s162, %s176
      %p178 = scmp.eq.s32.totalorder %s26, 0
      %p179 = por %p177, %p178
      %s180 = ssub.s32 %s20, %s27
      %p181 = scmp.eq.s32.totalorder %s180, 0
      %s183 = sadd.s32 %s182, 1
      %s184 = scalar_select %p181, %s182, %s183
      %p187 = pneg %p181
      %p188 = scmp.eq.s32.totalorder %s20, 1
      %p189 = por %p187, %p188
      %p190 = scmp.ne.s32.totalorder %s182, %s185
      %p191 = scmp.eq.s32.totalorder %s20, 0
      %p192 = por %p190, %p191
      %p193 = scmp.ne.s32.totalorder %s182, %s185
      %p194 = scmp.eq.s32.totalorder %s25, 1
      %p195 = por %p193, %p194
      %p196 = scmp.ne.s32.totalorder %s185, %s186
      %p197 = scmp.eq.s32.totalorder %s25, 0
      %p198 = por %p196, %p197
      %p199 = scmp.ne.s32.totalorder %s185, %s186
      %p200 = scmp.eq.s32.totalorder %s26, 1
      %p201 = por %p199, %p200
      %p203 = scmp.ne.s32.totalorder %s186, %s202
      %p204 = scmp.eq.s32.totalorder %s26, 0
      %p205 = por %p203, %p204
      %p206 = scmp.le.s32.totalorder 1, %s20
      %p207 = scmp.lt.s32.totalorder %s20, 3
      %p208 = pnand %p206, %p207
      %p209 = pneg %p208
      // Predicated region
      $region9: #{tpu_custom_call.1} parent=5 // pred_check
        _
      $region10: #{tpu_custom_call.1} parent=5 // pred_check_branch
        %211 = sbr.rel (%p208) target = $region12
      $region11: #{tpu_custom_call.1} parent=5 // pred_region
        %s212 = ssub.s32 %s20, 1
        // Predicated region
        $region13: #{tpu_custom_call.1} parent=11 // pred_check
          %p213 = pneg %p67
        $region14: #{tpu_custom_call.1} parent=11 // pred_check_branch
          %215 = sbr.rel (%p213) target = $region16
        $region15: #{tpu_custom_call.1} parent=11 // pred_region
          _
        $region16: #{tpu_custom_call.1} parent=11 // pred_fallthru
          _
        // Predicated region
        $region17: #{tpu_custom_call.1} parent=11 // pred_check
          %p216 = pneg %p88
        $region18: #{tpu_custom_call.1} parent=11 // pred_check_branch
          %218 = sbr.rel (%p216) target = $region20
        $region19: #{tpu_custom_call.1} parent=11 // pred_region
          _
        $region20: #{tpu_custom_call.1} parent=11 // pred_fallthru
          _
        // Predicated region
        $region21: #{tpu_custom_call.1} parent=11 // pred_check
          %p219 = pneg %p109
        $region22: #{tpu_custom_call.1} parent=11 // pred_check_branch
          %221 = sbr.rel (%p219) target = $region24
        $region23: #{tpu_custom_call.1} parent=11 // pred_region
          _
        $region24: #{tpu_custom_call.1} parent=11 // pred_fallthru
          _
        // Predicated region
        $region25: #{tpu_custom_call.1} parent=11 // pred_check
          %p222 = pneg %p130
        $region26: #{tpu_custom_call.1} parent=11 // pred_check_branch
          %224 = sbr.rel (%p222) target = $region28
        $region27: #{tpu_custom_call.1} parent=11 // pred_region
          _
        $region28: #{tpu_custom_call.1} parent=11 // pred_fallthru
          _
        // Predicated region
        $region29: #{tpu_custom_call.1} parent=11 // pred_check
          %p225 = pneg %p151
        $region30: #{tpu_custom_call.1} parent=11 // pred_check_branch
          %227 = sbr.rel (%p225) target = $region32
        $region31: #{tpu_custom_call.1} parent=11 // pred_region
          %s229 = ssub.s32 2048, 2048
          %230 = vsyncadd [#allocation8], %s229
          %s231 = sshll.u32 [#allocation7], 4
          %s232 = int_to_ptr.vmem [resolvable:$true] %s231
          %237 = dma.hbm_to_vmem [thread:$0]  %s5, 2048, %s232, [#allocation8], 1024, 1024, 64
        $region32: #{tpu_custom_call.1} parent=11 // pred_fallthru
          _
        // Predicated region
        $region33: #{tpu_custom_call.1} parent=11 // pred_check
          %p238 = pneg %p172
        $region34: #{tpu_custom_call.1} parent=11 // pred_check_branch
          %240 = sbr.rel (%p238) target = $region36
        $region35: #{tpu_custom_call.1} parent=11 // pred_region
          %s242 = ssub.s32 2048, 2048
          %243 = vsyncadd [#allocation8], %s242
          %s244 = sshll.u32 [#allocation9], 4
          %s245 = int_to_ptr.vmem [resolvable:$true] %s244
          %250 = dma.hbm_to_vmem [thread:$0]  %s6, 2048, %s245, [#allocation8], 256, 256, 16
        $region36: #{tpu_custom_call.1} parent=11 // pred_fallthru
          _
      $region12: #{tpu_custom_call.1} parent=5 // pred_fallthru
        _
      %p251 = scmp.lt.s32.totalorder %s20, 2
      // Predicated region
      $region37: #{tpu_custom_call.1} parent=5 // pred_check
        %p252 = pneg %p251
      $region38: #{tpu_custom_call.1} parent=5 // pred_check_branch
        %254 = sbr.rel (%p252) target = $region40
      $region39: #{tpu_custom_call.1} parent=5 // pred_region
        // Predicated region
        $region41: #{tpu_custom_call.1} parent=39 // pred_check
          %p255 = pneg %p40
        $region42: #{tpu_custom_call.1} parent=39 // pred_check_branch
          %257 = sbr.rel (%p255) target = $region44
        $region43: #{tpu_custom_call.1} parent=39 // pred_region
          %s258 = sand.u32 %s30, 1
          %s259 = scalar_lea.sflag [#allocation5], %s258
          %s260 = sand.u32 %s30, 1
          %s261 = smul.addr %s260, 64
          %s262 = scalar_lea.vmem [#allocation4], %s261
          %s263 = smul.u32 8, %s20
          %s265 = ssub.s32 1024, 1024
          %266 = vsyncadd %s259, %s265
          %s267 = smul.addr %s263, 128
          %s268 = scalar_lea.hbm %s0, %s267
          %s270 = sshll.u32 %s262, 4
          %s271 = int_to_ptr.vmem [resolvable:$true] %s270
          %273 = dma.hbm_to_vmem [thread:$0]  %s268, 1024, %s271, %s259
        $region44: #{tpu_custom_call.1} parent=39 // pred_fallthru
          _
      $region40: #{tpu_custom_call.1} parent=5 // pred_fallthru
        _
      %p274 = scmp.le.s32.totalorder 1, %s20
      %p275 = scmp.lt.s32.totalorder %s20, 3
      %p276 = pnand %p274, %p275
      %p277 = pneg %p276
      // Predicated region
      $region45: #{tpu_custom_call.1} parent=5 // pred_check
        _
      $region46: #{tpu_custom_call.1} parent=5 // pred_check_branch
        %279 = sbr.rel (%p276) target = $region48
      $region47: #{tpu_custom_call.1} parent=5 // pred_region
        %s280 = ssub.s32 %s20, 1
        %s281 = sand.u32 %s33, 1
        %s282 = scalar_lea.sflag [#allocation5], %s281
        %s283 = sand.u32 %s33, 1
        %s284 = smul.addr %s283, 64
        %s285 = scalar_lea.vmem [#allocation4], %s284
        // Predicated region
        $region49: #{tpu_custom_call.1} parent=47 // pred_check
          %p286 = pneg %p46
        $region50: #{tpu_custom_call.1} parent=47 // pred_check_branch
          %288 = sbr.rel (%p286) target = $region52
        $region51: #{tpu_custom_call.1} parent=47 // pred_region
          %289 = dma.done %s282, 1024
        $region52: #{tpu_custom_call.1} parent=47 // pred_fallthru
          _
        // Predicated region
        $region53: #{tpu_custom_call.1} parent=47 // pred_check
          %p290 = pneg %p151
        $region54: #{tpu_custom_call.1} parent=47 // pred_check_branch
          %292 = sbr.rel (%p290) target = $region56
        $region55: #{tpu_custom_call.1} parent=47 // pred_region
          %293 = dma.done [#allocation8], 2048
        $region56: #{tpu_custom_call.1} parent=47 // pred_fallthru
          _
        // Predicated region
        $region57: #{tpu_custom_call.1} parent=47 // pred_check
          %p294 = pneg %p172
        $region58: #{tpu_custom_call.1} parent=47 // pred_check_branch
          %296 = sbr.rel (%p294) target = $region60
        $region59: #{tpu_custom_call.1} parent=47 // pred_region
          %297 = dma.done [#allocation8], 2048
        $region60: #{tpu_custom_call.1} parent=47 // pred_fallthru
          _
        %s298 = sand.u32 %s33, 1
        %s299 = scalar_lea.sflag [#allocation5], %s298
        %s300 = sand.u32 %s33, 1
        %s301 = smul.addr %s300, 64
        %s302 = scalar_lea.vmem [#allocation4], %s301
        %p303 = pneg %p46
        %p304 = pneg %p43
        %p305 = pneg %p67
        %p306 = pneg %p64
        %p307 = pneg %p88
        %p308 = pneg %p85
        %p309 = pneg %p109
        %p310 = pneg %p106
        %p311 = pneg %p130
        %p312 = pneg %p127
        %p313 = pneg %p151
        %p314 = pneg %p148
        %p315 = pneg %p172
        %p316 = pneg %p169
        %p317 = pneg %p198
        %p318 = pneg %p195
        %s319 = sand.u32 %s185, 1
        %s320 = scalar_lea.sflag [#allocation6], %s319
        %s321 = sand.u32 %s185, 1
        %s322 = smul.addr %s321, 128
        %s323 = scalar_lea.vmem [#allocation10], %s322
        %s324 = smul.u32 8, %s25
        %s325 = smul.u32 8, %s25
        %v326 = vld [vmem:[%s285] sm:$0xff]
        %v327 = vld [vmem:[%s285 + $0x8] sm:$0xff]
        %v328 = vld [vmem:[%s285 + $0x10] sm:$0xff]
        %v329 = vld [vmem:[%s285 + $0x18] sm:$0xff]
        %v330 = vld [vmem:[%s285 + $0x20] sm:$0xff]
        %v331 = vld [vmem:[%s285 + $0x28] sm:$0xff]
        %v332 = vld [vmem:[%s285 + $0x30] sm:$0xff]
        %v333 = vld [vmem:[%s285 + $0x38] sm:$0xff]
        %v334 = vld [vmem:[%s1] sm:$0xff]
        %336 = vset.pattern.permute.xlu0 0
        %337 = vperm.xlu0 %336, %v334
        %v338 = vpop.permute.xlu0 %337
        %v340 = vmul.f32 %v326, %v338
        %v341 = vmul.f32 %v327, %v338
        %v342 = vmul.f32 %v328, %v338
        %v343 = vmul.f32 %v329, %v338
        %v344 = vmul.f32 %v330, %v338
        %v345 = vmul.f32 %v331, %v338
        %v346 = vmul.f32 %v332, %v338
        %v347 = vmul.f32 %v333, %v338
        %v348 = vld [vmem:[%s2] sm:$0xff]
        %350 = vset.pattern.permute.xlu0 0
        %351 = vperm.xlu0 %350, %v348
        %v352 = vpop.permute.xlu0 %351
        %v354 = vadd.f32 %v340, %v352
        %v355 = vadd.f32 %v341, %v352
        %v356 = vadd.f32 %v342, %v352
        %v357 = vadd.f32 %v343, %v352
        %v358 = vadd.f32 %v344, %v352
        %v359 = vadd.f32 %v345, %v352
        %v360 = vadd.f32 %v346, %v352
        %v361 = vadd.f32 %v347, %v352
        %v362 = vmax.f32 %v354, 0.0
        %v363 = vmax.f32 %v355, 0.0
        %v364 = vmax.f32 %v356, 0.0
        %v365 = vmax.f32 %v357, 0.0
        %v366 = vmax.f32 %v358, 0.0
        %v367 = vmax.f32 %v359, 0.0
        %v368 = vmax.f32 %v360, 0.0
        %v369 = vmax.f32 %v361, 0.0
        %v370 = vld [vmem:[%s3] sm:$0xff]
        %v371 = vld [vmem:[%s3 + $0x8] sm:$0xff]
        %v372 = vld [vmem:[%s4] sm:$0xff]
        %v373 = vld [vmem:[%s4 + $0x8] sm:$0xff]
        %375 = vset.pattern.permute.xlu0 0
        %376 = vperm.xlu0 %375, %v372
        %v377 = vpop.permute.xlu0 %376
        %380 = vset.pattern.permute.xlu0 0
        %381 = vperm.xlu0 %380, %v373
        %v382 = vpop.permute.xlu0 %381
        %vm384 = vcmask 64512
        %v386 = vsel %vm384, %v370, 0
        %v389 = vsel %vm384, %v371, 0
        %391 = vmatprep.subr.mxu0 0.0
        %392 = vmatpush1.msra.mxu0 0.0
        %393 = vmatprep.subr.mxu0 0.0
        %394 = vmatpush1.msra.mxu0 0.0
        %395 = vmatprep.subr.mxu0 0.0
        %396 = vmatpush1.msra.mxu0 0.0
        %397 = vmatprep.subr.mxu0 0.0
        %398 = vmatpush1.msra.mxu0 0.0
        %399 = vmatprep.subr.mxu0 0.0
        %400 = vmatpush1.msra.mxu0 0.0
        %401 = vmatprep.subr.mxu0 0.0
        %402 = vmatpush1.msra.mxu0 0.0
        %403 = vmatprep.subr.mxu0 0.0
        %404 = vmatpush1.msra.mxu0 0.0
        %405 = vmatprep.subr.mxu0 0.0
        %406 = vmatpush1.msra.mxu0 0.0
        %407 = vmatprep.subr.mxu0 0.0
        %408 = vmatpush1.msra.mxu0 0.0
        %409 = vmatprep.subr.mxu0 0.0
        %410 = vmatpush1.msra.mxu0 0.0
        %411 = vmatprep.subr.mxu0 0.0
        %412 = vmatpush1.msra.mxu0 0.0
        %413 = vmatprep.subr.mxu0 0.0
        %414 = vmatpush1.msra.mxu0 0.0
        %415 = vmatprep.subr.mxu0 0.0
        %416 = vmatpush1.msra.mxu0 0.0
        %417 = vmatprep.subr.mxu0 0.0
        %418 = vmatpush1.msra.mxu0 0.0
        %419 = vmatprep.subr.mxu0 0.0
        %420 = vmatpush1.msra.mxu0 0.0
        %421 = vmatprep.subr.mxu0 %v363
        %422 = vmatpush1.msra.mxu0 %v362
        %423 = vmatprep.subr.mxu0 0.0
        %424 = vmatpush2.msra.mxu0 0.0
        %425 = vmatprep.subr.mxu0 0.0
        %426 = vmatpush2.msra.mxu0 0.0
        %427 = vmatprep.subr.mxu0 0.0
        %428 = vmatpush2.msra.mxu0 0.0
        %429 = vmatprep.subr.mxu0 0.0
        %430 = vmatpush2.msra.mxu0 0.0
        %431 = vmatprep.subr.mxu0 0.0
        %432 = vmatpush2.msra.mxu0 0.0
        %433 = vmatprep.subr.mxu0 0.0
        %434 = vmatpush2.msra.mxu0 0.0
        %435 = vmatprep.subr.mxu0 0.0
        %436 = vmatpush2.msra.mxu0 0.0
        %437 = vmatprep.subr.mxu0 0.0
        %438 = vmatpush2.msra.mxu0 0.0
        %439 = vmatprep.subr.mxu0 0.0
        %440 = vmatpush2.msra.mxu0 0.0
        %441 = vmatprep.subr.mxu0 0.0
        %442 = vmatpush2.msra.mxu0 0.0
        %443 = vmatprep.subr.mxu0 0.0
        %444 = vmatpush2.msra.mxu0 0.0
        %445 = vmatprep.subr.mxu0 0.0
        %446 = vmatpush2.msra.mxu0 0.0
        %447 = vmatprep.subr.mxu0 0.0
        %448 = vmatpush2.msra.mxu0 0.0
        %449 = vmatprep.subr.mxu0 0.0
        %450 = vmatpush2.msra.mxu0 0.0
        %451 = vmatprep.subr.mxu0 0.0
        %452 = vmatpush2.msra.mxu0 0.0
        %453 = vmatprep.subr.mxu0 0.0
        %454 = vmatpush2.msra.mxu0 0.0
        %455 = vmatprep.mubr.f32.mxu0 0.0
        %456 = vmatmul.mubr.f32.gmra.mxu0 %v386
        %v457 = vpop.f32.mrf.mxu0
        %v458 = vadd.f32 %v377, %v457
        %v459 = vpop.f32.mrf.mxu0
        %v460 = vadd.f32 %v377, %v459
        %461 = vmatprep.mubr.f32.mxu0 0.0
        %462 = vmatmul.mubr.f32.gmra.mxu0 %v389
        %v463 = vpop.f32.mrf.mxu0
        %v464 = vadd.f32 %v382, %v463
        %v465 = vpop.f32.mrf.mxu0
        %v466 = vadd.f32 %v382, %v465
        %467 = vdwg.mxu0
        %468 = vmatprep.subr.mxu0 0.0
        %469 = vmatpush1.msra.mxu0 0.0
        %470 = vmatprep.subr.mxu0 0.0
        %471 = vmatpush1.msra.mxu0 0.0
        %472 = vmatprep.subr.mxu0 0.0
        %473 = vmatpush1.msra.mxu0 0.0
        %474 = vmatprep.subr.mxu0 0.0
        %475 = vmatpush1.msra.mxu0 0.0
        %476 = vmatprep.subr.mxu0 0.0
        %477 = vmatpush1.msra.mxu0 0.0
        %478 = vmatprep.subr.mxu0 0.0
        %479 = vmatpush1.msra.mxu0 0.0
        %480 = vmatprep.subr.mxu0 0.0
        %481 = vmatpush1.msra.mxu0 0.0
        %482 = vmatprep.subr.mxu0 0.0
        %483 = vmatpush1.msra.mxu0 0.0
        %484 = vmatprep.subr.mxu0 0.0
        %485 = vmatpush1.msra.mxu0 0.0
        %486 = vmatprep.subr.mxu0 0.0
        %487 = vmatpush1.msra.mxu0 0.0
        %488 = vmatprep.subr.mxu0 0.0
        %489 = vmatpush1.msra.mxu0 0.0
        %490 = vmatprep.subr.mxu0 0.0
        %491 = vmatpush1.msra.mxu0 0.0
        %492 = vmatprep.subr.mxu0 0.0
        %493 = vmatpush1.msra.mxu0 0.0
        %494 = vmatprep.subr.mxu0 0.0
        %495 = vmatpush1.msra.mxu0 0.0
        %496 = vmatprep.subr.mxu0 0.0
        %497 = vmatpush1.msra.mxu0 0.0
        %498 = vmatprep.subr.mxu0 %v365
        %499 = vmatpush1.msra.mxu0 %v364
        %500 = vmatprep.subr.mxu0 0.0
        %501 = vmatpush2.msra.mxu0 0.0
        %502 = vmatprep.subr.mxu0 0.0
        %503 = vmatpush2.msra.mxu0 0.0
        %504 = vmatprep.subr.mxu0 0.0
        %505 = vmatpush2.msra.mxu0 0.0
        %506 = vmatprep.subr.mxu0 0.0
        %507 = vmatpush2.msra.mxu0 0.0
        %508 = vmatprep.subr.mxu0 0.0
        %509 = vmatpush2.msra.mxu0 0.0
        %510 = vmatprep.subr.mxu0 0.0
        %511 = vmatpush2.msra.mxu0 0.0
        %512 = vmatprep.subr.mxu0 0.0
        %513 = vmatpush2.msra.mxu0 0.0
        %514 = vmatprep.subr.mxu0 0.0
        %515 = vmatpush2.msra.mxu0 0.0
        %516 = vmatprep.subr.mxu0 0.0
        %517 = vmatpush2.msra.mxu0 0.0
        %518 = vmatprep.subr.mxu0 0.0
        %519 = vmatpush2.msra.mxu0 0.0
        %520 = vmatprep.subr.mxu0 0.0
        %521 = vmatpush2.msra.mxu0 0.0
        %522 = vmatprep.subr.mxu0 0.0
        %523 = vmatpush2.msra.mxu0 0.0
        %524 = vmatprep.subr.mxu0 0.0
        %525 = vmatpush2.msra.mxu0 0.0
        %526 = vmatprep.subr.mxu0 0.0
        %527 = vmatpush2.msra.mxu0 0.0
        %528 = vmatprep.subr.mxu0 0.0
        %529 = vmatpush2.msra.mxu0 0.0
        %530 = vmatprep.subr.mxu0 0.0
        %531 = vmatpush2.msra.mxu0 0.0
        %532 = vmatprep.mubr.f32.mxu0 0.0
        %533 = vmatmul.mubr.f32.gmra.mxu0 %v386
        %v534 = vpop.f32.mrf.mxu0
        %v535 = vadd.f32 %v377, %v534
        %v536 = vpop.f32.mrf.mxu0
        %v537 = vadd.f32 %v377, %v536
        %538 = vmatprep.mubr.f32.mxu0 0.0
        %539 = vmatmul.mubr.f32.gmra.mxu0 %v389
        %v540 = vpop.f32.mrf.mxu0
        %v541 = vadd.f32 %v382, %v540
        %v542 = vpop.f32.mrf.mxu0
        %v543 = vadd.f32 %v382, %v542
        %544 = vdwg.mxu0
        %545 = vmatprep.subr.mxu0 0.0
        %546 = vmatpush1.msra.mxu0 0.0
        %547 = vmatprep.subr.mxu0 0.0
        %548 = vmatpush1.msra.mxu0 0.0
        %549 = vmatprep.subr.mxu0 0.0
        %550 = vmatpush1.msra.mxu0 0.0
        %551 = vmatprep.subr.mxu0 0.0
        %552 = vmatpush1.msra.mxu0 0.0
        %553 = vmatprep.subr.mxu0 0.0
        %554 = vmatpush1.msra.mxu0 0.0
        %555 = vmatprep.subr.mxu0 0.0
        %556 = vmatpush1.msra.mxu0 0.0
        %557 = vmatprep.subr.mxu0 0.0
        %558 = vmatpush1.msra.mxu0 0.0
        %559 = vmatprep.subr.mxu0 0.0
        %560 = vmatpush1.msra.mxu0 0.0
        %561 = vmatprep.subr.mxu0 0.0
        %562 = vmatpush1.msra.mxu0 0.0
        %563 = vmatprep.subr.mxu0 0.0
        %564 = vmatpush1.msra.mxu0 0.0
        %565 = vmatprep.subr.mxu0 0.0
        %566 = vmatpush1.msra.mxu0 0.0
        %567 = vmatprep.subr.mxu0 0.0
        %568 = vmatpush1.msra.mxu0 0.0
        %569 = vmatprep.subr.mxu0 0.0
        %570 = vmatpush1.msra.mxu0 0.0
        %571 = vmatprep.subr.mxu0 0.0
        %572 = vmatpush1.msra.mxu0 0.0
        %573 = vmatprep.subr.mxu0 0.0
        %574 = vmatpush1.msra.mxu0 0.0
        %575 = vmatprep.subr.mxu0 %v367
        %576 = vmatpush1.msra.mxu0 %v366
        %577 = vmatprep.subr.mxu0 0.0
        %578 = vmatpush2.msra.mxu0 0.0
        %579 = vmatprep.subr.mxu0 0.0
        %580 = vmatpush2.msra.mxu0 0.0
        %581 = vmatprep.subr.mxu0 0.0
        %582 = vmatpush2.msra.mxu0 0.0
        %583 = vmatprep.subr.mxu0 0.0
        %584 = vmatpush2.msra.mxu0 0.0
        %585 = vmatprep.subr.mxu0 0.0
        %586 = vmatpush2.msra.mxu0 0.0
        %587 = vmatprep.subr.mxu0 0.0
        %588 = vmatpush2.msra.mxu0 0.0
        %589 = vmatprep.subr.mxu0 0.0
        %590 = vmatpush2.msra.mxu0 0.0
        %591 = vmatprep.subr.mxu0 0.0
        %592 = vmatpush2.msra.mxu0 0.0
        %593 = vmatprep.subr.mxu0 0.0
        %594 = vmatpush2.msra.mxu0 0.0
        %595 = vmatprep.subr.mxu0 0.0
        %596 = vmatpush2.msra.mxu0 0.0
        %597 = vmatprep.subr.mxu0 0.0
        %598 = vmatpush2.msra.mxu0 0.0
        %599 = vmatprep.subr.mxu0 0.0
        %600 = vmatpush2.msra.mxu0 0.0
        %601 = vmatprep.subr.mxu0 0.0
        %602 = vmatpush2.msra.mxu0 0.0
        %603 = vmatprep.subr.mxu0 0.0
        %604 = vmatpush2.msra.mxu0 0.0
        %605 = vmatprep.subr.mxu0 0.0
        %606 = vmatpush2.msra.mxu0 0.0
        %607 = vmatprep.subr.mxu0 0.0
        %608 = vmatpush2.msra.mxu0 0.0
        %609 = vmatprep.mubr.f32.mxu0 0.0
        %610 = vmatmul.mubr.f32.gmra.mxu0 %v386
        %v611 = vpop.f32.mrf.mxu0
        %v612 = vadd.f32 %v377, %v611
        %v613 = vpop.f32.mrf.mxu0
        %v614 = vadd.f32 %v377, %v613
        %615 = vmatprep.mubr.f32.mxu0 0.0
        %616 = vmatmul.mubr.f32.gmra.mxu0 %v389
        %v617 = vpop.f32.mrf.mxu0
        %v618 = vadd.f32 %v382, %v617
        %v619 = vpop.f32.mrf.mxu0
        %v620 = vadd.f32 %v382, %v619
        %621 = vdwg.mxu0
        %622 = vmatprep.subr.mxu0 0.0
        %623 = vmatpush1.msra.mxu0 0.0
        %624 = vmatprep.subr.mxu0 0.0
        %625 = vmatpush1.msra.mxu0 0.0
        %626 = vmatprep.subr.mxu0 0.0
        %627 = vmatpush1.msra.mxu0 0.0
        %628 = vmatprep.subr.mxu0 0.0
        %629 = vmatpush1.msra.mxu0 0.0
        %630 = vmatprep.subr.mxu0 0.0
        %631 = vmatpush1.msra.mxu0 0.0
        %632 = vmatprep.subr.mxu0 0.0
        %633 = vmatpush1.msra.mxu0 0.0
        %634 = vmatprep.subr.mxu0 0.0
        %635 = vmatpush1.msra.mxu0 0.0
        %636 = vmatprep.subr.mxu0 0.0
        %637 = vmatpush1.msra.mxu0 0.0
        %638 = vmatprep.subr.mxu0 0.0
        %639 = vmatpush1.msra.mxu0 0.0
        %640 = vmatprep.subr.mxu0 0.0
        %641 = vmatpush1.msra.mxu0 0.0
        %642 = vmatprep.subr.mxu0 0.0
        %643 = vmatpush1.msra.mxu0 0.0
        %644 = vmatprep.subr.mxu0 0.0
        %645 = vmatpush1.msra.mxu0 0.0
        %646 = vmatprep.subr.mxu0 0.0
        %647 = vmatpush1.msra.mxu0 0.0
        %648 = vmatprep.subr.mxu0 0.0
        %649 = vmatpush1.msra.mxu0 0.0
        %650 = vmatprep.subr.mxu0 0.0
        %651 = vmatpush1.msra.mxu0 0.0
        %652 = vmatprep.subr.mxu0 %v369
        %653 = vmatpush1.msra.mxu0 %v368
        %654 = vmatprep.subr.mxu0 0.0
        %655 = vmatpush2.msra.mxu0 0.0
        %656 = vmatprep.subr.mxu0 0.0
        %657 = vmatpush2.msra.mxu0 0.0
        %658 = vmatprep.subr.mxu0 0.0
        %659 = vmatpush2.msra.mxu0 0.0
        %660 = vmatprep.subr.mxu0 0.0
        %661 = vmatpush2.msra.mxu0 0.0
        %662 = vmatprep.subr.mxu0 0.0
        %663 = vmatpush2.msra.mxu0 0.0
        %664 = vmatprep.subr.mxu0 0.0
        %665 = vmatpush2.msra.mxu0 0.0
        %666 = vmatprep.subr.mxu0 0.0
        %667 = vmatpush2.msra.mxu0 0.0
        %668 = vmatprep.subr.mxu0 0.0
        %669 = vmatpush2.msra.mxu0 0.0
        %670 = vmatprep.subr.mxu0 0.0
        %671 = vmatpush2.msra.mxu0 0.0
        %672 = vmatprep.subr.mxu0 0.0
        %673 = vmatpush2.msra.mxu0 0.0
        %674 = vmatprep.subr.mxu0 0.0
        %675 = vmatpush2.msra.mxu0 0.0
        %676 = vmatprep.subr.mxu0 0.0
        %677 = vmatpush2.msra.mxu0 0.0
        %678 = vmatprep.subr.mxu0 0.0
        %679 = vmatpush2.msra.mxu0 0.0
        %680 = vmatprep.subr.mxu0 0.0
        %681 = vmatpush2.msra.mxu0 0.0
        %682 = vmatprep.subr.mxu0 0.0
        %683 = vmatpush2.msra.mxu0 0.0
        %684 = vmatprep.subr.mxu0 0.0
        %685 = vmatpush2.msra.mxu0 0.0
        %686 = vmatprep.mubr.f32.mxu0 0.0
        %687 = vmatmul.mubr.f32.gmra.mxu0 %v386
        %v688 = vpop.f32.mrf.mxu0
        %v689 = vadd.f32 %v377, %v688
        %v690 = vpop.f32.mrf.mxu0
        %v691 = vadd.f32 %v377, %v690
        %692 = vmatprep.mubr.f32.mxu0 0.0
        %693 = vmatmul.mubr.f32.gmra.mxu0 %v389
        %v694 = vpop.f32.mrf.mxu0
        %v695 = vadd.f32 %v382, %v694
        %v696 = vpop.f32.mrf.mxu0
        %v697 = vadd.f32 %v382, %v696
        %698 = vdwg.mxu0
        %v699 = vmax.f32 %v458, 0.0
        %v700 = vmax.f32 %v460, 0.0
        %v701 = vmax.f32 %v535, 0.0
        %v702 = vmax.f32 %v537, 0.0
        %v703 = vmax.f32 %v612, 0.0
        %v704 = vmax.f32 %v614, 0.0
        %v705 = vmax.f32 %v689, 0.0
        %v706 = vmax.f32 %v691, 0.0
        %v707 = vmax.f32 %v464, 0.0
        %v708 = vmax.f32 %v466, 0.0
        %v709 = vmax.f32 %v541, 0.0
        %v710 = vmax.f32 %v543, 0.0
        %v711 = vmax.f32 %v618, 0.0
        %v712 = vmax.f32 %v620, 0.0
        %v713 = vmax.f32 %v695, 0.0
        %v714 = vmax.f32 %v697, 0.0
        %715 = vst [vmem:[#allocation2] sm:$0xff] 0.0
        %716 = vst [vmem:[#allocation2 + $0x50] sm:$0xff] 0.0
        %717 = vst [vmem:[#allocation2 + $0x48] sm:$0xff] 0.0
        %718 = vst [vmem:[#allocation2 + $0x98] sm:$0xff] 0.0
        %719 = vst [vmem:[#allocation2 + $0x8] sm:$0xff] %v699
        %720 = vst [vmem:[#allocation2 + $0x10] sm:$0xff] %v700
        %721 = vst [vmem:[#allocation2 + $0x18] sm:$0xff] %v701
        %722 = vst [vmem:[#allocation2 + $0x20] sm:$0xff] %v702
        %723 = vst [vmem:[#allocation2 + $0x28] sm:$0xff] %v703
        %724 = vst [vmem:[#allocation2 + $0x30] sm:$0xff] %v704
        %725 = vst [vmem:[#allocation2 + $0x38] sm:$0xff] %v705
        %726 = vst [vmem:[#allocation2 + $0x40] sm:$0xff] %v706
        %727 = vst [vmem:[#allocation2 + $0x58] sm:$0xff] %v707
        %728 = vst [vmem:[#allocation2 + $0x60] sm:$0xff] %v708
        %729 = vst [vmem:[#allocation2 + $0x68] sm:$0xff] %v709
        %730 = vst [vmem:[#allocation2 + $0x70] sm:$0xff] %v710
        %731 = vst [vmem:[#allocation2 + $0x78] sm:$0xff] %v711
        %732 = vst [vmem:[#allocation2 + $0x80] sm:$0xff] %v712
        %733 = vst [vmem:[#allocation2 + $0x88] sm:$0xff] %v713
        %734 = vst [vmem:[#allocation2 + $0x90] sm:$0xff] %v714
        %v735 = vld [vmem:[#allocation2] sm:$0xff]
        %v736 = vld [vmem:[#allocation2 + $0x8] sm:$0xff]
        %v737 = vld [vmem:[#allocation2 + $0x10] sm:$0xff]
        %v738 = vld [vmem:[#allocation2 + $0x18] sm:$0xff]
        %v739 = vld [vmem:[#allocation2 + $0x20] sm:$0xff]
        %v740 = vld [vmem:[#allocation2 + $0x28] sm:$0xff]
        %v741 = vld [vmem:[#allocation2 + $0x30] sm:$0xff]
        %v742 = vld [vmem:[#allocation2 + $0x38] sm:$0xff]
        %v743 = vld [vmem:[#allocation2 + $0x40] sm:$0xff]
        %v744 = vld [vmem:[#allocation2 + $0x50] sm:$0xff]
        %v745 = vld [vmem:[#allocation2 + $0x58] sm:$0xff]
        %v746 = vld [vmem:[#allocation2 + $0x60] sm:$0xff]
        %v747 = vld [vmem:[#allocation2 + $0x68] sm:$0xff]
        %v748 = vld [vmem:[#allocation2 + $0x70] sm:$0xff]
        %v749 = vld [vmem:[#allocation2 + $0x78] sm:$0xff]
        %v750 = vld [vmem:[#allocation2 + $0x80] sm:$0xff]
        %v751 = vld [vmem:[#allocation2 + $0x88] sm:$0xff]
        %v752 = vld [vmem:[#allocation2 + $0x90] sm:$0xff]
        %v753 = vld [vmem:[#allocation7] ss:$8 sm:$0xf]
        %v754 = vld [vmem:[#allocation7] ss:$8 sm:$0xf0]
        %v755 = vor.u32 %v753, %v754
        %v757 = vlaneseq
        %v758 = vshrl.u32 %v757, 7
        %v759 = vsub.s32 0, %v758
        %v760 = vrot.slane %v755, %v759
        %v761 = vlaneseq
        %v762 = vshrl.u32 %v761, 7
        %v763 = vsub.s32 1, %v762
        %v764 = vrot.slane %v755, %v763
        %v765 = vlaneseq
        %v766 = vshrl.u32 %v765, 7
        %v767 = vsub.s32 2, %v766
        %v768 = vrot.slane %v755, %v767
        %v769 = vlaneseq
        %v770 = vshrl.u32 %v769, 7
        %v771 = vsub.s32 3, %v770
        %v772 = vrot.slane %v755, %v771
        %v773 = vlaneseq
        %v774 = vshrl.u32 %v773, 7
        %v775 = vsub.s32 4, %v774
        %v776 = vrot.slane %v755, %v775
        %v777 = vlaneseq
        %v778 = vshrl.u32 %v777, 7
        %v779 = vsub.s32 5, %v778
        %v780 = vrot.slane %v755, %v779
        %v781 = vlaneseq
        %v782 = vshrl.u32 %v781, 7
        %v783 = vsub.s32 6, %v782
        %v784 = vrot.slane %v755, %v783
        %v785 = vlaneseq
        %v786 = vshrl.u32 %v785, 7
        %v787 = vsub.s32 7, %v786
        %v788 = vrot.slane %v755, %v787
        %789 = vrot.lane.b32.xlu0 %v760, 111
        %v790 = vpop.permute.xlu0 %789
        %791 = vrot.lane.b32.xlu0 %v764, 111
        %v792 = vpop.permute.xlu0 %791
        %793 = vrot.lane.b32.xlu0 %v768, 111
        %v794 = vpop.permute.xlu0 %793
        %795 = vrot.lane.b32.xlu0 %v772, 111
        %v796 = vpop.permute.xlu0 %795
        %797 = vrot.lane.b32.xlu0 %v776, 111
        %v798 = vpop.permute.xlu0 %797
        %799 = vrot.lane.b32.xlu0 %v780, 111
        %v800 = vpop.permute.xlu0 %799
        %801 = vrot.lane.b32.xlu0 %v784, 111
        %v802 = vpop.permute.xlu0 %801
        %803 = vrot.lane.b32.xlu0 %v788, 111
        %v804 = vpop.permute.xlu0 %803
        %vm805 = vcmask 908288
        %v806 = vsel %vm805, %v790, %v792
        %v807 = vsel %vm805, %v792, %v794
        %v808 = vsel %vm805, %v794, %v796
        %v809 = vsel %vm805, %v796, %v798
        %v810 = vsel %vm805, %v798, %v800
        %v811 = vsel %vm805, %v800, %v802
        %v812 = vsel %vm805, %v802, %v804
        %v822 = vmul.f32 %v735, %v790
        %v823 = vmul.f32 %v736, %v806
        %v824 = vmul.f32 %v737, %v807
        %v825 = vmul.f32 %v738, %v808
        %v826 = vmul.f32 %v739, %v809
        %v827 = vmul.f32 %v740, %v810
        %v828 = vmul.f32 %v741, %v811
        %v829 = vmul.f32 %v742, %v812
        %v830 = vmul.f32 %v743, %v804
        %v831 = vmul.f32 %v744, %v790
        %v832 = vmul.f32 %v745, %v806
        %v833 = vmul.f32 %v746, %v807
        %v834 = vmul.f32 %v747, %v808
        %v835 = vmul.f32 %v748, %v809
        %v836 = vmul.f32 %v749, %v810
        %v837 = vmul.f32 %v750, %v811
        %v838 = vmul.f32 %v751, %v812
        %v839 = vmul.f32 %v752, %v804
        %858 = vrot.lane.b32.xlu0 %v822, 17
        %v859 = vpop.permute.xlu0 %858
        %860 = vrot.lane.b32.xlu0 %v823, 17
        %v861 = vpop.permute.xlu0 %860
        %862 = vrot.lane.b32.xlu0 %v824, 17
        %v863 = vpop.permute.xlu0 %862
        %864 = vrot.lane.b32.xlu0 %v825, 17
        %v865 = vpop.permute.xlu0 %864
        %866 = vrot.lane.b32.xlu0 %v826, 17
        %v867 = vpop.permute.xlu0 %866
        %868 = vrot.lane.b32.xlu0 %v827, 17
        %v869 = vpop.permute.xlu0 %868
        %870 = vrot.lane.b32.xlu0 %v828, 17
        %v871 = vpop.permute.xlu0 %870
        %872 = vrot.lane.b32.xlu0 %v829, 17
        %v873 = vpop.permute.xlu0 %872
        %874 = vrot.lane.b32.xlu0 %v830, 17
        %v875 = vpop.permute.xlu0 %874
        %876 = vrot.lane.b32.xlu0 %v831, 17
        %v877 = vpop.permute.xlu0 %876
        %878 = vrot.lane.b32.xlu0 %v832, 17
        %v879 = vpop.permute.xlu0 %878
        %880 = vrot.lane.b32.xlu0 %v833, 17
        %v881 = vpop.permute.xlu0 %880
        %882 = vrot.lane.b32.xlu0 %v834, 17
        %v883 = vpop.permute.xlu0 %882
        %884 = vrot.lane.b32.xlu0 %v835, 17
        %v885 = vpop.permute.xlu0 %884
        %886 = vrot.lane.b32.xlu0 %v836, 17
        %v887 = vpop.permute.xlu0 %886
        %888 = vrot.lane.b32.xlu0 %v837, 17
        %v889 = vpop.permute.xlu0 %888
        %890 = vrot.lane.b32.xlu0 %v838, 17
        %v891 = vpop.permute.xlu0 %890
        %892 = vrot.lane.b32.xlu0 %v839, 17
        %v893 = vpop.permute.xlu0 %892
        %vm894 = vcmask 138240
        %v895 = vsel %vm894, %v859, %v861
        %v896 = vsel %vm894, %v861, %v863
        %v897 = vsel %vm894, %v863, %v865
        %v898 = vsel %vm894, %v865, %v867
        %v899 = vsel %vm894, %v867, %v869
        %v900 = vsel %vm894, %v869, %v871
        %v901 = vsel %vm894, %v871, %v873
        %v902 = vsel %vm894, %v873, %v875
        %v903 = vsel %vm894, %v877, %v879
        %v904 = vsel %vm894, %v879, %v881
        %v905 = vsel %vm894, %v881, %v883
        %v906 = vsel %vm894, %v883, %v885
        %v907 = vsel %vm894, %v885, %v887
        %v908 = vsel %vm894, %v887, %v889
        %v909 = vsel %vm894, %v889, %v891
        %v910 = vsel %vm894, %v891, %v893
        %927 = vst [vmem:[#allocation3] sm:$0xff] %v895
        %928 = vst [vmem:[#allocation3 + $0x8] sm:$0xff] %v896
        %929 = vst [vmem:[#allocation3 + $0x10] sm:$0xff] %v897
        %930 = vst [vmem:[#allocation3 + $0x18] sm:$0xff] %v898
        %931 = vst [vmem:[#allocation3 + $0x20] sm:$0xff] %v899
        %932 = vst [vmem:[#allocation3 + $0x28] sm:$0xff] %v900
        %933 = vst [vmem:[#allocation3 + $0x30] sm:$0xff] %v901
        %934 = vst [vmem:[#allocation3 + $0x38] sm:$0xff] %v902
        %935 = vst [vmem:[#allocation3 + $0x40] sm:$0xff] %v903
        %936 = vst [vmem:[#allocation3 + $0x48] sm:$0xff] %v904
        %937 = vst [vmem:[#allocation3 + $0x50] sm:$0xff] %v905
        %938 = vst [vmem:[#allocation3 + $0x58] sm:$0xff] %v906
        %939 = vst [vmem:[#allocation3 + $0x60] sm:$0xff] %v907
        %940 = vst [vmem:[#allocation3 + $0x68] sm:$0xff] %v908
        %941 = vst [vmem:[#allocation3 + $0x70] sm:$0xff] %v909
        %942 = vst [vmem:[#allocation3 + $0x78] sm:$0xff] %v910
        %v943 = vld [vmem:[#allocation2] sm:$0xff]
        %v944 = vld [vmem:[#allocation2 + $0x8] sm:$0xff]
        %v945 = vld [vmem:[#allocation2 + $0x10] sm:$0xff]
        %v946 = vld [vmem:[#allocation2 + $0x18] sm:$0xff]
        %v947 = vld [vmem:[#allocation2 + $0x20] sm:$0xff]
        %v948 = vld [vmem:[#allocation2 + $0x28] sm:$0xff]
        %v949 = vld [vmem:[#allocation2 + $0x30] sm:$0xff]
        %v950 = vld [vmem:[#allocation2 + $0x38] sm:$0xff]
        %v951 = vld [vmem:[#allocation2 + $0x40] sm:$0xff]
        %v952 = vld [vmem:[#allocation2 + $0x50] sm:$0xff]
        %v953 = vld [vmem:[#allocation2 + $0x58] sm:$0xff]
        %v954 = vld [vmem:[#allocation2 + $0x60] sm:$0xff]
        %v955 = vld [vmem:[#allocation2 + $0x68] sm:$0xff]
        %v956 = vld [vmem:[#allocation2 + $0x70] sm:$0xff]
        %v957 = vld [vmem:[#allocation2 + $0x78] sm:$0xff]
        %v958 = vld [vmem:[#allocation2 + $0x80] sm:$0xff]
        %v959 = vld [vmem:[#allocation2 + $0x88] sm:$0xff]
        %v960 = vld [vmem:[#allocation2 + $0x90] sm:$0xff]
        %s961 = scalar_lea.vmem [#allocation7], 1
        %v962 = vld [vmem:[%s961] ss:$8 sm:$0xf]
        %v963 = vld [vmem:[%s961] ss:$8 sm:$0xf0]
        %v964 = vor.u32 %v962, %v963
        %v966 = vlaneseq
        %v967 = vshrl.u32 %v966, 7
        %v968 = vsub.s32 0, %v967
        %v969 = vrot.slane %v964, %v968
        %v970 = vlaneseq
        %v971 = vshrl.u32 %v970, 7
        %v972 = vsub.s32 1, %v971
        %v973 = vrot.slane %v964, %v972
        %v974 = vlaneseq
        %v975 = vshrl.u32 %v974, 7
        %v976 = vsub.s32 2, %v975
        %v977 = vrot.slane %v964, %v976
        %v978 = vlaneseq
        %v979 = vshrl.u32 %v978, 7
        %v980 = vsub.s32 3, %v979
        %v981 = vrot.slane %v964, %v980
        %v982 = vlaneseq
        %v983 = vshrl.u32 %v982, 7
        %v984 = vsub.s32 4, %v983
        %v985 = vrot.slane %v964, %v984
        %v986 = vlaneseq
        %v987 = vshrl.u32 %v986, 7
        %v988 = vsub.s32 5, %v987
        %v989 = vrot.slane %v964, %v988
        %v990 = vlaneseq
        %v991 = vshrl.u32 %v990, 7
        %v992 = vsub.s32 6, %v991
        %v993 = vrot.slane %v964, %v992
        %v994 = vlaneseq
        %v995 = vshrl.u32 %v994, 7
        %v996 = vsub.s32 7, %v995
        %v997 = vrot.slane %v964, %v996
        %998 = vrot.lane.b32.xlu0 %v969, 112
        %v999 = vpop.permute.xlu0 %998
        %1000 = vrot.lane.b32.xlu0 %v973, 112
        %v1001 = vpop.permute.xlu0 %1000
        %1002 = vrot.lane.b32.xlu0 %v977, 112
        %v1003 = vpop.permute.xlu0 %1002
        %1004 = vrot.lane.b32.xlu0 %v981, 112
        %v1005 = vpop.permute.xlu0 %1004
        %1006 = vrot.lane.b32.xlu0 %v985, 112
        %v1007 = vpop.permute.xlu0 %1006
        %1008 = vrot.lane.b32.xlu0 %v989, 112
        %v1009 = vpop.permute.xlu0 %1008
        %1010 = vrot.lane.b32.xlu0 %v993, 112
        %v1011 = vpop.permute.xlu0 %1010
        %1012 = vrot.lane.b32.xlu0 %v997, 112
        %v1013 = vpop.permute.xlu0 %1012
        %vm1014 = vcmask 916480
        %v1015 = vsel %vm1014, %v999, %v1001
        %v1016 = vsel %vm1014, %v1001, %v1003
        %v1017 = vsel %vm1014, %v1003, %v1005
        %v1018 = vsel %vm1014, %v1005, %v1007
        %v1019 = vsel %vm1014, %v1007, %v1009
        %v1020 = vsel %vm1014, %v1009, %v1011
        %v1021 = vsel %vm1014, %v1011, %v1013
        %v1031 = vmul.f32 %v943, %v999
        %v1032 = vmul.f32 %v944, %v1015
        %v1033 = vmul.f32 %v945, %v1016
        %v1034 = vmul.f32 %v946, %v1017
        %v1035 = vmul.f32 %v947, %v1018
        %v1036 = vmul.f32 %v948, %v1019
        %v1037 = vmul.f32 %v949, %v1020
        %v1038 = vmul.f32 %v950, %v1021
        %v1039 = vmul.f32 %v951, %v1013
        %v1040 = vmul.f32 %v952, %v999
        %v1041 = vmul.f32 %v953, %v1015
        %v1042 = vmul.f32 %v954, %v1016
        %v1043 = vmul.f32 %v955, %v1017
        %v1044 = vmul.f32 %v956, %v1018
        %v1045 = vmul.f32 %v957, %v1019
        %v1046 = vmul.f32 %v958, %v1020
        %v1047 = vmul.f32 %v959, %v1021
        %v1048 = vmul.f32 %v960, %v1013
        %1067 = vrot.lane.b32.xlu0 %v1031, 16
        %v1068 = vpop.permute.xlu0 %1067
        %1069 = vrot.lane.b32.xlu0 %v1032, 16
        %v1070 = vpop.permute.xlu0 %1069
        %1071 = vrot.lane.b32.xlu0 %v1033, 16
        %v1072 = vpop.permute.xlu0 %1071
        %1073 = vrot.lane.b32.xlu0 %v1034, 16
        %v1074 = vpop.permute.xlu0 %1073
        %1075 = vrot.lane.b32.xlu0 %v1035, 16
        %v1076 = vpop.permute.xlu0 %1075
        %1077 = vrot.lane.b32.xlu0 %v1036, 16
        %v1078 = vpop.permute.xlu0 %1077
        %1079 = vrot.lane.b32.xlu0 %v1037, 16
        %v1080 = vpop.permute.xlu0 %1079
        %1081 = vrot.lane.b32.xlu0 %v1038, 16
        %v1082 = vpop.permute.xlu0 %1081
        %1083 = vrot.lane.b32.xlu0 %v1039, 16
        %v1084 = vpop.permute.xlu0 %1083
        %1085 = vrot.lane.b32.xlu0 %v1040, 16
        %v1086 = vpop.permute.xlu0 %1085
        %1087 = vrot.lane.b32.xlu0 %v1041, 16
        %v1088 = vpop.permute.xlu0 %1087
        %1089 = vrot.lane.b32.xlu0 %v1042, 16
        %v1090 = vpop.permute.xlu0 %1089
        %1091 = vrot.lane.b32.xlu0 %v1043, 16
        %v1092 = vpop.permute.xlu0 %1091
        %1093 = vrot.lane.b32.xlu0 %v1044, 16
        %v1094 = vpop.permute.xlu0 %1093
        %1095 = vrot.lane.b32.xlu0 %v1045, 16
        %v1096 = vpop.permute.xlu0 %1095
        %1097 = vrot.lane.b32.xlu0 %v1046, 16
        %v1098 = vpop.permute.xlu0 %1097
        %1099 = vrot.lane.b32.xlu0 %v1047, 16
        %v1100 = vpop.permute.xlu0 %1099
        %1101 = vrot.lane.b32.xlu0 %v1048, 16
        %v1102 = vpop.permute.xlu0 %1101
        %vm1103 = vcmask 130048
        %v1104 = vsel %vm1103, %v1068, %v1070
        %v1105 = vsel %vm1103, %v1070, %v1072
        %v1106 = vsel %vm1103, %v1072, %v1074
        %v1107 = vsel %vm1103, %v1074, %v1076
        %v1108 = vsel %vm1103, %v1076, %v1078
        %v1109 = vsel %vm1103, %v1078, %v1080
        %v1110 = vsel %vm1103, %v1080, %v1082
        %v1111 = vsel %vm1103, %v1082, %v1084
        %v1112 = vsel %vm1103, %v1086, %v1088
        %v1113 = vsel %vm1103, %v1088, %v1090
        %v1114 = vsel %vm1103, %v1090, %v1092
        %v1115 = vsel %vm1103, %v1092, %v1094
        %v1116 = vsel %vm1103, %v1094, %v1096
        %v1117 = vsel %vm1103, %v1096, %v1098
        %v1118 = vsel %vm1103, %v1098, %v1100
        %v1119 = vsel %vm1103, %v1100, %v1102
        %1136 = vst [vmem:[#allocation3 + $0x80] sm:$0xff] %v1104
        %1137 = vst [vmem:[#allocation3 + $0x88] sm:$0xff] %v1105
        %1138 = vst [vmem:[#allocation3 + $0x90] sm:$0xff] %v1106
        %1139 = vst [vmem:[#allocation3 + $0x98] sm:$0xff] %v1107
        %1140 = vst [vmem:[#allocation3 + $0xa0] sm:$0xff] %v1108
        %1141 = vst [vmem:[#allocation3 + $0xa8] sm:$0xff] %v1109
        %1142 = vst [vmem:[#allocation3 + $0xb0] sm:$0xff] %v1110
        %1143 = vst [vmem:[#allocation3 + $0xb8] sm:$0xff] %v1111
        %1144 = vst [vmem:[#allocation3 + $0xc0] sm:$0xff] %v1112
        %1145 = vst [vmem:[#allocation3 + $0xc8] sm:$0xff] %v1113
        %1146 = vst [vmem:[#allocation3 + $0xd0] sm:$0xff] %v1114
        %1147 = vst [vmem:[#allocation3 + $0xd8] sm:$0xff] %v1115
        %1148 = vst [vmem:[#allocation3 + $0xe0] sm:$0xff] %v1116
        %1149 = vst [vmem:[#allocation3 + $0xe8] sm:$0xff] %v1117
        %1150 = vst [vmem:[#allocation3 + $0xf0] sm:$0xff] %v1118
        %1151 = vst [vmem:[#allocation3 + $0xf8] sm:$0xff] %v1119
        %v1152 = vld [vmem:[#allocation2] sm:$0xff]
        %v1153 = vld [vmem:[#allocation2 + $0x8] sm:$0xff]
        %v1154 = vld [vmem:[#allocation2 + $0x10] sm:$0xff]
        %v1155 = vld [vmem:[#allocation2 + $0x18] sm:$0xff]
        %v1156 = vld [vmem:[#allocation2 + $0x20] sm:$0xff]
        %v1157 = vld [vmem:[#allocation2 + $0x28] sm:$0xff]
        %v1158 = vld [vmem:[#allocation2 + $0x30] sm:$0xff]
        %v1159 = vld [vmem:[#allocation2 + $0x38] sm:$0xff]
        %v1160 = vld [vmem:[#allocation2 + $0x40] sm:$0xff]
        %v1161 = vld [vmem:[#allocation2 + $0x50] sm:$0xff]
        %v1162 = vld [vmem:[#allocation2 + $0x58] sm:$0xff]
        %v1163 = vld [vmem:[#allocation2 + $0x60] sm:$0xff]
        %v1164 = vld [vmem:[#allocation2 + $0x68] sm:$0xff]
        %v1165 = vld [vmem:[#allocation2 + $0x70] sm:$0xff]
        %v1166 = vld [vmem:[#allocation2 + $0x78] sm:$0xff]
        %v1167 = vld [vmem:[#allocation2 + $0x80] sm:$0xff]
        %v1168 = vld [vmem:[#allocation2 + $0x88] sm:$0xff]
        %v1169 = vld [vmem:[#allocation2 + $0x90] sm:$0xff]
        %s1170 = scalar_lea.vmem [#allocation7], 2
        %v1171 = vld [vmem:[%s1170] ss:$8 sm:$0xf]
        %v1172 = vld [vmem:[%s1170] ss:$8 sm:$0xf0]
        %v1173 = vor.u32 %v1171, %v1172
        %v1175 = vlaneseq
        %v1176 = vshrl.u32 %v1175, 7
        %v1177 = vsub.s32 0, %v1176
        %v1178 = vrot.slane %v1173, %v1177
        %v1179 = vlaneseq
        %v1180 = vshrl.u32 %v1179, 7
        %v1181 = vsub.s32 1, %v1180
        %v1182 = vrot.slane %v1173, %v1181
        %v1183 = vlaneseq
        %v1184 = vshrl.u32 %v1183, 7
        %v1185 = vsub.s32 2, %v1184
        %v1186 = vrot.slane %v1173, %v1185
        %v1187 = vlaneseq
        %v1188 = vshrl.u32 %v1187, 7
        %v1189 = vsub.s32 3, %v1188
        %v1190 = vrot.slane %v1173, %v1189
        %v1191 = vlaneseq
        %v1192 = vshrl.u32 %v1191, 7
        %v1193 = vsub.s32 4, %v1192
        %v1194 = vrot.slane %v1173, %v1193
        %v1195 = vlaneseq
        %v1196 = vshrl.u32 %v1195, 7
        %v1197 = vsub.s32 5, %v1196
        %v1198 = vrot.slane %v1173, %v1197
        %v1199 = vlaneseq
        %v1200 = vshrl.u32 %v1199, 7
        %v1201 = vsub.s32 6, %v1200
        %v1202 = vrot.slane %v1173, %v1201
        %v1203 = vlaneseq
        %v1204 = vshrl.u32 %v1203, 7
        %v1205 = vsub.s32 7, %v1204
        %v1206 = vrot.slane %v1173, %v1205
        %1207 = vrot.lane.b32.xlu0 %v1178, 113
        %v1208 = vpop.permute.xlu0 %1207
        %1209 = vrot.lane.b32.xlu0 %v1182, 113
        %v1210 = vpop.permute.xlu0 %1209
        %1211 = vrot.lane.b32.xlu0 %v1186, 113
        %v1212 = vpop.permute.xlu0 %1211
        %1213 = vrot.lane.b32.xlu0 %v1190, 113
        %v1214 = vpop.permute.xlu0 %1213
        %1215 = vrot.lane.b32.xlu0 %v1194, 113
        %v1216 = vpop.permute.xlu0 %1215
        %1217 = vrot.lane.b32.xlu0 %v1198, 113
        %v1218 = vpop.permute.xlu0 %1217
        %1219 = vrot.lane.b32.xlu0 %v1202, 113
        %v1220 = vpop.permute.xlu0 %1219
        %1221 = vrot.lane.b32.xlu0 %v1206, 113
        %v1222 = vpop.permute.xlu0 %1221
        %vm1223 = vcmask 924672
        %v1224 = vsel %vm1223, %v1208, %v1210
        %v1225 = vsel %vm1223, %v1210, %v1212
        %v1226 = vsel %vm1223, %v1212, %v1214
        %v1227 = vsel %vm1223, %v1214, %v1216
        %v1228 = vsel %vm1223, %v1216, %v1218
        %v1229 = vsel %vm1223, %v1218, %v1220
        %v1230 = vsel %vm1223, %v1220, %v1222
        %v1240 = vmul.f32 %v1152, %v1208
        %v1241 = vmul.f32 %v1153, %v1224
        %v1242 = vmul.f32 %v1154, %v1225
        %v1243 = vmul.f32 %v1155, %v1226
        %v1244 = vmul.f32 %v1156, %v1227
        %v1245 = vmul.f32 %v1157, %v1228
        %v1246 = vmul.f32 %v1158, %v1229
        %v1247 = vmul.f32 %v1159, %v1230
        %v1248 = vmul.f32 %v1160, %v1222
        %v1249 = vmul.f32 %v1161, %v1208
        %v1250 = vmul.f32 %v1162, %v1224
        %v1251 = vmul.f32 %v1163, %v1225
        %v1252 = vmul.f32 %v1164, %v1226
        %v1253 = vmul.f32 %v1165, %v1227
        %v1254 = vmul.f32 %v1166, %v1228
        %v1255 = vmul.f32 %v1167, %v1229
        %v1256 = vmul.f32 %v1168, %v1230
        %v1257 = vmul.f32 %v1169, %v1222
        %1276 = vrot.lane.b32.xlu0 %v1240, 15
        %v1277 = vpop.permute.xlu0 %1276
        %1278 = vrot.lane.b32.xlu0 %v1241, 15
        %v1279 = vpop.permute.xlu0 %1278
        %1280 = vrot.lane.b32.xlu0 %v1242, 15
        %v1281 = vpop.permute.xlu0 %1280
        %1282 = vrot.lane.b32.xlu0 %v1243, 15
        %v1283 = vpop.permute.xlu0 %1282
        %1284 = vrot.lane.b32.xlu0 %v1244, 15
        %v1285 = vpop.permute.xlu0 %1284
        %1286 = vrot.lane.b32.xlu0 %v1245, 15
        %v1287 = vpop.permute.xlu0 %1286
        %1288 = vrot.lane.b32.xlu0 %v1246, 15
        %v1289 = vpop.permute.xlu0 %1288
        %1290 = vrot.lane.b32.xlu0 %v1247, 15
        %v1291 = vpop.permute.xlu0 %1290
        %1292 = vrot.lane.b32.xlu0 %v1248, 15
        %v1293 = vpop.permute.xlu0 %1292
        %1294 = vrot.lane.b32.xlu0 %v1249, 15
        %v1295 = vpop.permute.xlu0 %1294
        %1296 = vrot.lane.b32.xlu0 %v1250, 15
        %v1297 = vpop.permute.xlu0 %1296
        %1298 = vrot.lane.b32.xlu0 %v1251, 15
        %v1299 = vpop.permute.xlu0 %1298
        %1300 = vrot.lane.b32.xlu0 %v1252, 15
        %v1301 = vpop.permute.xlu0 %1300
        %1302 = vrot.lane.b32.xlu0 %v1253, 15
        %v1303 = vpop.permute.xlu0 %1302
        %1304 = vrot.lane.b32.xlu0 %v1254, 15
        %v1305 = vpop.permute.xlu0 %1304
        %1306 = vrot.lane.b32.xlu0 %v1255, 15
        %v1307 = vpop.permute.xlu0 %1306
        %1308 = vrot.lane.b32.xlu0 %v1256, 15
        %v1309 = vpop.permute.xlu0 %1308
        %1310 = vrot.lane.b32.xlu0 %v1257, 15
        %v1311 = vpop.permute.xlu0 %1310
        %vm1312 = vcmask 121856
        %v1313 = vsel %vm1312, %v1277, %v1279
        %v1314 = vsel %vm1312, %v1279, %v1281
        %v1315 = vsel %vm1312, %v1281, %v1283
        %v1316 = vsel %vm1312, %v1283, %v1285
        %v1317 = vsel %vm1312, %v1285, %v1287
        %v1318 = vsel %vm1312, %v1287, %v1289
        %v1319 = vsel %vm1312, %v1289, %v1291
        %v1320 = vsel %vm1312, %v1291, %v1293
        %v1321 = vsel %vm1312, %v1295, %v1297
        %v1322 = vsel %vm1312, %v1297, %v1299
        %v1323 = vsel %vm1312, %v1299, %v1301
        %v1324 = vsel %vm1312, %v1301, %v1303
        %v1325 = vsel %vm1312, %v1303, %v1305
        %v1326 = vsel %vm1312, %v1305, %v1307
        %v1327 = vsel %vm1312, %v1307, %v1309
        %v1328 = vsel %vm1312, %v1309, %v1311
        %1345 = vst [vmem:[#allocation3 + $0x100] sm:$0xff] %v1313
        %1346 = vst [vmem:[#allocation3 + $0x108] sm:$0xff] %v1314
        %1347 = vst [vmem:[#allocation3 + $0x110] sm:$0xff] %v1315
        %1348 = vst [vmem:[#allocation3 + $0x118] sm:$0xff] %v1316
        %1349 = vst [vmem:[#allocation3 + $0x120] sm:$0xff] %v1317
        %1350 = vst [vmem:[#allocation3 + $0x128] sm:$0xff] %v1318
        %1351 = vst [vmem:[#allocation3 + $0x130] sm:$0xff] %v1319
        %1352 = vst [vmem:[#allocation3 + $0x138] sm:$0xff] %v1320
        %1353 = vst [vmem:[#allocation3 + $0x140] sm:$0xff] %v1321
        %1354 = vst [vmem:[#allocation3 + $0x148] sm:$0xff] %v1322
        %1355 = vst [vmem:[#allocation3 + $0x150] sm:$0xff] %v1323
        %1356 = vst [vmem:[#allocation3 + $0x158] sm:$0xff] %v1324
        %1357 = vst [vmem:[#allocation3 + $0x160] sm:$0xff] %v1325
        %1358 = vst [vmem:[#allocation3 + $0x168] sm:$0xff] %v1326
        %1359 = vst [vmem:[#allocation3 + $0x170] sm:$0xff] %v1327
        %1360 = vst [vmem:[#allocation3 + $0x178] sm:$0xff] %v1328
        %v1361 = vld [vmem:[#allocation2] sm:$0xff]
        %v1362 = vld [vmem:[#allocation2 + $0x8] sm:$0xff]
        %v1363 = vld [vmem:[#allocation2 + $0x10] sm:$0xff]
        %v1364 = vld [vmem:[#allocation2 + $0x18] sm:$0xff]
        %v1365 = vld [vmem:[#allocation2 + $0x20] sm:$0xff]
        %v1366 = vld [vmem:[#allocation2 + $0x28] sm:$0xff]
        %v1367 = vld [vmem:[#allocation2 + $0x30] sm:$0xff]
        %v1368 = vld [vmem:[#allocation2 + $0x38] sm:$0xff]
        %v1369 = vld [vmem:[#allocation2 + $0x40] sm:$0xff]
        %v1370 = vld [vmem:[#allocation2 + $0x50] sm:$0xff]
        %v1371 = vld [vmem:[#allocation2 + $0x58] sm:$0xff]
        %v1372 = vld [vmem:[#allocation2 + $0x60] sm:$0xff]
        %v1373 = vld [vmem:[#allocation2 + $0x68] sm:$0xff]
        %v1374 = vld [vmem:[#allocation2 + $0x70] sm:$0xff]
        %v1375 = vld [vmem:[#allocation2 + $0x78] sm:$0xff]
        %v1376 = vld [vmem:[#allocation2 + $0x80] sm:$0xff]
        %v1377 = vld [vmem:[#allocation2 + $0x88] sm:$0xff]
        %v1378 = vld [vmem:[#allocation2 + $0x90] sm:$0xff]
        %s1379 = scalar_lea.vmem [#allocation7], 3
        %v1380 = vld [vmem:[%s1379] ss:$8 sm:$0xf]
        %v1381 = vld [vmem:[%s1379] ss:$8 sm:$0xf0]
        %v1382 = vor.u32 %v1380, %v1381
        %v1384 = vlaneseq
        %v1385 = vshrl.u32 %v1384, 7
        %v1386 = vsub.s32 0, %v1385
        %v1387 = vrot.slane %v1382, %v1386
        %v1388 = vlaneseq
        %v1389 = vshrl.u32 %v1388, 7
        %v1390 = vsub.s32 1, %v1389
        %v1391 = vrot.slane %v1382, %v1390
        %v1392 = vlaneseq
        %v1393 = vshrl.u32 %v1392, 7
        %v1394 = vsub.s32 2, %v1393
        %v1395 = vrot.slane %v1382, %v1394
        %v1396 = vlaneseq
        %v1397 = vshrl.u32 %v1396, 7
        %v1398 = vsub.s32 3, %v1397
        %v1399 = vrot.slane %v1382, %v1398
        %v1400 = vlaneseq
        %v1401 = vshrl.u32 %v1400, 7
        %v1402 = vsub.s32 4, %v1401
        %v1403 = vrot.slane %v1382, %v1402
        %v1404 = vlaneseq
        %v1405 = vshrl.u32 %v1404, 7
        %v1406 = vsub.s32 5, %v1405
        %v1407 = vrot.slane %v1382, %v1406
        %v1408 = vlaneseq
        %v1409 = vshrl.u32 %v1408, 7
        %v1410 = vsub.s32 6, %v1409
        %v1411 = vrot.slane %v1382, %v1410
        %v1412 = vlaneseq
        %v1413 = vshrl.u32 %v1412, 7
        %v1414 = vsub.s32 7, %v1413
        %v1415 = vrot.slane %v1382, %v1414
        %1416 = vrot.lane.b32.xlu0 %v1387, 127
        %v1417 = vpop.permute.xlu0 %1416
        %1418 = vrot.lane.b32.xlu0 %v1391, 127
        %v1419 = vpop.permute.xlu0 %1418
        %1420 = vrot.lane.b32.xlu0 %v1395, 127
        %v1421 = vpop.permute.xlu0 %1420
        %1422 = vrot.lane.b32.xlu0 %v1399, 127
        %v1423 = vpop.permute.xlu0 %1422
        %1424 = vrot.lane.b32.xlu0 %v1403, 127
        %v1425 = vpop.permute.xlu0 %1424
        %1426 = vrot.lane.b32.xlu0 %v1407, 127
        %v1427 = vpop.permute.xlu0 %1426
        %1428 = vrot.lane.b32.xlu0 %v1411, 127
        %v1429 = vpop.permute.xlu0 %1428
        %1430 = vrot.lane.b32.xlu0 %v1415, 127
        %v1431 = vpop.permute.xlu0 %1430
        %vm1432 = vcmask 1039360
        %v1433 = vsel %vm1432, %v1417, %v1419
        %v1434 = vsel %vm1432, %v1419, %v1421
        %v1435 = vsel %vm1432, %v1421, %v1423
        %v1436 = vsel %vm1432, %v1423, %v1425
        %v1437 = vsel %vm1432, %v1425, %v1427
        %v1438 = vsel %vm1432, %v1427, %v1429
        %v1439 = vsel %vm1432, %v1429, %v1431
        %v1449 = vmul.f32 %v1361, %v1417
        %v1450 = vmul.f32 %v1362, %v1433
        %v1451 = vmul.f32 %v1363, %v1434
        %v1452 = vmul.f32 %v1364, %v1435
        %v1453 = vmul.f32 %v1365, %v1436
        %v1454 = vmul.f32 %v1366, %v1437
        %v1455 = vmul.f32 %v1367, %v1438
        %v1456 = vmul.f32 %v1368, %v1439
        %v1457 = vmul.f32 %v1369, %v1431
        %v1458 = vmul.f32 %v1370, %v1417
        %v1459 = vmul.f32 %v1371, %v1433
        %v1460 = vmul.f32 %v1372, %v1434
        %v1461 = vmul.f32 %v1373, %v1435
        %v1462 = vmul.f32 %v1374, %v1436
        %v1463 = vmul.f32 %v1375, %v1437
        %v1464 = vmul.f32 %v1376, %v1438
        %v1465 = vmul.f32 %v1377, %v1439
        %v1466 = vmul.f32 %v1378, %v1431
        %1485 = vrot.lane.b32.xlu0 %v1449, 1
        %v1486 = vpop.permute.xlu0 %1485
        %1487 = vrot.lane.b32.xlu0 %v1450, 1
        %v1488 = vpop.permute.xlu0 %1487
        %1489 = vrot.lane.b32.xlu0 %v1451, 1
        %v1490 = vpop.permute.xlu0 %1489
        %1491 = vrot.lane.b32.xlu0 %v1452, 1
        %v1492 = vpop.permute.xlu0 %1491
        %1493 = vrot.lane.b32.xlu0 %v1453, 1
        %v1494 = vpop.permute.xlu0 %1493
        %1495 = vrot.lane.b32.xlu0 %v1454, 1
        %v1496 = vpop.permute.xlu0 %1495
        %1497 = vrot.lane.b32.xlu0 %v1455, 1
        %v1498 = vpop.permute.xlu0 %1497
        %1499 = vrot.lane.b32.xlu0 %v1456, 1
        %v1500 = vpop.permute.xlu0 %1499
        %1501 = vrot.lane.b32.xlu0 %v1457, 1
        %v1502 = vpop.permute.xlu0 %1501
        %1503 = vrot.lane.b32.xlu0 %v1458, 1
        %v1504 = vpop.permute.xlu0 %1503
        %1505 = vrot.lane.b32.xlu0 %v1459, 1
        %v1506 = vpop.permute.xlu0 %1505
        %1507 = vrot.lane.b32.xlu0 %v1460, 1
        %v1508 = vpop.permute.xlu0 %1507
        %1509 = vrot.lane.b32.xlu0 %v1461, 1
        %v1510 = vpop.permute.xlu0 %1509
        %1511 = vrot.lane.b32.xlu0 %v1462, 1
        %v1512 = vpop.permute.xlu0 %1511
        %1513 = vrot.lane.b32.xlu0 %v1463, 1
        %v1514 = vpop.permute.xlu0 %1513
        %1515 = vrot.lane.b32.xlu0 %v1464, 1
        %v1516 = vpop.permute.xlu0 %1515
        %1517 = vrot.lane.b32.xlu0 %v1465, 1
        %v1518 = vpop.permute.xlu0 %1517
        %1519 = vrot.lane.b32.xlu0 %v1466, 1
        %v1520 = vpop.permute.xlu0 %1519
        %vm1521 = vcmask 7168
        %v1522 = vsel %vm1521, %v1486, %v1488
        %v1523 = vsel %vm1521, %v1488, %v1490
        %v1524 = vsel %vm1521, %v1490, %v1492
        %v1525 = vsel %vm1521, %v1492, %v1494
        %v1526 = vsel %vm1521, %v1494, %v1496
        %v1527 = vsel %vm1521, %v1496, %v1498
        %v1528 = vsel %vm1521, %v1498, %v1500
        %v1529 = vsel %vm1521, %v1500, %v1502
        %v1530 = vsel %vm1521, %v1504, %v1506
        %v1531 = vsel %vm1521, %v1506, %v1508
        %v1532 = vsel %vm1521, %v1508, %v1510
        %v1533 = vsel %vm1521, %v1510, %v1512
        %v1534 = vsel %vm1521, %v1512, %v1514
        %v1535 = vsel %vm1521, %v1514, %v1516
        %v1536 = vsel %vm1521, %v1516, %v1518
        %v1537 = vsel %vm1521, %v1518, %v1520
        %1554 = vst [vmem:[#allocation3 + $0x180] sm:$0xff] %v1522
        %1555 = vst [vmem:[#allocation3 + $0x188] sm:$0xff] %v1523
        %1556 = vst [vmem:[#allocation3 + $0x190] sm:$0xff] %v1524
        %1557 = vst [vmem:[#allocation3 + $0x198] sm:$0xff] %v1525
        %1558 = vst [vmem:[#allocation3 + $0x1a0] sm:$0xff] %v1526
        %1559 = vst [vmem:[#allocation3 + $0x1a8] sm:$0xff] %v1527
        %1560 = vst [vmem:[#allocation3 + $0x1b0] sm:$0xff] %v1528
        %1561 = vst [vmem:[#allocation3 + $0x1b8] sm:$0xff] %v1529
        %1562 = vst [vmem:[#allocation3 + $0x1c0] sm:$0xff] %v1530
        %1563 = vst [vmem:[#allocation3 + $0x1c8] sm:$0xff] %v1531
        %1564 = vst [vmem:[#allocation3 + $0x1d0] sm:$0xff] %v1532
        %1565 = vst [vmem:[#allocation3 + $0x1d8] sm:$0xff] %v1533
        %1566 = vst [vmem:[#allocation3 + $0x1e0] sm:$0xff] %v1534
        %1567 = vst [vmem:[#allocation3 + $0x1e8] sm:$0xff] %v1535
        %1568 = vst [vmem:[#allocation3 + $0x1f0] sm:$0xff] %v1536
        %1569 = vst [vmem:[#allocation3 + $0x1f8] sm:$0xff] %v1537
        %v1570 = vld [vmem:[#allocation2 + $0x8] sm:$0xff]
        %v1571 = vld [vmem:[#allocation2 + $0x10] sm:$0xff]
        %v1572 = vld [vmem:[#allocation2 + $0x18] sm:$0xff]
        %v1573 = vld [vmem:[#allocation2 + $0x20] sm:$0xff]
        %v1574 = vld [vmem:[#allocation2 + $0x28] sm:$0xff]
        %v1575 = vld [vmem:[#allocation2 + $0x30] sm:$0xff]
        %v1576 = vld [vmem:[#allocation2 + $0x38] sm:$0xff]
        %v1577 = vld [vmem:[#allocation2 + $0x40] sm:$0xff]
        %v1578 = vld [vmem:[#allocation2 + $0x58] sm:$0xff]
        %v1579 = vld [vmem:[#allocation2 + $0x60] sm:$0xff]
        %v1580 = vld [vmem:[#allocation2 + $0x68] sm:$0xff]
        %v1581 = vld [vmem:[#allocation2 + $0x70] sm:$0xff]
        %v1582 = vld [vmem:[#allocation2 + $0x78] sm:$0xff]
        %v1583 = vld [vmem:[#allocation2 + $0x80] sm:$0xff]
        %v1584 = vld [vmem:[#allocation2 + $0x88] sm:$0xff]
        %v1585 = vld [vmem:[#allocation2 + $0x90] sm:$0xff]
        %1586 = vst [vmem:[#allocation3 + $0x200] sm:$0xff] %v1570
        %1587 = vst [vmem:[#allocation3 + $0x208] sm:$0xff] %v1571
        %1588 = vst [vmem:[#allocation3 + $0x210] sm:$0xff] %v1572
        %1589 = vst [vmem:[#allocation3 + $0x218] sm:$0xff] %v1573
        %1590 = vst [vmem:[#allocation3 + $0x220] sm:$0xff] %v1574
        %1591 = vst [vmem:[#allocation3 + $0x228] sm:$0xff] %v1575
        %1592 = vst [vmem:[#allocation3 + $0x230] sm:$0xff] %v1576
        %1593 = vst [vmem:[#allocation3 + $0x238] sm:$0xff] %v1577
        %1594 = vst [vmem:[#allocation3 + $0x240] sm:$0xff] %v1578
        %1595 = vst [vmem:[#allocation3 + $0x248] sm:$0xff] %v1579
        %1596 = vst [vmem:[#allocation3 + $0x250] sm:$0xff] %v1580
        %1597 = vst [vmem:[#allocation3 + $0x258] sm:$0xff] %v1581
        %1598 = vst [vmem:[#allocation3 + $0x260] sm:$0xff] %v1582
        %1599 = vst [vmem:[#allocation3 + $0x268] sm:$0xff] %v1583
        %1600 = vst [vmem:[#allocation3 + $0x270] sm:$0xff] %v1584
        %1601 = vst [vmem:[#allocation3 + $0x278] sm:$0xff] %v1585
        %v1602 = vld [vmem:[#allocation2 + $0x8] sm:$0xff]
        %v1603 = vld [vmem:[#allocation2 + $0x10] sm:$0xff]
        %v1604 = vld [vmem:[#allocation2 + $0x18] sm:$0xff]
        %v1605 = vld [vmem:[#allocation2 + $0x20] sm:$0xff]
        %v1606 = vld [vmem:[#allocation2 + $0x28] sm:$0xff]
        %v1607 = vld [vmem:[#allocation2 + $0x30] sm:$0xff]
        %v1608 = vld [vmem:[#allocation2 + $0x38] sm:$0xff]
        %v1609 = vld [vmem:[#allocation2 + $0x40] sm:$0xff]
        %v1610 = vld [vmem:[#allocation2 + $0x48] sm:$0xff]
        %v1611 = vld [vmem:[#allocation2 + $0x58] sm:$0xff]
        %v1612 = vld [vmem:[#allocation2 + $0x60] sm:$0xff]
        %v1613 = vld [vmem:[#allocation2 + $0x68] sm:$0xff]
        %v1614 = vld [vmem:[#allocation2 + $0x70] sm:$0xff]
        %v1615 = vld [vmem:[#allocation2 + $0x78] sm:$0xff]
        %v1616 = vld [vmem:[#allocation2 + $0x80] sm:$0xff]
        %v1617 = vld [vmem:[#allocation2 + $0x88] sm:$0xff]
        %v1618 = vld [vmem:[#allocation2 + $0x90] sm:$0xff]
        %v1619 = vld [vmem:[#allocation2 + $0x98] sm:$0xff]
        %s1620 = scalar_lea.vmem [#allocation7], 5
        %v1621 = vld [vmem:[%s1620] ss:$8 sm:$0xf]
        %v1622 = vld [vmem:[%s1620] ss:$8 sm:$0xf0]
        %v1623 = vor.u32 %v1621, %v1622
        %v1625 = vlaneseq
        %v1626 = vshrl.u32 %v1625, 7
        %v1627 = vsub.s32 0, %v1626
        %v1628 = vrot.slane %v1623, %v1627
        %v1629 = vlaneseq
        %v1630 = vshrl.u32 %v1629, 7
        %v1631 = vsub.s32 1, %v1630
        %v1632 = vrot.slane %v1623, %v1631
        %v1633 = vlaneseq
        %v1634 = vshrl.u32 %v1633, 7
        %v1635 = vsub.s32 2, %v1634
        %v1636 = vrot.slane %v1623, %v1635
        %v1637 = vlaneseq
        %v1638 = vshrl.u32 %v1637, 7
        %v1639 = vsub.s32 3, %v1638
        %v1640 = vrot.slane %v1623, %v1639
        %v1641 = vlaneseq
        %v1642 = vshrl.u32 %v1641, 7
        %v1643 = vsub.s32 4, %v1642
        %v1644 = vrot.slane %v1623, %v1643
        %v1645 = vlaneseq
        %v1646 = vshrl.u32 %v1645, 7
        %v1647 = vsub.s32 5, %v1646
        %v1648 = vrot.slane %v1623, %v1647
        %v1649 = vlaneseq
        %v1650 = vshrl.u32 %v1649, 7
        %v1651 = vsub.s32 6, %v1650
        %v1652 = vrot.slane %v1623, %v1651
        %v1653 = vlaneseq
        %v1654 = vshrl.u32 %v1653, 7
        %v1655 = vsub.s32 7, %v1654
        %v1656 = vrot.slane %v1623, %v1655
        %1657 = vrot.lane.b32.xlu0 %v1628, 1
        %v1658 = vpop.permute.xlu0 %1657
        %1659 = vrot.lane.b32.xlu0 %v1632, 1
        %v1660 = vpop.permute.xlu0 %1659
        %1661 = vrot.lane.b32.xlu0 %v1636, 1
        %v1662 = vpop.permute.xlu0 %1661
        %1663 = vrot.lane.b32.xlu0 %v1640, 1
        %v1664 = vpop.permute.xlu0 %1663
        %1665 = vrot.lane.b32.xlu0 %v1644, 1
        %v1666 = vpop.permute.xlu0 %1665
        %1667 = vrot.lane.b32.xlu0 %v1648, 1
        %v1668 = vpop.permute.xlu0 %1667
        %1669 = vrot.lane.b32.xlu0 %v1652, 1
        %v1670 = vpop.permute.xlu0 %1669
        %1671 = vrot.lane.b32.xlu0 %v1656, 1
        %v1672 = vpop.permute.xlu0 %1671
        %v1673 = vsel %vm1521, %v1658, %v1660
        %v1674 = vsel %vm1521, %v1660, %v1662
        %v1675 = vsel %vm1521, %v1662, %v1664
        %v1676 = vsel %vm1521, %v1664, %v1666
        %v1677 = vsel %vm1521, %v1666, %v1668
        %v1678 = vsel %vm1521, %v1668, %v1670
        %v1679 = vsel %vm1521, %v1670, %v1672
        %v1689 = vmul.f32 %v1602, %v1658
        %v1690 = vmul.f32 %v1603, %v1673
        %v1691 = vmul.f32 %v1604, %v1674
        %v1692 = vmul.f32 %v1605, %v1675
        %v1693 = vmul.f32 %v1606, %v1676
        %v1694 = vmul.f32 %v1607, %v1677
        %v1695 = vmul.f32 %v1608, %v1678
        %v1696 = vmul.f32 %v1609, %v1679
        %v1697 = vmul.f32 %v1610, %v1672
        %v1698 = vmul.f32 %v1611, %v1658
        %v1699 = vmul.f32 %v1612, %v1673
        %v1700 = vmul.f32 %v1613, %v1674
        %v1701 = vmul.f32 %v1614, %v1675
        %v1702 = vmul.f32 %v1615, %v1676
        %v1703 = vmul.f32 %v1616, %v1677
        %v1704 = vmul.f32 %v1617, %v1678
        %v1705 = vmul.f32 %v1618, %v1679
        %v1706 = vmul.f32 %v1619, %v1672
        %1725 = vrot.lane.b32.xlu0 %v1689, 127
        %v1726 = vpop.permute.xlu0 %1725
        %1727 = vrot.lane.b32.xlu0 %v1690, 127
        %v1728 = vpop.permute.xlu0 %1727
        %1729 = vrot.lane.b32.xlu0 %v1691, 127
        %v1730 = vpop.permute.xlu0 %1729
        %1731 = vrot.lane.b32.xlu0 %v1692, 127
        %v1732 = vpop.permute.xlu0 %1731
        %1733 = vrot.lane.b32.xlu0 %v1693, 127
        %v1734 = vpop.permute.xlu0 %1733
        %1735 = vrot.lane.b32.xlu0 %v1694, 127
        %v1736 = vpop.permute.xlu0 %1735
        %1737 = vrot.lane.b32.xlu0 %v1695, 127
        %v1738 = vpop.permute.xlu0 %1737
        %1739 = vrot.lane.b32.xlu0 %v1696, 127
        %v1740 = vpop.permute.xlu0 %1739
        %1741 = vrot.lane.b32.xlu0 %v1697, 127
        %v1742 = vpop.permute.xlu0 %1741
        %1743 = vrot.lane.b32.xlu0 %v1698, 127
        %v1744 = vpop.permute.xlu0 %1743
        %1745 = vrot.lane.b32.xlu0 %v1699, 127
        %v1746 = vpop.permute.xlu0 %1745
        %1747 = vrot.lane.b32.xlu0 %v1700, 127
        %v1748 = vpop.permute.xlu0 %1747
        %1749 = vrot.lane.b32.xlu0 %v1701, 127
        %v1750 = vpop.permute.xlu0 %1749
        %1751 = vrot.lane.b32.xlu0 %v1702, 127
        %v1752 = vpop.permute.xlu0 %1751
        %1753 = vrot.lane.b32.xlu0 %v1703, 127
        %v1754 = vpop.permute.xlu0 %1753
        %1755 = vrot.lane.b32.xlu0 %v1704, 127
        %v1756 = vpop.permute.xlu0 %1755
        %1757 = vrot.lane.b32.xlu0 %v1705, 127
        %v1758 = vpop.permute.xlu0 %1757
        %1759 = vrot.lane.b32.xlu0 %v1706, 127
        %v1760 = vpop.permute.xlu0 %1759
        %v1761 = vsel %vm1432, %v1726, %v1728
        %v1762 = vsel %vm1432, %v1728, %v1730
        %v1763 = vsel %vm1432, %v1730, %v1732
        %v1764 = vsel %vm1432, %v1732, %v1734
        %v1765 = vsel %vm1432, %v1734, %v1736
        %v1766 = vsel %vm1432, %v1736, %v1738
        %v1767 = vsel %vm1432, %v1738, %v1740
        %v1768 = vsel %vm1432, %v1740, %v1742
        %v1769 = vsel %vm1432, %v1744, %v1746
        %v1770 = vsel %vm1432, %v1746, %v1748
        %v1771 = vsel %vm1432, %v1748, %v1750
        %v1772 = vsel %vm1432, %v1750, %v1752
        %v1773 = vsel %vm1432, %v1752, %v1754
        %v1774 = vsel %vm1432, %v1754, %v1756
        %v1775 = vsel %vm1432, %v1756, %v1758
        %v1776 = vsel %vm1432, %v1758, %v1760
        %1793 = vst [vmem:[#allocation3 + $0x280] sm:$0xff] %v1761
        %1794 = vst [vmem:[#allocation3 + $0x288] sm:$0xff] %v1762
        %1795 = vst [vmem:[#allocation3 + $0x290] sm:$0xff] %v1763
        %1796 = vst [vmem:[#allocation3 + $0x298] sm:$0xff] %v1764
        %1797 = vst [vmem:[#allocation3 + $0x2a0] sm:$0xff] %v1765
        %1798 = vst [vmem:[#allocation3 + $0x2a8] sm:$0xff] %v1766
        %1799 = vst [vmem:[#allocation3 + $0x2b0] sm:$0xff] %v1767
        %1800 = vst [vmem:[#allocation3 + $0x2b8] sm:$0xff] %v1768
        %1801 = vst [vmem:[#allocation3 + $0x2c0] sm:$0xff] %v1769
        %1802 = vst [vmem:[#allocation3 + $0x2c8] sm:$0xff] %v1770
        %1803 = vst [vmem:[#allocation3 + $0x2d0] sm:$0xff] %v1771
        %1804 = vst [vmem:[#allocation3 + $0x2d8] sm:$0xff] %v1772
        %1805 = vst [vmem:[#allocation3 + $0x2e0] sm:$0xff] %v1773
        %1806 = vst [vmem:[#allocation3 + $0x2e8] sm:$0xff] %v1774
        %1807 = vst [vmem:[#allocation3 + $0x2f0] sm:$0xff] %v1775
        %1808 = vst [vmem:[#allocation3 + $0x2f8] sm:$0xff] %v1776
        %v1809 = vld [vmem:[#allocation2 + $0x8] sm:$0xff]
        %v1810 = vld [vmem:[#allocation2 + $0x10] sm:$0xff]
        %v1811 = vld [vmem:[#allocation2 + $0x18] sm:$0xff]
        %v1812 = vld [vmem:[#allocation2 + $0x20] sm:$0xff]
        %v1813 = vld [vmem:[#allocation2 + $0x28] sm:$0xff]
        %v1814 = vld [vmem:[#allocation2 + $0x30] sm:$0xff]
        %v1815 = vld [vmem:[#allocation2 + $0x38] sm:$0xff]
        %v1816 = vld [vmem:[#allocation2 + $0x40] sm:$0xff]
        %v1817 = vld [vmem:[#allocation2 + $0x48] sm:$0xff]
        %v1818 = vld [vmem:[#allocation2 + $0x58] sm:$0xff]
        %v1819 = vld [vmem:[#allocation2 + $0x60] sm:$0xff]
        %v1820 = vld [vmem:[#allocation2 + $0x68] sm:$0xff]
        %v1821 = vld [vmem:[#allocation2 + $0x70] sm:$0xff]
        %v1822 = vld [vmem:[#allocation2 + $0x78] sm:$0xff]
        %v1823 = vld [vmem:[#allocation2 + $0x80] sm:$0xff]
        %v1824 = vld [vmem:[#allocation2 + $0x88] sm:$0xff]
        %v1825 = vld [vmem:[#allocation2 + $0x90] sm:$0xff]
        %v1826 = vld [vmem:[#allocation2 + $0x98] sm:$0xff]
        %s1827 = scalar_lea.vmem [#allocation7], 6
        %v1828 = vld [vmem:[%s1827] ss:$8 sm:$0xf]
        %v1829 = vld [vmem:[%s1827] ss:$8 sm:$0xf0]
        %v1830 = vor.u32 %v1828, %v1829
        %v1832 = vlaneseq
        %v1833 = vshrl.u32 %v1832, 7
        %v1834 = vsub.s32 0, %v1833
        %v1835 = vrot.slane %v1830, %v1834
        %v1836 = vlaneseq
        %v1837 = vshrl.u32 %v1836, 7
        %v1838 = vsub.s32 1, %v1837
        %v1839 = vrot.slane %v1830, %v1838
        %v1840 = vlaneseq
        %v1841 = vshrl.u32 %v1840, 7
        %v1842 = vsub.s32 2, %v1841
        %v1843 = vrot.slane %v1830, %v1842
        %v1844 = vlaneseq
        %v1845 = vshrl.u32 %v1844, 7
        %v1846 = vsub.s32 3, %v1845
        %v1847 = vrot.slane %v1830, %v1846
        %v1848 = vlaneseq
        %v1849 = vshrl.u32 %v1848, 7
        %v1850 = vsub.s32 4, %v1849
        %v1851 = vrot.slane %v1830, %v1850
        %v1852 = vlaneseq
        %v1853 = vshrl.u32 %v1852, 7
        %v1854 = vsub.s32 5, %v1853
        %v1855 = vrot.slane %v1830, %v1854
        %v1856 = vlaneseq
        %v1857 = vshrl.u32 %v1856, 7
        %v1858 = vsub.s32 6, %v1857
        %v1859 = vrot.slane %v1830, %v1858
        %v1860 = vlaneseq
        %v1861 = vshrl.u32 %v1860, 7
        %v1862 = vsub.s32 7, %v1861
        %v1863 = vrot.slane %v1830, %v1862
        %1864 = vrot.lane.b32.xlu0 %v1835, 15
        %v1865 = vpop.permute.xlu0 %1864
        %1866 = vrot.lane.b32.xlu0 %v1839, 15
        %v1867 = vpop.permute.xlu0 %1866
        %1868 = vrot.lane.b32.xlu0 %v1843, 15
        %v1869 = vpop.permute.xlu0 %1868
        %1870 = vrot.lane.b32.xlu0 %v1847, 15
        %v1871 = vpop.permute.xlu0 %1870
        %1872 = vrot.lane.b32.xlu0 %v1851, 15
        %v1873 = vpop.permute.xlu0 %1872
        %1874 = vrot.lane.b32.xlu0 %v1855, 15
        %v1875 = vpop.permute.xlu0 %1874
        %1876 = vrot.lane.b32.xlu0 %v1859, 15
        %v1877 = vpop.permute.xlu0 %1876
        %1878 = vrot.lane.b32.xlu0 %v1863, 15
        %v1879 = vpop.permute.xlu0 %1878
        %v1880 = vsel %vm1312, %v1865, %v1867
        %v1881 = vsel %vm1312, %v1867, %v1869
        %v1882 = vsel %vm1312, %v1869, %v1871
        %v1883 = vsel %vm1312, %v1871, %v1873
        %v1884 = vsel %vm1312, %v1873, %v1875
        %v1885 = vsel %vm1312, %v1875, %v1877
        %v1886 = vsel %vm1312, %v1877, %v1879
        %v1896 = vmul.f32 %v1809, %v1865
        %v1897 = vmul.f32 %v1810, %v1880
        %v1898 = vmul.f32 %v1811, %v1881
        %v1899 = vmul.f32 %v1812, %v1882
        %v1900 = vmul.f32 %v1813, %v1883
        %v1901 = vmul.f32 %v1814, %v1884
        %v1902 = vmul.f32 %v1815, %v1885
        %v1903 = vmul.f32 %v1816, %v1886
        %v1904 = vmul.f32 %v1817, %v1879
        %v1905 = vmul.f32 %v1818, %v1865
        %v1906 = vmul.f32 %v1819, %v1880
        %v1907 = vmul.f32 %v1820, %v1881
        %v1908 = vmul.f32 %v1821, %v1882
        %v1909 = vmul.f32 %v1822, %v1883
        %v1910 = vmul.f32 %v1823, %v1884
        %v1911 = vmul.f32 %v1824, %v1885
        %v1912 = vmul.f32 %v1825, %v1886
        %v1913 = vmul.f32 %v1826, %v1879
        %1932 = vrot.lane.b32.xlu0 %v1896, 113
        %v1933 = vpop.permute.xlu0 %1932
        %1934 = vrot.lane.b32.xlu0 %v1897, 113
        %v1935 = vpop.permute.xlu0 %1934
        %1936 = vrot.lane.b32.xlu0 %v1898, 113
        %v1937 = vpop.permute.xlu0 %1936
        %1938 = vrot.lane.b32.xlu0 %v1899, 113
        %v1939 = vpop.permute.xlu0 %1938
        %1940 = vrot.lane.b32.xlu0 %v1900, 113
        %v1941 = vpop.permute.xlu0 %1940
        %1942 = vrot.lane.b32.xlu0 %v1901, 113
        %v1943 = vpop.permute.xlu0 %1942
        %1944 = vrot.lane.b32.xlu0 %v1902, 113
        %v1945 = vpop.permute.xlu0 %1944
        %1946 = vrot.lane.b32.xlu0 %v1903, 113
        %v1947 = vpop.permute.xlu0 %1946
        %1948 = vrot.lane.b32.xlu0 %v1904, 113
        %v1949 = vpop.permute.xlu0 %1948
        %1950 = vrot.lane.b32.xlu0 %v1905, 113
        %v1951 = vpop.permute.xlu0 %1950
        %1952 = vrot.lane.b32.xlu0 %v1906, 113
        %v1953 = vpop.permute.xlu0 %1952
        %1954 = vrot.lane.b32.xlu0 %v1907, 113
        %v1955 = vpop.permute.xlu0 %1954
        %1956 = vrot.lane.b32.xlu0 %v1908, 113
        %v1957 = vpop.permute.xlu0 %1956
        %1958 = vrot.lane.b32.xlu0 %v1909, 113
        %v1959 = vpop.permute.xlu0 %1958
        %1960 = vrot.lane.b32.xlu0 %v1910, 113
        %v1961 = vpop.permute.xlu0 %1960
        %1962 = vrot.lane.b32.xlu0 %v1911, 113
        %v1963 = vpop.permute.xlu0 %1962
        %1964 = vrot.lane.b32.xlu0 %v1912, 113
        %v1965 = vpop.permute.xlu0 %1964
        %1966 = vrot.lane.b32.xlu0 %v1913, 113
        %v1967 = vpop.permute.xlu0 %1966
        %v1968 = vsel %vm1223, %v1933, %v1935
        %v1969 = vsel %vm1223, %v1935, %v1937
        %v1970 = vsel %vm1223, %v1937, %v1939
        %v1971 = vsel %vm1223, %v1939, %v1941
        %v1972 = vsel %vm1223, %v1941, %v1943
        %v1973 = vsel %vm1223, %v1943, %v1945
        %v1974 = vsel %vm1223, %v1945, %v1947
        %v1975 = vsel %vm1223, %v1947, %v1949
        %v1976 = vsel %vm1223, %v1951, %v1953
        %v1977 = vsel %vm1223, %v1953, %v1955
        %v1978 = vsel %vm1223, %v1955, %v1957
        %v1979 = vsel %vm1223, %v1957, %v1959
        %v1980 = vsel %vm1223, %v1959, %v1961
        %v1981 = vsel %vm1223, %v1961, %v1963
        %v1982 = vsel %vm1223, %v1963, %v1965
        %v1983 = vsel %vm1223, %v1965, %v1967
        %2000 = vst [vmem:[#allocation3 + $0x300] sm:$0xff] %v1968
        %2001 = vst [vmem:[#allocation3 + $0x308] sm:$0xff] %v1969
        %2002 = vst [vmem:[#allocation3 + $0x310] sm:$0xff] %v1970
        %2003 = vst [vmem:[#allocation3 + $0x318] sm:$0xff] %v1971
        %2004 = vst [vmem:[#allocation3 + $0x320] sm:$0xff] %v1972
        %2005 = vst [vmem:[#allocation3 + $0x328] sm:$0xff] %v1973
        %2006 = vst [vmem:[#allocation3 + $0x330] sm:$0xff] %v1974
        %2007 = vst [vmem:[#allocation3 + $0x338] sm:$0xff] %v1975
        %2008 = vst [vmem:[#allocation3 + $0x340] sm:$0xff] %v1976
        %2009 = vst [vmem:[#allocation3 + $0x348] sm:$0xff] %v1977
        %2010 = vst [vmem:[#allocation3 + $0x350] sm:$0xff] %v1978
        %2011 = vst [vmem:[#allocation3 + $0x358] sm:$0xff] %v1979
        %2012 = vst [vmem:[#allocation3 + $0x360] sm:$0xff] %v1980
        %2013 = vst [vmem:[#allocation3 + $0x368] sm:$0xff] %v1981
        %2014 = vst [vmem:[#allocation3 + $0x370] sm:$0xff] %v1982
        %2015 = vst [vmem:[#allocation3 + $0x378] sm:$0xff] %v1983
        %v2016 = vld [vmem:[#allocation2 + $0x8] sm:$0xff]
        %v2017 = vld [vmem:[#allocation2 + $0x10] sm:$0xff]
        %v2018 = vld [vmem:[#allocation2 + $0x18] sm:$0xff]
        %v2019 = vld [vmem:[#allocation2 + $0x20] sm:$0xff]
        %v2020 = vld [vmem:[#allocation2 + $0x28] sm:$0xff]
        %v2021 = vld [vmem:[#allocation2 + $0x30] sm:$0xff]
        %v2022 = vld [vmem:[#allocation2 + $0x38] sm:$0xff]
        %v2023 = vld [vmem:[#allocation2 + $0x40] sm:$0xff]
        %v2024 = vld [vmem:[#allocation2 + $0x48] sm:$0xff]
        %v2025 = vld [vmem:[#allocation2 + $0x58] sm:$0xff]
        %v2026 = vld [vmem:[#allocation2 + $0x60] sm:$0xff]
        %v2027 = vld [vmem:[#allocation2 + $0x68] sm:$0xff]
        %v2028 = vld [vmem:[#allocation2 + $0x70] sm:$0xff]
        %v2029 = vld [vmem:[#allocation2 + $0x78] sm:$0xff]
        %v2030 = vld [vmem:[#allocation2 + $0x80] sm:$0xff]
        %v2031 = vld [vmem:[#allocation2 + $0x88] sm:$0xff]
        %v2032 = vld [vmem:[#allocation2 + $0x90] sm:$0xff]
        %v2033 = vld [vmem:[#allocation2 + $0x98] sm:$0xff]
        %s2034 = scalar_lea.vmem [#allocation7], 7
        %v2035 = vld [vmem:[%s2034] ss:$8 sm:$0xf]
        %v2036 = vld [vmem:[%s2034] ss:$8 sm:$0xf0]
        %v2037 = vor.u32 %v2035, %v2036
        %v2039 = vlaneseq
        %v2040 = vshrl.u32 %v2039, 7
        %v2041 = vsub.s32 0, %v2040
        %v2042 = vrot.slane %v2037, %v2041
        %v2043 = vlaneseq
        %v2044 = vshrl.u32 %v2043, 7
        %v2045 = vsub.s32 1, %v2044
        %v2046 = vrot.slane %v2037, %v2045
        %v2047 = vlaneseq
        %v2048 = vshrl.u32 %v2047, 7
        %v2049 = vsub.s32 2, %v2048
        %v2050 = vrot.slane %v2037, %v2049
        %v2051 = vlaneseq
        %v2052 = vshrl.u32 %v2051, 7
        %v2053 = vsub.s32 3, %v2052
        %v2054 = vrot.slane %v2037, %v2053
        %v2055 = vlaneseq
        %v2056 = vshrl.u32 %v2055, 7
        %v2057 = vsub.s32 4, %v2056
        %v2058 = vrot.slane %v2037, %v2057
        %v2059 = vlaneseq
        %v2060 = vshrl.u32 %v2059, 7
        %v2061 = vsub.s32 5, %v2060
        %v2062 = vrot.slane %v2037, %v2061
        %v2063 = vlaneseq
        %v2064 = vshrl.u32 %v2063, 7
        %v2065 = vsub.s32 6, %v2064
        %v2066 = vrot.slane %v2037, %v2065
        %v2067 = vlaneseq
        %v2068 = vshrl.u32 %v2067, 7
        %v2069 = vsub.s32 7, %v2068
        %v2070 = vrot.slane %v2037, %v2069
        %2071 = vrot.lane.b32.xlu0 %v2042, 16
        %v2072 = vpop.permute.xlu0 %2071
        %2073 = vrot.lane.b32.xlu0 %v2046, 16
        %v2074 = vpop.permute.xlu0 %2073
        %2075 = vrot.lane.b32.xlu0 %v2050, 16
        %v2076 = vpop.permute.xlu0 %2075
        %2077 = vrot.lane.b32.xlu0 %v2054, 16
        %v2078 = vpop.permute.xlu0 %2077
        %2079 = vrot.lane.b32.xlu0 %v2058, 16
        %v2080 = vpop.permute.xlu0 %2079
        %2081 = vrot.lane.b32.xlu0 %v2062, 16
        %v2082 = vpop.permute.xlu0 %2081
        %2083 = vrot.lane.b32.xlu0 %v2066, 16
        %v2084 = vpop.permute.xlu0 %2083
        %2085 = vrot.lane.b32.xlu0 %v2070, 16
        %v2086 = vpop.permute.xlu0 %2085
        %v2087 = vsel %vm1103, %v2072, %v2074
        %v2088 = vsel %vm1103, %v2074, %v2076
        %v2089 = vsel %vm1103, %v2076, %v2078
        %v2090 = vsel %vm1103, %v2078, %v2080
        %v2091 = vsel %vm1103, %v2080, %v2082
        %v2092 = vsel %vm1103, %v2082, %v2084
        %v2093 = vsel %vm1103, %v2084, %v2086
        %v2103 = vmul.f32 %v2016, %v2072
        %v2104 = vmul.f32 %v2017, %v2087
        %v2105 = vmul.f32 %v2018, %v2088
        %v2106 = vmul.f32 %v2019, %v2089
        %v2107 = vmul.f32 %v2020, %v2090
        %v2108 = vmul.f32 %v2021, %v2091
        %v2109 = vmul.f32 %v2022, %v2092
        %v2110 = vmul.f32 %v2023, %v2093
        %v2111 = vmul.f32 %v2024, %v2086
        %v2112 = vmul.f32 %v2025, %v2072
        %v2113 = vmul.f32 %v2026, %v2087
        %v2114 = vmul.f32 %v2027, %v2088
        %v2115 = vmul.f32 %v2028, %v2089
        %v2116 = vmul.f32 %v2029, %v2090
        %v2117 = vmul.f32 %v2030, %v2091
        %v2118 = vmul.f32 %v2031, %v2092
        %v2119 = vmul.f32 %v2032, %v2093
        %v2120 = vmul.f32 %v2033, %v2086
        %2139 = vrot.lane.b32.xlu0 %v2103, 112
        %v2140 = vpop.permute.xlu0 %2139
        %2141 = vrot.lane.b32.xlu0 %v2104, 112
        %v2142 = vpop.permute.xlu0 %2141
        %2143 = vrot.lane.b32.xlu0 %v2105, 112
        %v2144 = vpop.permute.xlu0 %2143
        %2145 = vrot.lane.b32.xlu0 %v2106, 112
        %v2146 = vpop.permute.xlu0 %2145
        %2147 = vrot.lane.b32.xlu0 %v2107, 112
        %v2148 = vpop.permute.xlu0 %2147
        %2149 = vrot.lane.b32.xlu0 %v2108, 112
        %v2150 = vpop.permute.xlu0 %2149
        %2151 = vrot.lane.b32.xlu0 %v2109, 112
        %v2152 = vpop.permute.xlu0 %2151
        %2153 = vrot.lane.b32.xlu0 %v2110, 112
        %v2154 = vpop.permute.xlu0 %2153
        %2155 = vrot.lane.b32.xlu0 %v2111, 112
        %v2156 = vpop.permute.xlu0 %2155
        %2157 = vrot.lane.b32.xlu0 %v2112, 112
        %v2158 = vpop.permute.xlu0 %2157
        %2159 = vrot.lane.b32.xlu0 %v2113, 112
        %v2160 = vpop.permute.xlu0 %2159
        %2161 = vrot.lane.b32.xlu0 %v2114, 112
        %v2162 = vpop.permute.xlu0 %2161
        %2163 = vrot.lane.b32.xlu0 %v2115, 112
        %v2164 = vpop.permute.xlu0 %2163
        %2165 = vrot.lane.b32.xlu0 %v2116, 112
        %v2166 = vpop.permute.xlu0 %2165
        %2167 = vrot.lane.b32.xlu0 %v2117, 112
        %v2168 = vpop.permute.xlu0 %2167
        %2169 = vrot.lane.b32.xlu0 %v2118, 112
        %v2170 = vpop.permute.xlu0 %2169
        %2171 = vrot.lane.b32.xlu0 %v2119, 112
        %v2172 = vpop.permute.xlu0 %2171
        %2173 = vrot.lane.b32.xlu0 %v2120, 112
        %v2174 = vpop.permute.xlu0 %2173
        %v2175 = vsel %vm1014, %v2140, %v2142
        %v2176 = vsel %vm1014, %v2142, %v2144
        %v2177 = vsel %vm1014, %v2144, %v2146
        %v2178 = vsel %vm1014, %v2146, %v2148
        %v2179 = vsel %vm1014, %v2148, %v2150
        %v2180 = vsel %vm1014, %v2150, %v2152
        %v2181 = vsel %vm1014, %v2152, %v2154
        %v2182 = vsel %vm1014, %v2154, %v2156
        %v2183 = vsel %vm1014, %v2158, %v2160
        %v2184 = vsel %vm1014, %v2160, %v2162
        %v2185 = vsel %vm1014, %v2162, %v2164
        %v2186 = vsel %vm1014, %v2164, %v2166
        %v2187 = vsel %vm1014, %v2166, %v2168
        %v2188 = vsel %vm1014, %v2168, %v2170
        %v2189 = vsel %vm1014, %v2170, %v2172
        %v2190 = vsel %vm1014, %v2172, %v2174
        %2207 = vst [vmem:[#allocation3 + $0x380] sm:$0xff] %v2175
        %2208 = vst [vmem:[#allocation3 + $0x388] sm:$0xff] %v2176
        %2209 = vst [vmem:[#allocation3 + $0x390] sm:$0xff] %v2177
        %2210 = vst [vmem:[#allocation3 + $0x398] sm:$0xff] %v2178
        %2211 = vst [vmem:[#allocation3 + $0x3a0] sm:$0xff] %v2179
        %2212 = vst [vmem:[#allocation3 + $0x3a8] sm:$0xff] %v2180
        %2213 = vst [vmem:[#allocation3 + $0x3b0] sm:$0xff] %v2181
        %2214 = vst [vmem:[#allocation3 + $0x3b8] sm:$0xff] %v2182
        %2215 = vst [vmem:[#allocation3 + $0x3c0] sm:$0xff] %v2183
        %2216 = vst [vmem:[#allocation3 + $0x3c8] sm:$0xff] %v2184
        %2217 = vst [vmem:[#allocation3 + $0x3d0] sm:$0xff] %v2185
        %2218 = vst [vmem:[#allocation3 + $0x3d8] sm:$0xff] %v2186
        %2219 = vst [vmem:[#allocation3 + $0x3e0] sm:$0xff] %v2187
        %2220 = vst [vmem:[#allocation3 + $0x3e8] sm:$0xff] %v2188
        %2221 = vst [vmem:[#allocation3 + $0x3f0] sm:$0xff] %v2189
        %2222 = vst [vmem:[#allocation3 + $0x3f8] sm:$0xff] %v2190
        %v2223 = vld [vmem:[#allocation2 + $0x8] sm:$0xff]
        %v2224 = vld [vmem:[#allocation2 + $0x10] sm:$0xff]
        %v2225 = vld [vmem:[#allocation2 + $0x18] sm:$0xff]
        %v2226 = vld [vmem:[#allocation2 + $0x20] sm:$0xff]
        %v2227 = vld [vmem:[#allocation2 + $0x28] sm:$0xff]
        %v2228 = vld [vmem:[#allocation2 + $0x30] sm:$0xff]
        %v2229 = vld [vmem:[#allocation2 + $0x38] sm:$0xff]
        %v2230 = vld [vmem:[#allocation2 + $0x40] sm:$0xff]
        %v2231 = vld [vmem:[#allocation2 + $0x48] sm:$0xff]
        %v2232 = vld [vmem:[#allocation2 + $0x58] sm:$0xff]
        %v2233 = vld [vmem:[#allocation2 + $0x60] sm:$0xff]
        %v2234 = vld [vmem:[#allocation2 + $0x68] sm:$0xff]
        %v2235 = vld [vmem:[#allocation2 + $0x70] sm:$0xff]
        %v2236 = vld [vmem:[#allocation2 + $0x78] sm:$0xff]
        %v2237 = vld [vmem:[#allocation2 + $0x80] sm:$0xff]
        %v2238 = vld [vmem:[#allocation2 + $0x88] sm:$0xff]
        %v2239 = vld [vmem:[#allocation2 + $0x90] sm:$0xff]
        %v2240 = vld [vmem:[#allocation2 + $0x98] sm:$0xff]
        %s2241 = scalar_lea.vmem [#allocation7], 64
        %v2242 = vld [vmem:[%s2241] ss:$8 sm:$0xf]
        %v2243 = vld [vmem:[%s2241] ss:$8 sm:$0xf0]
        %v2244 = vor.u32 %v2242, %v2243
        %v2246 = vlaneseq
        %v2247 = vshrl.u32 %v2246, 7
        %v2248 = vsub.s32 0, %v2247
        %v2249 = vrot.slane %v2244, %v2248
        %v2250 = vlaneseq
        %v2251 = vshrl.u32 %v2250, 7
        %v2252 = vsub.s32 1, %v2251
        %v2253 = vrot.slane %v2244, %v2252
        %v2254 = vlaneseq
        %v2255 = vshrl.u32 %v2254, 7
        %v2256 = vsub.s32 2, %v2255
        %v2257 = vrot.slane %v2244, %v2256
        %v2258 = vlaneseq
        %v2259 = vshrl.u32 %v2258, 7
        %v2260 = vsub.s32 3, %v2259
        %v2261 = vrot.slane %v2244, %v2260
        %v2262 = vlaneseq
        %v2263 = vshrl.u32 %v2262, 7
        %v2264 = vsub.s32 4, %v2263
        %v2265 = vrot.slane %v2244, %v2264
        %v2266 = vlaneseq
        %v2267 = vshrl.u32 %v2266, 7
        %v2268 = vsub.s32 5, %v2267
        %v2269 = vrot.slane %v2244, %v2268
        %v2270 = vlaneseq
        %v2271 = vshrl.u32 %v2270, 7
        %v2272 = vsub.s32 6, %v2271
        %v2273 = vrot.slane %v2244, %v2272
        %v2274 = vlaneseq
        %v2275 = vshrl.u32 %v2274, 7
        %v2276 = vsub.s32 7, %v2275
        %v2277 = vrot.slane %v2244, %v2276
        %2278 = vrot.lane.b32.xlu0 %v2249, 17
        %v2279 = vpop.permute.xlu0 %2278
        %2280 = vrot.lane.b32.xlu0 %v2253, 17
        %v2281 = vpop.permute.xlu0 %2280
        %2282 = vrot.lane.b32.xlu0 %v2257, 17
        %v2283 = vpop.permute.xlu0 %2282
        %2284 = vrot.lane.b32.xlu0 %v2261, 17
        %v2285 = vpop.permute.xlu0 %2284
        %2286 = vrot.lane.b32.xlu0 %v2265, 17
        %v2287 = vpop.permute.xlu0 %2286
        %2288 = vrot.lane.b32.xlu0 %v2269, 17
        %v2289 = vpop.permute.xlu0 %2288
        %2290 = vrot.lane.b32.xlu0 %v2273, 17
        %v2291 = vpop.permute.xlu0 %2290
        %2292 = vrot.lane.b32.xlu0 %v2277, 17
        %v2293 = vpop.permute.xlu0 %2292
        %v2294 = vsel %vm894, %v2279, %v2281
        %v2295 = vsel %vm894, %v2281, %v2283
        %v2296 = vsel %vm894, %v2283, %v2285
        %v2297 = vsel %vm894, %v2285, %v2287
        %v2298 = vsel %vm894, %v2287, %v2289
        %v2299 = vsel %vm894, %v2289, %v2291
        %v2300 = vsel %vm894, %v2291, %v2293
        %v2310 = vmul.f32 %v2223, %v2279
        %v2311 = vmul.f32 %v2224, %v2294
        %v2312 = vmul.f32 %v2225, %v2295
        %v2313 = vmul.f32 %v2226, %v2296
        %v2314 = vmul.f32 %v2227, %v2297
        %v2315 = vmul.f32 %v2228, %v2298
        %v2316 = vmul.f32 %v2229, %v2299
        %v2317 = vmul.f32 %v2230, %v2300
        %v2318 = vmul.f32 %v2231, %v2293
        %v2319 = vmul.f32 %v2232, %v2279
        %v2320 = vmul.f32 %v2233, %v2294
        %v2321 = vmul.f32 %v2234, %v2295
        %v2322 = vmul.f32 %v2235, %v2296
        %v2323 = vmul.f32 %v2236, %v2297
        %v2324 = vmul.f32 %v2237, %v2298
        %v2325 = vmul.f32 %v2238, %v2299
        %v2326 = vmul.f32 %v2239, %v2300
        %v2327 = vmul.f32 %v2240, %v2293
        %2346 = vrot.lane.b32.xlu0 %v2310, 111
        %v2347 = vpop.permute.xlu0 %2346
        %2348 = vrot.lane.b32.xlu0 %v2311, 111
        %v2349 = vpop.permute.xlu0 %2348
        %2350 = vrot.lane.b32.xlu0 %v2312, 111
        %v2351 = vpop.permute.xlu0 %2350
        %2352 = vrot.lane.b32.xlu0 %v2313, 111
        %v2353 = vpop.permute.xlu0 %2352
        %2354 = vrot.lane.b32.xlu0 %v2314, 111
        %v2355 = vpop.permute.xlu0 %2354
        %2356 = vrot.lane.b32.xlu0 %v2315, 111
        %v2357 = vpop.permute.xlu0 %2356
        %2358 = vrot.lane.b32.xlu0 %v2316, 111
        %v2359 = vpop.permute.xlu0 %2358
        %2360 = vrot.lane.b32.xlu0 %v2317, 111
        %v2361 = vpop.permute.xlu0 %2360
        %2362 = vrot.lane.b32.xlu0 %v2318, 111
        %v2363 = vpop.permute.xlu0 %2362
        %2364 = vrot.lane.b32.xlu0 %v2319, 111
        %v2365 = vpop.permute.xlu0 %2364
        %2366 = vrot.lane.b32.xlu0 %v2320, 111
        %v2367 = vpop.permute.xlu0 %2366
        %2368 = vrot.lane.b32.xlu0 %v2321, 111
        %v2369 = vpop.permute.xlu0 %2368
        %2370 = vrot.lane.b32.xlu0 %v2322, 111
        %v2371 = vpop.permute.xlu0 %2370
        %2372 = vrot.lane.b32.xlu0 %v2323, 111
        %v2373 = vpop.permute.xlu0 %2372
        %2374 = vrot.lane.b32.xlu0 %v2324, 111
        %v2375 = vpop.permute.xlu0 %2374
        %2376 = vrot.lane.b32.xlu0 %v2325, 111
        %v2377 = vpop.permute.xlu0 %2376
        %2378 = vrot.lane.b32.xlu0 %v2326, 111
        %v2379 = vpop.permute.xlu0 %2378
        %2380 = vrot.lane.b32.xlu0 %v2327, 111
        %v2381 = vpop.permute.xlu0 %2380
        %v2382 = vsel %vm805, %v2347, %v2349
        %v2383 = vsel %vm805, %v2349, %v2351
        %v2384 = vsel %vm805, %v2351, %v2353
        %v2385 = vsel %vm805, %v2353, %v2355
        %v2386 = vsel %vm805, %v2355, %v2357
        %v2387 = vsel %vm805, %v2357, %v2359
        %v2388 = vsel %vm805, %v2359, %v2361
        %v2389 = vsel %vm805, %v2361, %v2363
        %v2390 = vsel %vm805, %v2365, %v2367
        %v2391 = vsel %vm805, %v2367, %v2369
        %v2392 = vsel %vm805, %v2369, %v2371
        %v2393 = vsel %vm805, %v2371, %v2373
        %v2394 = vsel %vm805, %v2373, %v2375
        %v2395 = vsel %vm805, %v2375, %v2377
        %v2396 = vsel %vm805, %v2377, %v2379
        %v2397 = vsel %vm805, %v2379, %v2381
        %2414 = vst [vmem:[#allocation3 + $0x400] sm:$0xff] %v2382
        %2415 = vst [vmem:[#allocation3 + $0x408] sm:$0xff] %v2383
        %2416 = vst [vmem:[#allocation3 + $0x410] sm:$0xff] %v2384
        %2417 = vst [vmem:[#allocation3 + $0x418] sm:$0xff] %v2385
        %2418 = vst [vmem:[#allocation3 + $0x420] sm:$0xff] %v2386
        %2419 = vst [vmem:[#allocation3 + $0x428] sm:$0xff] %v2387
        %2420 = vst [vmem:[#allocation3 + $0x430] sm:$0xff] %v2388
        %2421 = vst [vmem:[#allocation3 + $0x438] sm:$0xff] %v2389
        %2422 = vst [vmem:[#allocation3 + $0x440] sm:$0xff] %v2390
        %2423 = vst [vmem:[#allocation3 + $0x448] sm:$0xff] %v2391
        %2424 = vst [vmem:[#allocation3 + $0x450] sm:$0xff] %v2392
        %2425 = vst [vmem:[#allocation3 + $0x458] sm:$0xff] %v2393
        %2426 = vst [vmem:[#allocation3 + $0x460] sm:$0xff] %v2394
        %2427 = vst [vmem:[#allocation3 + $0x468] sm:$0xff] %v2395
        %2428 = vst [vmem:[#allocation3 + $0x470] sm:$0xff] %v2396
        %2429 = vst [vmem:[#allocation3 + $0x478] sm:$0xff] %v2397
        %v2430 = vld [vmem:[#allocation9] sm:$0xff]
        %v2431 = vld [vmem:[#allocation9 + $0x8] sm:$0xff]
        %v2432 = vld [vmem:[#allocation9 + $0x10] sm:$0xff]
        %v2433 = vld [vmem:[#allocation9 + $0x18] sm:$0xff]
        %v2434 = vld [vmem:[#allocation9 + $0x20] sm:$0xff]
        %v2435 = vld [vmem:[#allocation9 + $0x28] sm:$0xff]
        %v2436 = vld [vmem:[#allocation9 + $0x30] sm:$0xff]
        %v2437 = vld [vmem:[#allocation9 + $0x38] sm:$0xff]
        %v2438 = vld [vmem:[#allocation9 + $0x40] sm:$0xff]
        %v2439 = vld [vmem:[#allocation9 + $0x48] sm:$0xff]
        %v2440 = vld [vmem:[#allocation9 + $0x50] sm:$0xff]
        %v2441 = vld [vmem:[#allocation9 + $0x58] sm:$0xff]
        %v2442 = vld [vmem:[#allocation9 + $0x60] sm:$0xff]
        %v2443 = vld [vmem:[#allocation9 + $0x68] sm:$0xff]
        %v2444 = vld [vmem:[#allocation9 + $0x70] sm:$0xff]
        %v2445 = vld [vmem:[#allocation9 + $0x78] sm:$0xff]
        %v2446 = vld [vmem:[#allocation3] sm:$0xff]
        %v2447 = vld [vmem:[#allocation3 + $0x8] sm:$0xff]
        %v2448 = vld [vmem:[#allocation3 + $0x10] sm:$0xff]
        %v2449 = vld [vmem:[#allocation3 + $0x18] sm:$0xff]
        %v2450 = vld [vmem:[#allocation3 + $0x20] sm:$0xff]
        %v2451 = vld [vmem:[#allocation3 + $0x28] sm:$0xff]
        %v2452 = vld [vmem:[#allocation3 + $0x30] sm:$0xff]
        %v2453 = vld [vmem:[#allocation3 + $0x38] sm:$0xff]
        %v2454 = vld [vmem:[#allocation3 + $0x40] sm:$0xff]
        %v2455 = vld [vmem:[#allocation3 + $0x48] sm:$0xff]
        %v2456 = vld [vmem:[#allocation3 + $0x50] sm:$0xff]
        %v2457 = vld [vmem:[#allocation3 + $0x58] sm:$0xff]
        %v2458 = vld [vmem:[#allocation3 + $0x60] sm:$0xff]
        %v2459 = vld [vmem:[#allocation3 + $0x68] sm:$0xff]
        %v2460 = vld [vmem:[#allocation3 + $0x70] sm:$0xff]
        %v2461 = vld [vmem:[#allocation3 + $0x78] sm:$0xff]
        %v2462 = vld [vmem:[#allocation3 + $0x80] sm:$0xff]
        %v2463 = vld [vmem:[#allocation3 + $0x88] sm:$0xff]
        %v2464 = vld [vmem:[#allocation3 + $0x90] sm:$0xff]
        %v2465 = vld [vmem:[#allocation3 + $0x98] sm:$0xff]
        %v2466 = vld [vmem:[#allocation3 + $0xa0] sm:$0xff]
        %v2467 = vld [vmem:[#allocation3 + $0xa8] sm:$0xff]
        %v2468 = vld [vmem:[#allocation3 + $0xb0] sm:$0xff]
        %v2469 = vld [vmem:[#allocation3 + $0xb8] sm:$0xff]
        %v2470 = vld [vmem:[#allocation3 + $0xc0] sm:$0xff]
        %v2471 = vld [vmem:[#allocation3 + $0xc8] sm:$0xff]
        %v2472 = vld [vmem:[#allocation3 + $0xd0] sm:$0xff]
        %v2473 = vld [vmem:[#allocation3 + $0xd8] sm:$0xff]
        %v2474 = vld [vmem:[#allocation3 + $0xe0] sm:$0xff]
        %v2475 = vld [vmem:[#allocation3 + $0xe8] sm:$0xff]
        %v2476 = vld [vmem:[#allocation3 + $0xf0] sm:$0xff]
        %v2477 = vld [vmem:[#allocation3 + $0xf8] sm:$0xff]
        %v2478 = vld [vmem:[#allocation3 + $0x100] sm:$0xff]
        %v2479 = vld [vmem:[#allocation3 + $0x108] sm:$0xff]
        %v2480 = vld [vmem:[#allocation3 + $0x110] sm:$0xff]
        %v2481 = vld [vmem:[#allocation3 + $0x118] sm:$0xff]
        %v2482 = vld [vmem:[#allocation3 + $0x120] sm:$0xff]
        %v2483 = vld [vmem:[#allocation3 + $0x128] sm:$0xff]
        %v2484 = vld [vmem:[#allocation3 + $0x130] sm:$0xff]
        %v2485 = vld [vmem:[#allocation3 + $0x138] sm:$0xff]
        %v2486 = vld [vmem:[#allocation3 + $0x140] sm:$0xff]
        %v2487 = vld [vmem:[#allocation3 + $0x148] sm:$0xff]
        %v2488 = vld [vmem:[#allocation3 + $0x150] sm:$0xff]
        %v2489 = vld [vmem:[#allocation3 + $0x158] sm:$0xff]
        %v2490 = vld [vmem:[#allocation3 + $0x160] sm:$0xff]
        %v2491 = vld [vmem:[#allocation3 + $0x168] sm:$0xff]
        %v2492 = vld [vmem:[#allocation3 + $0x170] sm:$0xff]
        %v2493 = vld [vmem:[#allocation3 + $0x178] sm:$0xff]
        %v2494 = vld [vmem:[#allocation3 + $0x180] sm:$0xff]
        %v2495 = vld [vmem:[#allocation3 + $0x188] sm:$0xff]
        %v2496 = vld [vmem:[#allocation3 + $0x190] sm:$0xff]
        %v2497 = vld [vmem:[#allocation3 + $0x198] sm:$0xff]
        %v2498 = vld [vmem:[#allocation3 + $0x1a0] sm:$0xff]
        %v2499 = vld [vmem:[#allocation3 + $0x1a8] sm:$0xff]
        %v2500 = vld [vmem:[#allocation3 + $0x1b0] sm:$0xff]
        %v2501 = vld [vmem:[#allocation3 + $0x1b8] sm:$0xff]
        %v2502 = vld [vmem:[#allocation3 + $0x1c0] sm:$0xff]
        %v2503 = vld [vmem:[#allocation3 + $0x1c8] sm:$0xff]
        %v2504 = vld [vmem:[#allocation3 + $0x1d0] sm:$0xff]
        %v2505 = vld [vmem:[#allocation3 + $0x1d8] sm:$0xff]
        %v2506 = vld [vmem:[#allocation3 + $0x1e0] sm:$0xff]
        %v2507 = vld [vmem:[#allocation3 + $0x1e8] sm:$0xff]
        %v2508 = vld [vmem:[#allocation3 + $0x1f0] sm:$0xff]
        %v2509 = vld [vmem:[#allocation3 + $0x1f8] sm:$0xff]
        %v2510 = vld [vmem:[#allocation3 + $0x200] sm:$0xff]
        %v2511 = vld [vmem:[#allocation3 + $0x208] sm:$0xff]
        %v2512 = vld [vmem:[#allocation3 + $0x210] sm:$0xff]
        %v2513 = vld [vmem:[#allocation3 + $0x218] sm:$0xff]
        %v2514 = vld [vmem:[#allocation3 + $0x220] sm:$0xff]
        %v2515 = vld [vmem:[#allocation3 + $0x228] sm:$0xff]
        %v2516 = vld [vmem:[#allocation3 + $0x230] sm:$0xff]
        %v2517 = vld [vmem:[#allocation3 + $0x238] sm:$0xff]
        %v2518 = vld [vmem:[#allocation3 + $0x240] sm:$0xff]
        %v2519 = vld [vmem:[#allocation3 + $0x248] sm:$0xff]
        %v2520 = vld [vmem:[#allocation3 + $0x250] sm:$0xff]
        %v2521 = vld [vmem:[#allocation3 + $0x258] sm:$0xff]
        %v2522 = vld [vmem:[#allocation3 + $0x260] sm:$0xff]
        %v2523 = vld [vmem:[#allocation3 + $0x268] sm:$0xff]
        %v2524 = vld [vmem:[#allocation3 + $0x270] sm:$0xff]
        %v2525 = vld [vmem:[#allocation3 + $0x278] sm:$0xff]
        %v2526 = vld [vmem:[#allocation3 + $0x280] sm:$0xff]
        %v2527 = vld [vmem:[#allocation3 + $0x288] sm:$0xff]
        %v2528 = vld [vmem:[#allocation3 + $0x290] sm:$0xff]
        %v2529 = vld [vmem:[#allocation3 + $0x298] sm:$0xff]
        %v2530 = vld [vmem:[#allocation3 + $0x2a0] sm:$0xff]
        %v2531 = vld [vmem:[#allocation3 + $0x2a8] sm:$0xff]
        %v2532 = vld [vmem:[#allocation3 + $0x2b0] sm:$0xff]
        %v2533 = vld [vmem:[#allocation3 + $0x2b8] sm:$0xff]
        %v2534 = vld [vmem:[#allocation3 + $0x2c0] sm:$0xff]
        %v2535 = vld [vmem:[#allocation3 + $0x2c8] sm:$0xff]
        %v2536 = vld [vmem:[#allocation3 + $0x2d0] sm:$0xff]
        %v2537 = vld [vmem:[#allocation3 + $0x2d8] sm:$0xff]
        %v2538 = vld [vmem:[#allocation3 + $0x2e0] sm:$0xff]
        %v2539 = vld [vmem:[#allocation3 + $0x2e8] sm:$0xff]
        %v2540 = vld [vmem:[#allocation3 + $0x2f0] sm:$0xff]
        %v2541 = vld [vmem:[#allocation3 + $0x2f8] sm:$0xff]
        %v2542 = vld [vmem:[#allocation3 + $0x300] sm:$0xff]
        %v2543 = vld [vmem:[#allocation3 + $0x308] sm:$0xff]
        %v2544 = vld [vmem:[#allocation3 + $0x310] sm:$0xff]
        %v2545 = vld [vmem:[#allocation3 + $0x318] sm:$0xff]
        %v2546 = vld [vmem:[#allocation3 + $0x320] sm:$0xff]
        %v2547 = vld [vmem:[#allocation3 + $0x328] sm:$0xff]
        %v2548 = vld [vmem:[#allocation3 + $0x330] sm:$0xff]
        %v2549 = vld [vmem:[#allocation3 + $0x338] sm:$0xff]
        %v2550 = vld [vmem:[#allocation3 + $0x340] sm:$0xff]
        %v2551 = vld [vmem:[#allocation3 + $0x348] sm:$0xff]
        %v2552 = vld [vmem:[#allocation3 + $0x350] sm:$0xff]
        %v2553 = vld [vmem:[#allocation3 + $0x358] sm:$0xff]
        %v2554 = vld [vmem:[#allocation3 + $0x360] sm:$0xff]
        %v2555 = vld [vmem:[#allocation3 + $0x368] sm:$0xff]
        %v2556 = vld [vmem:[#allocation3 + $0x370] sm:$0xff]
        %v2557 = vld [vmem:[#allocation3 + $0x378] sm:$0xff]
        %v2558 = vld [vmem:[#allocation3 + $0x380] sm:$0xff]
        %v2559 = vld [vmem:[#allocation3 + $0x388] sm:$0xff]
        %v2560 = vld [vmem:[#allocation3 + $0x390] sm:$0xff]
        %v2561 = vld [vmem:[#allocation3 + $0x398] sm:$0xff]
        %v2562 = vld [vmem:[#allocation3 + $0x3a0] sm:$0xff]
        %v2563 = vld [vmem:[#allocation3 + $0x3a8] sm:$0xff]
        %v2564 = vld [vmem:[#allocation3 + $0x3b0] sm:$0xff]
        %v2565 = vld [vmem:[#allocation3 + $0x3b8] sm:$0xff]
        %v2566 = vld [vmem:[#allocation3 + $0x3c0] sm:$0xff]
        %v2567 = vld [vmem:[#allocation3 + $0x3c8] sm:$0xff]
        %v2568 = vld [vmem:[#allocation3 + $0x3d0] sm:$0xff]
        %v2569 = vld [vmem:[#allocation3 + $0x3d8] sm:$0xff]
        %v2570 = vld [vmem:[#allocation3 + $0x3e0] sm:$0xff]
        %v2571 = vld [vmem:[#allocation3 + $0x3e8] sm:$0xff]
        %v2572 = vld [vmem:[#allocation3 + $0x3f0] sm:$0xff]
        %v2573 = vld [vmem:[#allocation3 + $0x3f8] sm:$0xff]
        %v2574 = vld [vmem:[#allocation3 + $0x400] sm:$0xff]
        %v2575 = vld [vmem:[#allocation3 + $0x408] sm:$0xff]
        %v2576 = vld [vmem:[#allocation3 + $0x410] sm:$0xff]
        %v2577 = vld [vmem:[#allocation3 + $0x418] sm:$0xff]
        %v2578 = vld [vmem:[#allocation3 + $0x420] sm:$0xff]
        %v2579 = vld [vmem:[#allocation3 + $0x428] sm:$0xff]
        %v2580 = vld [vmem:[#allocation3 + $0x430] sm:$0xff]
        %v2581 = vld [vmem:[#allocation3 + $0x438] sm:$0xff]
        %v2582 = vld [vmem:[#allocation3 + $0x440] sm:$0xff]
        %v2583 = vld [vmem:[#allocation3 + $0x448] sm:$0xff]
        %v2584 = vld [vmem:[#allocation3 + $0x450] sm:$0xff]
        %v2585 = vld [vmem:[#allocation3 + $0x458] sm:$0xff]
        %v2586 = vld [vmem:[#allocation3 + $0x460] sm:$0xff]
        %v2587 = vld [vmem:[#allocation3 + $0x468] sm:$0xff]
        %v2588 = vld [vmem:[#allocation3 + $0x470] sm:$0xff]
        %v2589 = vld [vmem:[#allocation3 + $0x478] sm:$0xff]
        %v2591 = vsel %vm1103, %v2431, 0
        %v2594 = vsel %vm1103, %v2433, 0
        %v2597 = vsel %vm1103, %v2435, 0
        %v2600 = vsel %vm1103, %v2437, 0
        %v2603 = vsel %vm1103, %v2439, 0
        %v2606 = vsel %vm1103, %v2441, 0
        %v2609 = vsel %vm1103, %v2443, 0
        %v2612 = vsel %vm1103, %v2445, 0
        %2614 = vmatprep.subr.mxu0 %v2567
        %2615 = vmatpush1.msra.mxu0 %v2566
        %2616 = vmatprep.subr.mxu0 %v2559
        %2617 = vmatpush1.msra.mxu0 %v2558
        %2618 = vmatprep.subr.mxu0 %v2551
        %2619 = vmatpush1.msra.mxu0 %v2550
        %2620 = vmatprep.subr.mxu0 %v2543
        %2621 = vmatpush1.msra.mxu0 %v2542
        %2622 = vmatprep.subr.mxu0 %v2535
        %2623 = vmatpush1.msra.mxu0 %v2534
        %2624 = vmatprep.subr.mxu0 %v2527
        %2625 = vmatpush1.msra.mxu0 %v2526
        %2626 = vmatprep.subr.mxu0 %v2519
        %2627 = vmatpush1.msra.mxu0 %v2518
        %2628 = vmatprep.subr.mxu0 %v2511
        %2629 = vmatpush1.msra.mxu0 %v2510
        %2630 = vmatprep.subr.mxu0 %v2503
        %2631 = vmatpush1.msra.mxu0 %v2502
        %2632 = vmatprep.subr.mxu0 %v2495
        %2633 = vmatpush1.msra.mxu0 %v2494
        %2634 = vmatprep.subr.mxu0 %v2487
        %2635 = vmatpush1.msra.mxu0 %v2486
        %2636 = vmatprep.subr.mxu0 %v2479
        %2637 = vmatpush1.msra.mxu0 %v2478
        %2638 = vmatprep.subr.mxu0 %v2471
        %2639 = vmatpush1.msra.mxu0 %v2470
        %2640 = vmatprep.subr.mxu0 %v2463
        %2641 = vmatpush1.msra.mxu0 %v2462
        %2642 = vmatprep.subr.mxu0 %v2455
        %2643 = vmatpush1.msra.mxu0 %v2454
        %2644 = vmatprep.subr.mxu0 %v2447
        %2645 = vmatpush1.msra.mxu0 %v2446
        %2646 = vmatprep.subr.mxu0 0.0
        %2647 = vmatpush2.msra.mxu0 0.0
        %2648 = vmatprep.subr.mxu0 0.0
        %2649 = vmatpush2.msra.mxu0 0.0
        %2650 = vmatprep.subr.mxu0 0.0
        %2651 = vmatpush2.msra.mxu0 0.0
        %2652 = vmatprep.subr.mxu0 0.0
        %2653 = vmatpush2.msra.mxu0 0.0
        %2654 = vmatprep.subr.mxu0 0.0
        %2655 = vmatpush2.msra.mxu0 0.0
        %2656 = vmatprep.subr.mxu0 0.0
        %2657 = vmatpush2.msra.mxu0 0.0
        %2658 = vmatprep.subr.mxu0 0.0
        %2659 = vmatpush2.msra.mxu0 0.0
        %2660 = vmatprep.subr.mxu0 0.0
        %2661 = vmatpush2.msra.mxu0 0.0
        %2662 = vmatprep.subr.mxu0 0.0
        %2663 = vmatpush2.msra.mxu0 0.0
        %2664 = vmatprep.subr.mxu0 0.0
        %2665 = vmatpush2.msra.mxu0 0.0
        %2666 = vmatprep.subr.mxu0 0.0
        %2667 = vmatpush2.msra.mxu0 0.0
        %2668 = vmatprep.subr.mxu0 0.0
        %2669 = vmatpush2.msra.mxu0 0.0
        %2670 = vmatprep.subr.mxu0 0.0
        %2671 = vmatpush2.msra.mxu0 0.0
        %2672 = vmatprep.subr.mxu0 0.0
        %2673 = vmatpush2.msra.mxu0 0.0
        %2674 = vmatprep.subr.mxu0 %v2583
        %2675 = vmatpush2.msra.mxu0 %v2582
        %2676 = vmatprep.subr.mxu0 %v2575
        %2677 = vmatpush2.msra.mxu0 %v2574
        %2678 = vmatprep.mubr.f32.mxu0 %v2591
        %2679 = vmatmul.mubr.f32.gmra.mxu0 %v2430
        %v2680 = vpop.f32.mrf.mxu0
        %v2681 = vadd.f32 0.0, %v2680
        %v2682 = vpop.f32.mrf.mxu0
        %v2683 = vadd.f32 0.0, %v2682
        %2684 = vmatprep.mubr.f32.mxu0 %v2594
        %2685 = vmatmul.mubr.f32.gmra.mxu0 %v2432
        %v2686 = vpop.f32.mrf.mxu0
        %v2687 = vadd.f32 0.0, %v2686
        %v2688 = vpop.f32.mrf.mxu0
        %v2689 = vadd.f32 0.0, %v2688
        %2690 = vmatprep.mubr.f32.mxu0 %v2597
        %2691 = vmatmul.mubr.f32.gmra.mxu0 %v2434
        %v2692 = vpop.f32.mrf.mxu0
        %v2693 = vadd.f32 0.0, %v2692
        %v2694 = vpop.f32.mrf.mxu0
        %v2695 = vadd.f32 0.0, %v2694
        %2696 = vmatprep.mubr.f32.mxu0 %v2600
        %2697 = vmatmul.mubr.f32.gmra.mxu0 %v2436
        %v2698 = vpop.f32.mrf.mxu0
        %v2699 = vadd.f32 0.0, %v2698
        %v2700 = vpop.f32.mrf.mxu0
        %v2701 = vadd.f32 0.0, %v2700
        %2702 = vmatprep.mubr.f32.mxu0 %v2603
        %2703 = vmatmul.mubr.f32.gmra.mxu0 %v2438
        %v2704 = vpop.f32.mrf.mxu0
        %v2705 = vadd.f32 0.0, %v2704
        %v2706 = vpop.f32.mrf.mxu0
        %v2707 = vadd.f32 0.0, %v2706
        %2708 = vmatprep.mubr.f32.mxu0 %v2606
        %2709 = vmatmul.mubr.f32.gmra.mxu0 %v2440
        %v2710 = vpop.f32.mrf.mxu0
        %v2711 = vadd.f32 0.0, %v2710
        %v2712 = vpop.f32.mrf.mxu0
        %v2713 = vadd.f32 0.0, %v2712
        %2714 = vmatprep.mubr.f32.mxu0 %v2609
        %2715 = vmatmul.mubr.f32.gmra.mxu0 %v2442
        %v2716 = vpop.f32.mrf.mxu0
        %v2717 = vadd.f32 0.0, %v2716
        %v2718 = vpop.f32.mrf.mxu0
        %v2719 = vadd.f32 0.0, %v2718
        %2720 = vmatprep.mubr.f32.mxu0 %v2612
        %2721 = vmatmul.mubr.f32.gmra.mxu0 %v2444
        %v2722 = vpop.f32.mrf.mxu0
        %v2723 = vadd.f32 0.0, %v2722
        %v2724 = vpop.f32.mrf.mxu0
        %v2725 = vadd.f32 0.0, %v2724
        %2726 = vdwg.mxu0
        %2727 = vmatprep.subr.mxu0 %v2569
        %2728 = vmatpush1.msra.mxu0 %v2568
        %2729 = vmatprep.subr.mxu0 %v2561
        %2730 = vmatpush1.msra.mxu0 %v2560
        %2731 = vmatprep.subr.mxu0 %v2553
        %2732 = vmatpush1.msra.mxu0 %v2552
        %2733 = vmatprep.subr.mxu0 %v2545
        %2734 = vmatpush1.msra.mxu0 %v2544
        %2735 = vmatprep.subr.mxu0 %v2537
        %2736 = vmatpush1.msra.mxu0 %v2536
        %2737 = vmatprep.subr.mxu0 %v2529
        %2738 = vmatpush1.msra.mxu0 %v2528
        %2739 = vmatprep.subr.mxu0 %v2521
        %2740 = vmatpush1.msra.mxu0 %v2520
        %2741 = vmatprep.subr.mxu0 %v2513
        %2742 = vmatpush1.msra.mxu0 %v2512
        %2743 = vmatprep.subr.mxu0 %v2505
        %2744 = vmatpush1.msra.mxu0 %v2504
        %2745 = vmatprep.subr.mxu0 %v2497
        %2746 = vmatpush1.msra.mxu0 %v2496
        %2747 = vmatprep.subr.mxu0 %v2489
        %2748 = vmatpush1.msra.mxu0 %v2488
        %2749 = vmatprep.subr.mxu0 %v2481
        %2750 = vmatpush1.msra.mxu0 %v2480
        %2751 = vmatprep.subr.mxu0 %v2473
        %2752 = vmatpush1.msra.mxu0 %v2472
        %2753 = vmatprep.subr.mxu0 %v2465
        %2754 = vmatpush1.msra.mxu0 %v2464
        %2755 = vmatprep.subr.mxu0 %v2457
        %2756 = vmatpush1.msra.mxu0 %v2456
        %2757 = vmatprep.subr.mxu0 %v2449
        %2758 = vmatpush1.msra.mxu0 %v2448
        %2759 = vmatprep.subr.mxu0 0.0
        %2760 = vmatpush2.msra.mxu0 0.0
        %2761 = vmatprep.subr.mxu0 0.0
        %2762 = vmatpush2.msra.mxu0 0.0
        %2763 = vmatprep.subr.mxu0 0.0
        %2764 = vmatpush2.msra.mxu0 0.0
        %2765 = vmatprep.subr.mxu0 0.0
        %2766 = vmatpush2.msra.mxu0 0.0
        %2767 = vmatprep.subr.mxu0 0.0
        %2768 = vmatpush2.msra.mxu0 0.0
        %2769 = vmatprep.subr.mxu0 0.0
        %2770 = vmatpush2.msra.mxu0 0.0
        %2771 = vmatprep.subr.mxu0 0.0
        %2772 = vmatpush2.msra.mxu0 0.0
        %2773 = vmatprep.subr.mxu0 0.0
        %2774 = vmatpush2.msra.mxu0 0.0
        %2775 = vmatprep.subr.mxu0 0.0
        %2776 = vmatpush2.msra.mxu0 0.0
        %2777 = vmatprep.subr.mxu0 0.0
        %2778 = vmatpush2.msra.mxu0 0.0
        %2779 = vmatprep.subr.mxu0 0.0
        %2780 = vmatpush2.msra.mxu0 0.0
        %2781 = vmatprep.subr.mxu0 0.0
        %2782 = vmatpush2.msra.mxu0 0.0
        %2783 = vmatprep.subr.mxu0 0.0
        %2784 = vmatpush2.msra.mxu0 0.0
        %2785 = vmatprep.subr.mxu0 0.0
        %2786 = vmatpush2.msra.mxu0 0.0
        %2787 = vmatprep.subr.mxu0 %v2585
        %2788 = vmatpush2.msra.mxu0 %v2584
        %2789 = vmatprep.subr.mxu0 %v2577
        %2790 = vmatpush2.msra.mxu0 %v2576
        %2791 = vmatprep.mubr.f32.mxu0 %v2591
        %2792 = vmatmul.mubr.f32.gmra.mxu0 %v2430
        %v2793 = vpop.f32.mrf.mxu0
        %v2794 = vadd.f32 0.0, %v2793
        %v2795 = vpop.f32.mrf.mxu0
        %v2796 = vadd.f32 0.0, %v2795
        %2797 = vmatprep.mubr.f32.mxu0 %v2594
        %2798 = vmatmul.mubr.f32.gmra.mxu0 %v2432
        %v2799 = vpop.f32.mrf.mxu0
        %v2800 = vadd.f32 0.0, %v2799
        %v2801 = vpop.f32.mrf.mxu0
        %v2802 = vadd.f32 0.0, %v2801
        %2803 = vmatprep.mubr.f32.mxu0 %v2597
        %2804 = vmatmul.mubr.f32.gmra.mxu0 %v2434
        %v2805 = vpop.f32.mrf.mxu0
        %v2806 = vadd.f32 0.0, %v2805
        %v2807 = vpop.f32.mrf.mxu0
        %v2808 = vadd.f32 0.0, %v2807
        %2809 = vmatprep.mubr.f32.mxu0 %v2600
        %2810 = vmatmul.mubr.f32.gmra.mxu0 %v2436
        %v2811 = vpop.f32.mrf.mxu0
        %v2812 = vadd.f32 0.0, %v2811
        %v2813 = vpop.f32.mrf.mxu0
        %v2814 = vadd.f32 0.0, %v2813
        %2815 = vmatprep.mubr.f32.mxu0 %v2603
        %2816 = vmatmul.mubr.f32.gmra.mxu0 %v2438
        %v2817 = vpop.f32.mrf.mxu0
        %v2818 = vadd.f32 0.0, %v2817
        %v2819 = vpop.f32.mrf.mxu0
        %v2820 = vadd.f32 0.0, %v2819
        %2821 = vmatprep.mubr.f32.mxu0 %v2606
        %2822 = vmatmul.mubr.f32.gmra.mxu0 %v2440
        %v2823 = vpop.f32.mrf.mxu0
        %v2824 = vadd.f32 0.0, %v2823
        %v2825 = vpop.f32.mrf.mxu0
        %v2826 = vadd.f32 0.0, %v2825
        %2827 = vmatprep.mubr.f32.mxu0 %v2609
        %2828 = vmatmul.mubr.f32.gmra.mxu0 %v2442
        %v2829 = vpop.f32.mrf.mxu0
        %v2830 = vadd.f32 0.0, %v2829
        %v2831 = vpop.f32.mrf.mxu0
        %v2832 = vadd.f32 0.0, %v2831
        %2833 = vmatprep.mubr.f32.mxu0 %v2612
        %2834 = vmatmul.mubr.f32.gmra.mxu0 %v2444
        %v2835 = vpop.f32.mrf.mxu0
        %v2836 = vadd.f32 0.0, %v2835
        %v2837 = vpop.f32.mrf.mxu0
        %v2838 = vadd.f32 0.0, %v2837
        %2839 = vdwg.mxu0
        %2840 = vmatprep.subr.mxu0 %v2571
        %2841 = vmatpush1.msra.mxu0 %v2570
        %2842 = vmatprep.subr.mxu0 %v2563
        %2843 = vmatpush1.msra.mxu0 %v2562
        %2844 = vmatprep.subr.mxu0 %v2555
        %2845 = vmatpush1.msra.mxu0 %v2554
        %2846 = vmatprep.subr.mxu0 %v2547
        %2847 = vmatpush1.msra.mxu0 %v2546
        %2848 = vmatprep.subr.mxu0 %v2539
        %2849 = vmatpush1.msra.mxu0 %v2538
        %2850 = vmatprep.subr.mxu0 %v2531
        %2851 = vmatpush1.msra.mxu0 %v2530
        %2852 = vmatprep.subr.mxu0 %v2523
        %2853 = vmatpush1.msra.mxu0 %v2522
        %2854 = vmatprep.subr.mxu0 %v2515
        %2855 = vmatpush1.msra.mxu0 %v2514
        %2856 = vmatprep.subr.mxu0 %v2507
        %2857 = vmatpush1.msra.mxu0 %v2506
        %2858 = vmatprep.subr.mxu0 %v2499
        %2859 = vmatpush1.msra.mxu0 %v2498
        %2860 = vmatprep.subr.mxu0 %v2491
        %2861 = vmatpush1.msra.mxu0 %v2490
        %2862 = vmatprep.subr.mxu0 %v2483
        %2863 = vmatpush1.msra.mxu0 %v2482
        %2864 = vmatprep.subr.mxu0 %v2475
        %2865 = vmatpush1.msra.mxu0 %v2474
        %2866 = vmatprep.subr.mxu0 %v2467
        %2867 = vmatpush1.msra.mxu0 %v2466
        %2868 = vmatprep.subr.mxu0 %v2459
        %2869 = vmatpush1.msra.mxu0 %v2458
        %2870 = vmatprep.subr.mxu0 %v2451
        %2871 = vmatpush1.msra.mxu0 %v2450
        %2872 = vmatprep.subr.mxu0 0.0
        %2873 = vmatpush2.msra.mxu0 0.0
        %2874 = vmatprep.subr.mxu0 0.0
        %2875 = vmatpush2.msra.mxu0 0.0
        %2876 = vmatprep.subr.mxu0 0.0
        %2877 = vmatpush2.msra.mxu0 0.0
        %2878 = vmatprep.subr.mxu0 0.0
        %2879 = vmatpush2.msra.mxu0 0.0
        %2880 = vmatprep.subr.mxu0 0.0
        %2881 = vmatpush2.msra.mxu0 0.0
        %2882 = vmatprep.subr.mxu0 0.0
        %2883 = vmatpush2.msra.mxu0 0.0
        %2884 = vmatprep.subr.mxu0 0.0
        %2885 = vmatpush2.msra.mxu0 0.0
        %2886 = vmatprep.subr.mxu0 0.0
        %2887 = vmatpush2.msra.mxu0 0.0
        %2888 = vmatprep.subr.mxu0 0.0
        %2889 = vmatpush2.msra.mxu0 0.0
        %2890 = vmatprep.subr.mxu0 0.0
        %2891 = vmatpush2.msra.mxu0 0.0
        %2892 = vmatprep.subr.mxu0 0.0
        %2893 = vmatpush2.msra.mxu0 0.0
        %2894 = vmatprep.subr.mxu0 0.0
        %2895 = vmatpush2.msra.mxu0 0.0
        %2896 = vmatprep.subr.mxu0 0.0
        %2897 = vmatpush2.msra.mxu0 0.0
        %2898 = vmatprep.subr.mxu0 0.0
        %2899 = vmatpush2.msra.mxu0 0.0
        %2900 = vmatprep.subr.mxu0 %v2587
        %2901 = vmatpush2.msra.mxu0 %v2586
        %2902 = vmatprep.subr.mxu0 %v2579
        %2903 = vmatpush2.msra.mxu0 %v2578
        %2904 = vmatprep.mubr.f32.mxu0 %v2591
        %2905 = vmatmul.mubr.f32.gmra.mxu0 %v2430
        %v2906 = vpop.f32.mrf.mxu0
        %v2907 = vadd.f32 0.0, %v2906
        %v2908 = vpop.f32.mrf.mxu0
        %v2909 = vadd.f32 0.0, %v2908
        %2910 = vmatprep.mubr.f32.mxu0 %v2594
        %2911 = vmatmul.mubr.f32.gmra.mxu0 %v2432
        %v2912 = vpop.f32.mrf.mxu0
        %v2913 = vadd.f32 0.0, %v2912
        %v2914 = vpop.f32.mrf.mxu0
        %v2915 = vadd.f32 0.0, %v2914
        %2916 = vmatprep.mubr.f32.mxu0 %v2597
        %2917 = vmatmul.mubr.f32.gmra.mxu0 %v2434
        %v2918 = vpop.f32.mrf.mxu0
        %v2919 = vadd.f32 0.0, %v2918
        %v2920 = vpop.f32.mrf.mxu0
        %v2921 = vadd.f32 0.0, %v2920
        %2922 = vmatprep.mubr.f32.mxu0 %v2600
        %2923 = vmatmul.mubr.f32.gmra.mxu0 %v2436
        %v2924 = vpop.f32.mrf.mxu0
        %v2925 = vadd.f32 0.0, %v2924
        %v2926 = vpop.f32.mrf.mxu0
        %v2927 = vadd.f32 0.0, %v2926
        %2928 = vmatprep.mubr.f32.mxu0 %v2603
        %2929 = vmatmul.mubr.f32.gmra.mxu0 %v2438
        %v2930 = vpop.f32.mrf.mxu0
        %v2931 = vadd.f32 0.0, %v2930
        %v2932 = vpop.f32.mrf.mxu0
        %v2933 = vadd.f32 0.0, %v2932
        %2934 = vmatprep.mubr.f32.mxu0 %v2606
        %2935 = vmatmul.mubr.f32.gmra.mxu0 %v2440
        %v2936 = vpop.f32.mrf.mxu0
        %v2937 = vadd.f32 0.0, %v2936
        %v2938 = vpop.f32.mrf.mxu0
        %v2939 = vadd.f32 0.0, %v2938
        %2940 = vmatprep.mubr.f32.mxu0 %v2609
        %2941 = vmatmul.mubr.f32.gmra.mxu0 %v2442
        %v2942 = vpop.f32.mrf.mxu0
        %v2943 = vadd.f32 0.0, %v2942
        %v2944 = vpop.f32.mrf.mxu0
        %v2945 = vadd.f32 0.0, %v2944
        %2946 = vmatprep.mubr.f32.mxu0 %v2612
        %2947 = vmatmul.mubr.f32.gmra.mxu0 %v2444
        %v2948 = vpop.f32.mrf.mxu0
        %v2949 = vadd.f32 0.0, %v2948
        %v2950 = vpop.f32.mrf.mxu0
        %v2951 = vadd.f32 0.0, %v2950
        %2952 = vdwg.mxu0
        %2953 = vmatprep.subr.mxu0 %v2573
        %2954 = vmatpush1.msra.mxu0 %v2572
        %2955 = vmatprep.subr.mxu0 %v2565
        %2956 = vmatpush1.msra.mxu0 %v2564
        %2957 = vmatprep.subr.mxu0 %v2557
        %2958 = vmatpush1.msra.mxu0 %v2556
        %2959 = vmatprep.subr.mxu0 %v2549
        %2960 = vmatpush1.msra.mxu0 %v2548
        %2961 = vmatprep.subr.mxu0 %v2541
        %2962 = vmatpush1.msra.mxu0 %v2540
        %2963 = vmatprep.subr.mxu0 %v2533
        %2964 = vmatpush1.msra.mxu0 %v2532
        %2965 = vmatprep.subr.mxu0 %v2525
        %2966 = vmatpush1.msra.mxu0 %v2524
        %2967 = vmatprep.subr.mxu0 %v2517
        %2968 = vmatpush1.msra.mxu0 %v2516
        %2969 = vmatprep.subr.mxu0 %v2509
        %2970 = vmatpush1.msra.mxu0 %v2508
        %2971 = vmatprep.subr.mxu0 %v2501
        %2972 = vmatpush1.msra.mxu0 %v2500
        %2973 = vmatprep.subr.mxu0 %v2493
        %2974 = vmatpush1.msra.mxu0 %v2492
        %2975 = vmatprep.subr.mxu0 %v2485
        %2976 = vmatpush1.msra.mxu0 %v2484
        %2977 = vmatprep.subr.mxu0 %v2477
        %2978 = vmatpush1.msra.mxu0 %v2476
        %2979 = vmatprep.subr.mxu0 %v2469
        %2980 = vmatpush1.msra.mxu0 %v2468
        %2981 = vmatprep.subr.mxu0 %v2461
        %2982 = vmatpush1.msra.mxu0 %v2460
        %2983 = vmatprep.subr.mxu0 %v2453
        %2984 = vmatpush1.msra.mxu0 %v2452
        %2985 = vmatprep.subr.mxu0 0.0
        %2986 = vmatpush2.msra.mxu0 0.0
        %2987 = vmatprep.subr.mxu0 0.0
        %2988 = vmatpush2.msra.mxu0 0.0
        %2989 = vmatprep.subr.mxu0 0.0
        %2990 = vmatpush2.msra.mxu0 0.0
        %2991 = vmatprep.subr.mxu0 0.0
        %2992 = vmatpush2.msra.mxu0 0.0
        %2993 = vmatprep.subr.mxu0 0.0
        %2994 = vmatpush2.msra.mxu0 0.0
        %2995 = vmatprep.subr.mxu0 0.0
        %2996 = vmatpush2.msra.mxu0 0.0
        %2997 = vmatprep.subr.mxu0 0.0
        %2998 = vmatpush2.msra.mxu0 0.0
        %2999 = vmatprep.subr.mxu0 0.0
        %3000 = vmatpush2.msra.mxu0 0.0
        %3001 = vmatprep.subr.mxu0 0.0
        %3002 = vmatpush2.msra.mxu0 0.0
        %3003 = vmatprep.subr.mxu0 0.0
        %3004 = vmatpush2.msra.mxu0 0.0
        %3005 = vmatprep.subr.mxu0 0.0
        %3006 = vmatpush2.msra.mxu0 0.0
        %3007 = vmatprep.subr.mxu0 0.0
        %3008 = vmatpush2.msra.mxu0 0.0
        %3009 = vmatprep.subr.mxu0 0.0
        %3010 = vmatpush2.msra.mxu0 0.0
        %3011 = vmatprep.subr.mxu0 0.0
        %3012 = vmatpush2.msra.mxu0 0.0
        %3013 = vmatprep.subr.mxu0 %v2589
        %3014 = vmatpush2.msra.mxu0 %v2588
        %3015 = vmatprep.subr.mxu0 %v2581
        %3016 = vmatpush2.msra.mxu0 %v2580
        %3017 = vmatprep.mubr.f32.mxu0 %v2591
        %3018 = vmatmul.mubr.f32.gmra.mxu0 %v2430
        %v3019 = vpop.f32.mrf.mxu0
        %v3020 = vadd.f32 0.0, %v3019
        %v3021 = vpop.f32.mrf.mxu0
        %v3022 = vadd.f32 0.0, %v3021
        %3023 = vmatprep.mubr.f32.mxu0 %v2594
        %3024 = vmatmul.mubr.f32.gmra.mxu0 %v2432
        %v3025 = vpop.f32.mrf.mxu0
        %v3026 = vadd.f32 0.0, %v3025
        %v3027 = vpop.f32.mrf.mxu0
        %v3028 = vadd.f32 0.0, %v3027
        %3029 = vmatprep.mubr.f32.mxu0 %v2597
        %3030 = vmatmul.mubr.f32.gmra.mxu0 %v2434
        %v3031 = vpop.f32.mrf.mxu0
        %v3032 = vadd.f32 0.0, %v3031
        %v3033 = vpop.f32.mrf.mxu0
        %v3034 = vadd.f32 0.0, %v3033
        %3035 = vmatprep.mubr.f32.mxu0 %v2600
        %3036 = vmatmul.mubr.f32.gmra.mxu0 %v2436
        %v3037 = vpop.f32.mrf.mxu0
        %v3038 = vadd.f32 0.0, %v3037
        %v3039 = vpop.f32.mrf.mxu0
        %v3040 = vadd.f32 0.0, %v3039
        %3041 = vmatprep.mubr.f32.mxu0 %v2603
        %3042 = vmatmul.mubr.f32.gmra.mxu0 %v2438
        %v3043 = vpop.f32.mrf.mxu0
        %v3044 = vadd.f32 0.0, %v3043
        %v3045 = vpop.f32.mrf.mxu0
        %v3046 = vadd.f32 0.0, %v3045
        %3047 = vmatprep.mubr.f32.mxu0 %v2606
        %3048 = vmatmul.mubr.f32.gmra.mxu0 %v2440
        %v3049 = vpop.f32.mrf.mxu0
        %v3050 = vadd.f32 0.0, %v3049
        %v3051 = vpop.f32.mrf.mxu0
        %v3052 = vadd.f32 0.0, %v3051
        %3053 = vmatprep.mubr.f32.mxu0 %v2609
        %3054 = vmatmul.mubr.f32.gmra.mxu0 %v2442
        %v3055 = vpop.f32.mrf.mxu0
        %v3056 = vadd.f32 0.0, %v3055
        %v3057 = vpop.f32.mrf.mxu0
        %v3058 = vadd.f32 0.0, %v3057
        %3059 = vmatprep.mubr.f32.mxu0 %v2612
        %3060 = vmatmul.mubr.f32.gmra.mxu0 %v2444
        %v3061 = vpop.f32.mrf.mxu0
        %v3062 = vadd.f32 0.0, %v3061
        %v3063 = vpop.f32.mrf.mxu0
        %v3064 = vadd.f32 0.0, %v3063
        %3065 = vdwg.mxu0
        %v3066 = vmax.f32 %v2681, %v2705
        %v3067 = vmax.f32 %v2683, %v2707
        %v3068 = vmax.f32 %v2794, %v2818
        %v3069 = vmax.f32 %v2796, %v2820
        %v3070 = vmax.f32 %v2907, %v2931
        %v3071 = vmax.f32 %v2909, %v2933
        %v3072 = vmax.f32 %v3020, %v3044
        %v3073 = vmax.f32 %v3022, %v3046
        %v3074 = vmax.f32 %v2687, %v2711
        %v3075 = vmax.f32 %v2689, %v2713
        %v3076 = vmax.f32 %v2800, %v2824
        %v3077 = vmax.f32 %v2802, %v2826
        %v3078 = vmax.f32 %v2913, %v2937
        %v3079 = vmax.f32 %v2915, %v2939
        %v3080 = vmax.f32 %v3026, %v3050
        %v3081 = vmax.f32 %v3028, %v3052
        %v3082 = vmax.f32 %v2693, %v2717
        %v3083 = vmax.f32 %v2695, %v2719
        %v3084 = vmax.f32 %v2806, %v2830
        %v3085 = vmax.f32 %v2808, %v2832
        %v3086 = vmax.f32 %v2919, %v2943
        %v3087 = vmax.f32 %v2921, %v2945
        %v3088 = vmax.f32 %v3032, %v3056
        %v3089 = vmax.f32 %v3034, %v3058
        %v3090 = vmax.f32 %v2699, %v2723
        %v3091 = vmax.f32 %v2701, %v2725
        %v3092 = vmax.f32 %v2812, %v2836
        %v3093 = vmax.f32 %v2814, %v2838
        %v3094 = vmax.f32 %v2925, %v2949
        %v3095 = vmax.f32 %v2927, %v2951
        %v3096 = vmax.f32 %v3038, %v3062
        %v3097 = vmax.f32 %v3040, %v3064
        %v3098 = vrot.slane %v3066, 4
        %v3099 = vadd.f32 %v3066, %v3098
        %v3100 = vrot.slane %v3099, 2
        %v3101 = vadd.f32 %v3099, %v3100
        %v3102 = vrot.slane %v3101, 1
        %v3103 = vadd.f32 %v3101, %v3102
        %v3104 = vrot.slane %v3067, 4
        %v3105 = vadd.f32 %v3067, %v3104
        %v3106 = vrot.slane %v3105, 2
        %v3107 = vadd.f32 %v3105, %v3106
        %v3108 = vrot.slane %v3107, 1
        %v3109 = vadd.f32 %v3107, %v3108
        %v3110 = vrot.slane %v3068, 4
        %v3111 = vadd.f32 %v3068, %v3110
        %v3112 = vrot.slane %v3111, 2
        %v3113 = vadd.f32 %v3111, %v3112
        %v3114 = vrot.slane %v3113, 1
        %v3115 = vadd.f32 %v3113, %v3114
        %v3116 = vrot.slane %v3069, 4
        %v3117 = vadd.f32 %v3069, %v3116
        %v3118 = vrot.slane %v3117, 2
        %v3119 = vadd.f32 %v3117, %v3118
        %v3120 = vrot.slane %v3119, 1
        %v3121 = vadd.f32 %v3119, %v3120
        %v3122 = vrot.slane %v3070, 4
        %v3123 = vadd.f32 %v3070, %v3122
        %v3124 = vrot.slane %v3123, 2
        %v3125 = vadd.f32 %v3123, %v3124
        %v3126 = vrot.slane %v3125, 1
        %v3127 = vadd.f32 %v3125, %v3126
        %v3128 = vrot.slane %v3071, 4
        %v3129 = vadd.f32 %v3071, %v3128
        %v3130 = vrot.slane %v3129, 2
        %v3131 = vadd.f32 %v3129, %v3130
        %v3132 = vrot.slane %v3131, 1
        %v3133 = vadd.f32 %v3131, %v3132
        %v3134 = vrot.slane %v3072, 4
        %v3135 = vadd.f32 %v3072, %v3134
        %v3136 = vrot.slane %v3135, 2
        %v3137 = vadd.f32 %v3135, %v3136
        %v3138 = vrot.slane %v3137, 1
        %v3139 = vadd.f32 %v3137, %v3138
        %v3140 = vrot.slane %v3073, 4
        %v3141 = vadd.f32 %v3073, %v3140
        %v3142 = vrot.slane %v3141, 2
        %v3143 = vadd.f32 %v3141, %v3142
        %v3144 = vrot.slane %v3143, 1
        %v3145 = vadd.f32 %v3143, %v3144
        %v3146 = vrot.slane %v3074, 4
        %v3147 = vadd.f32 %v3074, %v3146
        %v3148 = vrot.slane %v3147, 2
        %v3149 = vadd.f32 %v3147, %v3148
        %v3150 = vrot.slane %v3149, 1
        %v3151 = vadd.f32 %v3149, %v3150
        %v3152 = vrot.slane %v3075, 4
        %v3153 = vadd.f32 %v3075, %v3152
        %v3154 = vrot.slane %v3153, 2
        %v3155 = vadd.f32 %v3153, %v3154
        %v3156 = vrot.slane %v3155, 1
        %v3157 = vadd.f32 %v3155, %v3156
        %v3158 = vrot.slane %v3076, 4
        %v3159 = vadd.f32 %v3076, %v3158
        %v3160 = vrot.slane %v3159, 2
        %v3161 = vadd.f32 %v3159, %v3160
        %v3162 = vrot.slane %v3161, 1
        %v3163 = vadd.f32 %v3161, %v3162
        %v3164 = vrot.slane %v3077, 4
        %v3165 = vadd.f32 %v3077, %v3164
        %v3166 = vrot.slane %v3165, 2
        %v3167 = vadd.f32 %v3165, %v3166
        %v3168 = vrot.slane %v3167, 1
        %v3169 = vadd.f32 %v3167, %v3168
        %v3170 = vrot.slane %v3078, 4
        %v3171 = vadd.f32 %v3078, %v3170
        %v3172 = vrot.slane %v3171, 2
        %v3173 = vadd.f32 %v3171, %v3172
        %v3174 = vrot.slane %v3173, 1
        %v3175 = vadd.f32 %v3173, %v3174
        %v3176 = vrot.slane %v3079, 4
        %v3177 = vadd.f32 %v3079, %v3176
        %v3178 = vrot.slane %v3177, 2
        %v3179 = vadd.f32 %v3177, %v3178
        %v3180 = vrot.slane %v3179, 1
        %v3181 = vadd.f32 %v3179, %v3180
        %v3182 = vrot.slane %v3080, 4
        %v3183 = vadd.f32 %v3080, %v3182
        %v3184 = vrot.slane %v3183, 2
        %v3185 = vadd.f32 %v3183, %v3184
        %v3186 = vrot.slane %v3185, 1
        %v3187 = vadd.f32 %v3185, %v3186
        %v3188 = vrot.slane %v3081, 4
        %v3189 = vadd.f32 %v3081, %v3188
        %v3190 = vrot.slane %v3189, 2
        %v3191 = vadd.f32 %v3189, %v3190
        %v3192 = vrot.slane %v3191, 1
        %v3193 = vadd.f32 %v3191, %v3192
        %v3194 = vrot.slane %v3082, 4
        %v3195 = vadd.f32 %v3082, %v3194
        %v3196 = vrot.slane %v3195, 2
        %v3197 = vadd.f32 %v3195, %v3196
        %v3198 = vrot.slane %v3197, 1
        %v3199 = vadd.f32 %v3197, %v3198
        %v3200 = vrot.slane %v3083, 4
        %v3201 = vadd.f32 %v3083, %v3200
        %v3202 = vrot.slane %v3201, 2
        %v3203 = vadd.f32 %v3201, %v3202
        %v3204 = vrot.slane %v3203, 1
        %v3205 = vadd.f32 %v3203, %v3204
        %v3206 = vrot.slane %v3084, 4
        %v3207 = vadd.f32 %v3084, %v3206
        %v3208 = vrot.slane %v3207, 2
        %v3209 = vadd.f32 %v3207, %v3208
        %v3210 = vrot.slane %v3209, 1
        %v3211 = vadd.f32 %v3209, %v3210
        %v3212 = vrot.slane %v3085, 4
        %v3213 = vadd.f32 %v3085, %v3212
        %v3214 = vrot.slane %v3213, 2
        %v3215 = vadd.f32 %v3213, %v3214
        %v3216 = vrot.slane %v3215, 1
        %v3217 = vadd.f32 %v3215, %v3216
        %v3218 = vrot.slane %v3086, 4
        %v3219 = vadd.f32 %v3086, %v3218
        %v3220 = vrot.slane %v3219, 2
        %v3221 = vadd.f32 %v3219, %v3220
        %v3222 = vrot.slane %v3221, 1
        %v3223 = vadd.f32 %v3221, %v3222
        %v3224 = vrot.slane %v3087, 4
        %v3225 = vadd.f32 %v3087, %v3224
        %v3226 = vrot.slane %v3225, 2
        %v3227 = vadd.f32 %v3225, %v3226
        %v3228 = vrot.slane %v3227, 1
        %v3229 = vadd.f32 %v3227, %v3228
        %v3230 = vrot.slane %v3088, 4
        %v3231 = vadd.f32 %v3088, %v3230
        %v3232 = vrot.slane %v3231, 2
        %v3233 = vadd.f32 %v3231, %v3232
        %v3234 = vrot.slane %v3233, 1
        %v3235 = vadd.f32 %v3233, %v3234
        %v3236 = vrot.slane %v3089, 4
        %v3237 = vadd.f32 %v3089, %v3236
        %v3238 = vrot.slane %v3237, 2
        %v3239 = vadd.f32 %v3237, %v3238
        %v3240 = vrot.slane %v3239, 1
        %v3241 = vadd.f32 %v3239, %v3240
        %v3242 = vrot.slane %v3090, 4
        %v3243 = vadd.f32 %v3090, %v3242
        %v3244 = vrot.slane %v3243, 2
        %v3245 = vadd.f32 %v3243, %v3244
        %v3246 = vrot.slane %v3245, 1
        %v3247 = vadd.f32 %v3245, %v3246
        %v3248 = vrot.slane %v3091, 4
        %v3249 = vadd.f32 %v3091, %v3248
        %v3250 = vrot.slane %v3249, 2
        %v3251 = vadd.f32 %v3249, %v3250
        %v3252 = vrot.slane %v3251, 1
        %v3253 = vadd.f32 %v3251, %v3252
        %v3254 = vrot.slane %v3092, 4
        %v3255 = vadd.f32 %v3092, %v3254
        %v3256 = vrot.slane %v3255, 2
        %v3257 = vadd.f32 %v3255, %v3256
        %v3258 = vrot.slane %v3257, 1
        %v3259 = vadd.f32 %v3257, %v3258
        %v3260 = vrot.slane %v3093, 4
        %v3261 = vadd.f32 %v3093, %v3260
        %v3262 = vrot.slane %v3261, 2
        %v3263 = vadd.f32 %v3261, %v3262
        %v3264 = vrot.slane %v3263, 1
        %v3265 = vadd.f32 %v3263, %v3264
        %v3266 = vrot.slane %v3094, 4
        %v3267 = vadd.f32 %v3094, %v3266
        %v3268 = vrot.slane %v3267, 2
        %v3269 = vadd.f32 %v3267, %v3268
        %v3270 = vrot.slane %v3269, 1
        %v3271 = vadd.f32 %v3269, %v3270
        %v3272 = vrot.slane %v3095, 4
        %v3273 = vadd.f32 %v3095, %v3272
        %v3274 = vrot.slane %v3273, 2
        %v3275 = vadd.f32 %v3273, %v3274
        %v3276 = vrot.slane %v3275, 1
        %v3277 = vadd.f32 %v3275, %v3276
        %v3278 = vrot.slane %v3096, 4
        %v3279 = vadd.f32 %v3096, %v3278
        %v3280 = vrot.slane %v3279, 2
        %v3281 = vadd.f32 %v3279, %v3280
        %v3282 = vrot.slane %v3281, 1
        %v3283 = vadd.f32 %v3281, %v3282
        %v3284 = vrot.slane %v3097, 4
        %v3285 = vadd.f32 %v3097, %v3284
        %v3286 = vrot.slane %v3285, 2
        %v3287 = vadd.f32 %v3285, %v3286
        %v3288 = vrot.slane %v3287, 1
        %v3289 = vadd.f32 %v3287, %v3288
        %v3290 = vmul.f32 %v3103, 0.125
        %v3291 = vmul.f32 %v3109, 0.125
        %v3292 = vmul.f32 %v3115, 0.125
        %v3293 = vmul.f32 %v3121, 0.125
        %v3294 = vmul.f32 %v3127, 0.125
        %v3295 = vmul.f32 %v3133, 0.125
        %v3296 = vmul.f32 %v3139, 0.125
        %v3297 = vmul.f32 %v3145, 0.125
        %v3298 = vmul.f32 %v3151, 0.125
        %v3299 = vmul.f32 %v3157, 0.125
        %v3300 = vmul.f32 %v3163, 0.125
        %v3301 = vmul.f32 %v3169, 0.125
        %v3302 = vmul.f32 %v3175, 0.125
        %v3303 = vmul.f32 %v3181, 0.125
        %v3304 = vmul.f32 %v3187, 0.125
        %v3305 = vmul.f32 %v3193, 0.125
        %v3306 = vmul.f32 %v3199, 0.125
        %v3307 = vmul.f32 %v3205, 0.125
        %v3308 = vmul.f32 %v3211, 0.125
        %v3309 = vmul.f32 %v3217, 0.125
        %v3310 = vmul.f32 %v3223, 0.125
        %v3311 = vmul.f32 %v3229, 0.125
        %v3312 = vmul.f32 %v3235, 0.125
        %v3313 = vmul.f32 %v3241, 0.125
        %v3314 = vmul.f32 %v3247, 0.125
        %v3315 = vmul.f32 %v3253, 0.125
        %v3316 = vmul.f32 %v3259, 0.125
        %v3317 = vmul.f32 %v3265, 0.125
        %v3318 = vmul.f32 %v3271, 0.125
        %v3319 = vmul.f32 %v3277, 0.125
        %v3320 = vmul.f32 %v3283, 0.125
        %v3321 = vmul.f32 %v3289, 0.125
        %3322 = vst [vmem:[%s323] sm:$0xff] %v326
        %3323 = vst [vmem:[%s323 + $0x8] sm:$0xff] %v327
        %3324 = vst [vmem:[%s323 + $0x10] sm:$0xff] %v328
        %3325 = vst [vmem:[%s323 + $0x18] sm:$0xff] %v329
        %3326 = vst [vmem:[%s323 + $0x20] sm:$0xff] %v330
        %3327 = vst [vmem:[%s323 + $0x28] sm:$0xff] %v331
        %3328 = vst [vmem:[%s323 + $0x30] sm:$0xff] %v332
        %3329 = vst [vmem:[%s323 + $0x38] sm:$0xff] %v333
        %vm3362 = vcmask 1041409
        %v3363 = vsel %vm3362, %v3298, %v3290
        %vm3364 = vcmask 1042434
        %v3365 = vsel %vm3364, %v3306, %v3363
        %vm3366 = vcmask 1043459
        %v3367 = vsel %vm3366, %v3314, %v3365
        %v3368 = vsel %vm3362, %v3299, %v3291
        %v3369 = vsel %vm3364, %v3307, %v3368
        %v3370 = vsel %vm3366, %v3315, %v3369
        %v3371 = vsel %vm3362, %v3300, %v3292
        %v3372 = vsel %vm3364, %v3308, %v3371
        %v3373 = vsel %vm3366, %v3316, %v3372
        %v3374 = vsel %vm3362, %v3301, %v3293
        %v3375 = vsel %vm3364, %v3309, %v3374
        %v3376 = vsel %vm3366, %v3317, %v3375
        %v3377 = vsel %vm3362, %v3302, %v3294
        %v3378 = vsel %vm3364, %v3310, %v3377
        %v3379 = vsel %vm3366, %v3318, %v3378
        %v3380 = vsel %vm3362, %v3303, %v3295
        %v3381 = vsel %vm3364, %v3311, %v3380
        %v3382 = vsel %vm3366, %v3319, %v3381
        %v3383 = vsel %vm3362, %v3304, %v3296
        %v3384 = vsel %vm3364, %v3312, %v3383
        %v3385 = vsel %vm3366, %v3320, %v3384
        %v3386 = vsel %vm3362, %v3305, %v3297
        %v3387 = vsel %vm3364, %v3313, %v3386
        %v3388 = vsel %vm3366, %v3321, %v3387
        %3397 = vst [vmem:[%s323 + $0x40] sm:$0xf] %v3367
        %3398 = vst [vmem:[%s323 + $0x48] sm:$0xf] %v3370
        %3399 = vst [vmem:[%s323 + $0x50] sm:$0xf] %v3373
        %3400 = vst [vmem:[%s323 + $0x58] sm:$0xf] %v3376
        %3401 = vst [vmem:[%s323 + $0x60] sm:$0xf] %v3379
        %3402 = vst [vmem:[%s323 + $0x68] sm:$0xf] %v3382
        %3403 = vst [vmem:[%s323 + $0x70] sm:$0xf] %v3385
        %3404 = vst [vmem:[%s323 + $0x78] sm:$0xf] %v3388
        %s3405 = sand.u32 %s185, 1
        %s3406 = scalar_lea.sflag [#allocation6], %s3405
        %s3407 = sand.u32 %s185, 1
        %s3408 = smul.addr %s3407, 128
        %s3409 = scalar_lea.vmem [#allocation10], %s3408
        // Predicated region
        $region61: #{tpu_custom_call.1} parent=47 // pred_check
          %p3410 = pneg %p195
        $region62: #{tpu_custom_call.1} parent=47 // pred_check_branch
          %3412 = sbr.rel (%p3410) target = $region64
        $region63: #{tpu_custom_call.1} parent=47 // pred_region
          %s3413 = smul.u32 8, %s25
          %s3415 = ssub.s32 2048, 2048
          %3416 = vsyncadd %s3406, %s3415
          %s3417 = smul.addr %s3413, 128
          %s3418 = scalar_lea.hbm %s7, %s3417
          %s3419 = sshll.u32 %s3409, 4
          %s3420 = int_to_ptr.vmem [resolvable:$true] %s3419
          %3425 = dma.vmem_to_hbm [thread:$0]  %s3420, 2048, %s3418, %s3406, 1024, 2048, 64
        $region64: #{tpu_custom_call.1} parent=47 // pred_fallthru
          _
      $region48: #{tpu_custom_call.1} parent=5 // pred_fallthru
        _
      %p3426 = scmp.le.s32.totalorder 2, %s20
      // Predicated region
      $region65: #{tpu_custom_call.1} parent=5 // pred_check
        %p3427 = pneg %p3426
      $region66: #{tpu_custom_call.1} parent=5 // pred_check_branch
        %3429 = sbr.rel (%p3427) target = $region68
      $region67: #{tpu_custom_call.1} parent=5 // pred_region
        %s3430 = ssub.s32 %s20, 2
        // Predicated region
        $region69: #{tpu_custom_call.1} parent=67 // pred_check
          %p3431 = pneg %p201
        $region70: #{tpu_custom_call.1} parent=67 // pred_check_branch
          %3433 = sbr.rel (%p3431) target = $region72
        $region71: #{tpu_custom_call.1} parent=67 // pred_region
          %s3434 = sand.u32 %s186, 1
          %s3435 = scalar_lea.sflag [#allocation6], %s3434
          %s3436 = sand.u32 %s186, 1
          %s3437 = smul.addr %s3436, 128
          %s3438 = scalar_lea.vmem [#allocation10], %s3437
          %3439 = dma.done %s3435, 2048
        $region72: #{tpu_custom_call.1} parent=67 // pred_fallthru
          _
      $region68: #{tpu_custom_call.1} parent=5 // pred_fallthru
        _
    $region6: #{tpu_custom_call.1} parent=1 // loop_footer
      %s24 = sadd.s32 1, %s20
    $region7: #{tpu_custom_call.1} parent=1 // loop_footer_branch
      %19 = sbr.rel target = $region3
    $region8: #{tpu_custom_call.1} parent=1 // loop_exit
      _
    %3440 = vsyncpa [#allocation5], 1
    %s3441 = scalar_lea.sflag [#allocation5], 1
    %3442 = vsyncpa %s3441, 1
    %3443 = vsyncpa [#allocation8], 1
    %3444 = vsyncpa [#allocation6], 1
    %s3445 = scalar_lea.sflag [#allocation6], 1
    %3446 = vsyncpa %s3445, 1

</llo_original>
